<compile_context>
chip_gen: v5e
topology: v5e:2x2
jax: 0.10.0
libtpu: 0.0.40
codegen_flags: <defaults>
</compile_context>

<pallas_src>
import functools

import jax
import jax.numpy as jnp
from jax.experimental import pallas as pl
from jax.experimental.pallas import tpu as pltpu

BN_EPS = 1e-5


def _count_and_h(vf, a, b, sel):
    """Recompute pre-BN linear features h (interleaved layout) for one row tile."""
    # per-point channel sums -> number of non-empty points per voxel (PyTorch mask)
    psum = jnp.dot(vf, sel, preferred_element_type=jnp.float32)                   # (T, P)
    cnt = jnp.sum((psum != 0.0).astype(jnp.float32), axis=-1, keepdims=True)      # (T, 1)
    # exact divide (approx reciprocal would cost accuracy); guard all-zero/padded rows
    inv_cnt = 1.0 / jnp.maximum(cnt, 1.0)
    h = (jnp.dot(vf, a, preferred_element_type=jnp.float32)
         - inv_cnt * jnp.dot(vf, b, preferred_element_type=jnp.float32))          # (T, 3*cout)
    return h


def _stats_kernel(vf_ref, a_ref, b_ref, sel_ref, gamma_ref, beta_ref, stat_ref,
                  *, tile_n, n_rows):
    i = pl.program_id(0)

    @pl.when(i == 0)
    def _init():
        stat_ref[...] = jnp.zeros_like(stat_ref)

    h = _count_and_h(vf_ref[...], a_ref[...], b_ref[...], sel_ref[...])

    # mask rows beyond the true batch size (partial last tile) out of the statistics
    rows = i * tile_n + jax.lax.broadcasted_iota(jnp.int32, (tile_n, 1), 0)
    h = jnp.where(rows < n_rows, h, 0.0)

    stat_ref[0:1, :] += jnp.sum(h, axis=0, keepdims=True)        # sum(h)
    stat_ref[1:2, :] += jnp.sum(h * h, axis=0, keepdims=True)    # sum(h^2)

    @pl.when(i == pl.num_programs(0) - 1)
    def _finalize():
        inv_n = 1.0 / n_rows
        mean = stat_ref[0:1, :] * inv_n
        # biased variance, E[h^2] - mean^2 (f32 accumulators; clamp tiny negatives)
        var = jnp.maximum(stat_ref[1:2, :] * inv_n - mean * mean, 0.0)
        inv_std = 1.0 / jnp.sqrt(var + BN_EPS)
        scale = gamma_ref[...] * inv_std
        shift = beta_ref[...] - mean * scale
        stat_ref[0:1, :] = scale
        stat_ref[1:2, :] = shift


def _apply_kernel(vf_ref, a_ref, b_ref, sel_ref, stat_ref, out_ref):
    h = _count_and_h(vf_ref[...], a_ref[...], b_ref[...], sel_ref[...])
    y = h * stat_ref[0:1, :] + stat_ref[1:2, :]          # single FMA: scale/shift precomputed
    out_ref[...] = jnp.maximum(y, 0.0).astype(out_ref.dtype)


def prepare_params(weights, gammas, betas, *, num_point_features,
                   compute_dtype=jnp.float32):
    """Pack the three VFE branches into MXU-friendly constants. Call ONCE at init.

    weights: [W_x, W_y, W_z], each (cout, cin) in nn.Linear layout (cin == max_points).
    gammas/betas: BatchNorm1d affine params, each (cout,).
    The Linear biases are intentionally not taken: they cancel exactly under
    training-mode BatchNorm mean subtraction.
    """
    cout, p = weights[0].shape
    c = num_point_features
    a = jnp.zeros((p * c, 3 * cout), jnp.float32)
    b = jnp.zeros((p * c, 3 * cout), jnp.float32)
    cols = 3 * jnp.arange(cout)
    for d in range(3):
        w = jnp.asarray(weights[d], jnp.float32)                       # (cout, p)
        rows = c * jnp.arange(p) + d
        # A[p*C + d, 3*c + d] = W_d[c, p]
        a = a.at[rows[:, None], (cols + d)[None, :]].set(w.T)
        # B[p*C + d, 3*c + d] = sum_p' W_d[c, p']   (coordinate-sum path of the mean)
        b = b.at[rows[:, None], (cols + d)[None, :]].set(
            jnp.broadcast_to(jnp.sum(w, axis=1)[None, :], (p, cout)))
    q = jnp.arange(p * c)
    sel = jnp.zeros((p * c, p), jnp.float32).at[q, q // c].set(1.0)    # per-point channel sum
    gamma_il = jnp.stack([jnp.asarray(g, jnp.float32) for g in gammas],
                         axis=-1).reshape(1, 3 * cout)
    beta_il = jnp.stack([jnp.asarray(t, jnp.float32) for t in betas],
                        axis=-1).reshape(1, 3 * cout)
    return dict(a=a.astype(compute_dtype), b=b.astype(compute_dtype),
                sel=sel.astype(compute_dtype), gamma=gamma_il, beta=beta_il)


@functools.partial(jax.jit, static_argnames=("tile_n",))
def voxel_feature_encoding_forward(voxels, params, *, tile_n=1024):
    """voxels: (N, P, C) float32. Returns (N, cout, 3) float32 (== torch.stack(dim=2))."""
    n, p, c = voxels.shape
    a, b, sel = params["a"], params["b"], params["sel"]
    gamma, beta = params["gamma"], params["beta"]
    pc, cout3 = a.shape
    assert pc == p * c

    vf = voxels.reshape(n, pc).astype(a.dtype)        # free reshape; optional bf16 read path

    tile = max(8, (min(tile_n, n) // 8) * 8)          # sublane-aligned row tile
    grid = (pl.cdiv(n, tile),)

    vmem_cap = 32 * 1024 * 1024                       # safe on v5e/v6e/v7x; tiles use ~3 MiB
    cparams_seq = pltpu.CompilerParams(
        dimension_semantics=("arbitrary",), vmem_limit_bytes=vmem_cap)   # stats accumulate
    cparams_par = pltpu.CompilerParams(
        dimension_semantics=("parallel",), vmem_limit_bytes=vmem_cap)    # both TCs on v7x

    const = lambda i: (0, 0)
    row_tile = lambda i: (i, 0)

    # ---- sweep 1: batch statistics -> per-feature (scale, shift) ------------------
    stats = pl.pallas_call(
        functools.partial(_stats_kernel, tile_n=tile, n_rows=n),
        out_shape=jax.ShapeDtypeStruct((2, cout3), jnp.float32),
        grid=grid,
        in_specs=[
            pl.BlockSpec((tile, pc), row_tile),
            pl.BlockSpec((pc, cout3), const),
            pl.BlockSpec((pc, cout3), const),
            pl.BlockSpec((pc, p), const),
            pl.BlockSpec((1, cout3), const),
            pl.BlockSpec((1, cout3), const),
        ],
        out_specs=pl.BlockSpec((2, cout3), const),     # resident accumulator block
        compiler_params=cparams_seq,
    )(vf, a, b, sel, gamma, beta)

    # ---- sweep 2: recompute h, normalize + ReLU, lane-dense stores -----------------
    out_flat = pl.pallas_call(
        _apply_kernel,
        out_shape=jax.ShapeDtypeStruct((n, cout3), jnp.float32),
        grid=grid,
        in_specs=[
            pl.BlockSpec((tile, pc), row_tile),
            pl.BlockSpec((pc, cout3), const),
            pl.BlockSpec((pc, cout3), const),
            pl.BlockSpec((pc, p), const),
            pl.BlockSpec((2, cout3), const),
        ],
        out_specs=pl.BlockSpec((tile, cout3), row_tile),
        compiler_params=cparams_par,
    )(vf, a, b, sel, stats)

    # free view: column 3*c + d -> out[n, c, d]  == torch.stack((y_x, y_y, y_z), dim=2)
    return out_flat.reshape(n, cout3 // 3, 3)


def reference_forward(voxels, weights, biases, gammas, betas):
    """Pure-JAX mirror of the PyTorch module (training-mode BatchNorm1d)."""
    mask = jnp.sum(voxels, axis=-1, keepdims=True) != 0                 # (N, P, 1)
    cnt = jnp.sum(mask, axis=1, keepdims=True)                          # (N, 1, 1)
    vmean = jnp.sum(voxels, axis=1, keepdims=True) / cnt                # (N, 1, C)
    outs = []
    for d in range(3):
        off = voxels[:, :, d] - vmean[:, :, d]                          # (N, P)
        h = off @ weights[d].T + biases[d]
        mu = jnp.mean(h, axis=0, keepdims=True)
        var = jnp.mean((h - mu) ** 2, axis=0, keepdims=True)
        y = (h - mu) / jnp.sqrt(var + BN_EPS) * gammas[d] + betas[d]
        outs.append(jnp.maximum(y, 0.0))
    return jnp.stack(outs, axis=2)                                      # (N, cout, 3)


if __name__ == "__main__":
    key = jax.random.PRNGKey(0)
    kv, kn, *kp = jax.random.split(key, 14)

    N, P, C, COUT = 1024, 4, 4, 128     # module contract: Linear cin == max_points == P
    TILE_N = 256                        # 4-step pipelined grid for the demo

    # voxels with zero-padded tail points, like the real VFE input
    voxels = 1.5 * jax.random.normal(kv, (N, P, C), jnp.float32) + 0.5
    nvalid = jax.random.randint(kn, (N, 1), 1, P + 1)                   # 1..P valid points
    voxels = jnp.where((jnp.arange(P)[None, :] < nvalid)[..., None], voxels, 0.0)

    lim = 1.0 / (P ** 0.5)              # nn.Linear default init range
    weights, biases, gammas, betas = [], [], [], []
    for d in range(3):
        kw, kb, kg, kt = kp[4 * d:4 * d + 4]
        weights.append(jax.random.uniform(kw, (COUT, P), jnp.float32, -lim, lim))
        biases.append(jax.random.uniform(kb, (COUT,), jnp.float32, -lim, lim))
        gammas.append(1.0 + 0.1 * jax.random.normal(kg, (COUT,), jnp.float32))
        betas.append(0.1 * jax.random.normal(kt, (COUT,), jnp.float32))

    ref = reference_forward(voxels, weights, biases, gammas, betas)

    # f32 path (tolerance covers bias fold + E[h^2]-mean^2 / FMA reassociation only)
    params_f32 = prepare_params(weights, gammas, betas, num_point_features=C)
    out = jax.block_until_ready(
        voxel_feature_encoding_forward(voxels, params_f32, tile_n=TILE_N))
    assert out.shape == (N, COUT, 3)
    assert jnp.allclose(out, ref, atol=2e-4, rtol=2e-4), "f32 kernel mismatch vs reference"

    # bf16-matmul path (per perf review): halves voxel-read bytes & MXU passes,
    # f32 accumulation and f32 output preserved.
    params_bf16 = prepare_params(weights, gammas, betas, num_point_features=C,
                                 compute_dtype=jnp.bfloat16)
    out_bf16 = jax.block_until_ready(
        voxel_feature_encoding_forward(voxels, params_bf16, tile_n=TILE_N))
    rel_err = jnp.linalg.norm(out_bf16 - ref) / jnp.linalg.norm(ref)
    assert rel_err < 3e-2, f"bf16 kernel rel-err too large: {rel_err}"

    print("KERNEL_OK")
</pallas_src>

<mosaic_0001>
module attributes {stable_mosaic.version = 11 : i64} {
  func.func @_stats_kernel(%arg0: i32, %arg1: memref<256x16xf32, #tpu.memory_space<vmem>>, %arg2: memref<16x384xf32, #tpu.memory_space<vmem>>, %arg3: memref<16x384xf32, #tpu.memory_space<vmem>>, %arg4: memref<16x4xf32, #tpu.memory_space<vmem>>, %arg5: memref<1x384xf32, #tpu.memory_space<vmem>>, %arg6: memref<1x384xf32, #tpu.memory_space<vmem>>, %arg7: memref<2x384xf32, #tpu.memory_space<vmem>>) attributes {dimension_semantics = [#tpu.dimension_semantics<arbitrary>], iteration_bounds = array<i64: 4>, scalar_prefetch = 0 : i64, scratch_operands = 0 : i64, tpu.core_type = #tpu.core_type<tc>, window_params = [{transform_indices = @transform_0, window_bounds = array<i64: 256, 16>}, {pipeline_mode = #tpu.pipeline_mode<synchronous>, transform_indices = @transform_1, window_bounds = array<i64: 16, 384>}, {pipeline_mode = #tpu.pipeline_mode<synchronous>, transform_indices = @transform_2, window_bounds = array<i64: 16, 384>}, {pipeline_mode = #tpu.pipeline_mode<synchronous>, transform_indices = @transform_3, window_bounds = array<i64: 16, 4>}, {pipeline_mode = #tpu.pipeline_mode<synchronous>, transform_indices = @transform_4, window_bounds = array<i64: 1, 384>}, {pipeline_mode = #tpu.pipeline_mode<synchronous>, transform_indices = @transform_5, window_bounds = array<i64: 1, 384>}, {pipeline_mode = #tpu.pipeline_mode<synchronous>, transform_indices = @transform_6, window_bounds = array<i64: 2, 384>}]} {
    %c0_i32 = arith.constant 0 : i32
    %0 = arith.cmpi eq, %arg0, %c0_i32 : i32
    %1 = arith.extui %0 : i1 to i32
    %c0_i32_0 = arith.constant 0 : i32
    %2 = arith.cmpi ne, %1, %c0_i32_0 : i32
    scf.if %2 {
      %cst_25 = arith.constant 0.000000e+00 : f32
      %47 = vector.broadcast %cst_25 : f32 to vector<2x384xf32>
      %c0_26 = arith.constant 0 : index
      %c0_27 = arith.constant 0 : index
      %48 = vector.load %arg7[%c0_26, %c0_27] : memref<2x384xf32, #tpu.memory_space<vmem>>, vector<2x384xf32>
      tpu.vector_store %arg7[%c0_26, %c0_27], %47 {strides = array<i32>} : memref<2x384xf32, #tpu.memory_space<vmem>>, vector<2x384xf32>,
    } else {
    }
    %c0 = arith.constant 0 : index
    %c0_1 = arith.constant 0 : index
    %3 = vector.load %arg1[%c0, %c0_1] : memref<256x16xf32, #tpu.memory_space<vmem>>, vector<256x16xf32>
    %c0_2 = arith.constant 0 : index
    %c0_3 = arith.constant 0 : index
    %4 = vector.load %arg2[%c0_2, %c0_3] : memref<16x384xf32, #tpu.memory_space<vmem>>, vector<16x384xf32>
    %c0_4 = arith.constant 0 : index
    %c0_5 = arith.constant 0 : index
    %5 = vector.load %arg3[%c0_4, %c0_5] : memref<16x384xf32, #tpu.memory_space<vmem>>, vector<16x384xf32>
    %c0_6 = arith.constant 0 : index
    %c0_7 = arith.constant 0 : index
    %6 = vector.load %arg4[%c0_6, %c0_7] : memref<16x4xf32, #tpu.memory_space<vmem>>, vector<16x4xf32>
    %cst = arith.constant dense<0.000000e+00> : vector<256x4xf32>
    %7 = tpu.matmul %3, %6, %cst {dimension_numbers = #tpu.dot_dimension_numbers<[1], [0], [0], [1], [0, 0, 1, 1], [], []>} : vector<256x16xf32>, vector<16x4xf32>, vector<256x4xf32> -> vector<256x4xf32>
    %cst_8 = arith.constant 0.000000e+00 : f32
    %8 = vector.broadcast %cst_8 : f32 to vector<256x4xf32>
    %9 = arith.cmpf one, %7, %8 : vector<256x4xf32>
    %10 = arith.extui %9 : vector<256x4xi1> to vector<256x4xi32>
    %11 = arith.sitofp %10 : vector<256x4xi32> to vector<256x4xf32>
    %cst_9 = arith.constant dense<0.000000e+00> : vector<256xf32>
    %12 = vector.multi_reduction <add>, %11, %cst_9 [1] : vector<256x4xf32> to vector<256xf32>
    %13 = vector.shape_cast %12 : vector<256xf32> to vector<256x1xf32>
    %cst_10 = arith.constant 1.000000e+00 : f32
    %14 = vector.broadcast %cst_10 : f32 to vector<256x1xf32>
    %15 = arith.maximumf %13, %14 : vector<256x1xf32>
    %cst_11 = arith.constant 1.000000e+00 : f32
    %16 = vector.broadcast %cst_11 : f32 to vector<256x1xf32>
    %17 = arith.divf %16, %15 : vector<256x1xf32>
    %cst_12 = arith.constant dense<0.000000e+00> : vector<256x384xf32>
    %18 = tpu.matmul %3, %4, %cst_12 {dimension_numbers = #tpu.dot_dimension_numbers<[1], [0], [0], [1], [0, 0, 1, 1], [], []>} : vector<256x16xf32>, vector<16x384xf32>, vector<256x384xf32> -> vector<256x384xf32>
    %cst_13 = arith.constant dense<0.000000e+00> : vector<256x384xf32>
    %19 = tpu.matmul %3, %5, %cst_13 {dimension_numbers = #tpu.dot_dimension_numbers<[1], [0], [0], [1], [0, 0, 1, 1], [], []>} : vector<256x16xf32>, vector<16x384xf32>, vector<256x384xf32> -> vector<256x384xf32>
    %20 = vector.broadcast %17 : vector<256x1xf32> to vector<256x384xf32>
    %21 = arith.mulf %20, %19 : vector<256x384xf32>
    %22 = arith.subf %18, %21 : vector<256x384xf32>
    %c256_i32 = arith.constant 256 : i32
    %23 = arith.muli %arg0, %c256_i32 : i32
    %24 = tpu.iota {dimensions = array<i32: 0>} : vector<256x1xi32>
    %25 = vector.broadcast %23 : i32 to vector<256x1xi32>
    %26 = arith.addi %25, %24 : vector<256x1xi32>
    %c1024_i32 = arith.constant 1024 : i32
    %27 = vector.broadcast %c1024_i32 : i32 to vector<256x1xi32>
    %28 = arith.cmpi slt, %26, %27 : vector<256x1xi32>
    %cst_14 = arith.constant 0.000000e+00 : f32
    %29 = vector.shape_cast %28 : vector<256x1xi1> to vector<256x1xi1>
    %30 = vector.broadcast %29 : vector<256x1xi1> to vector<256x384xi1>
    %31 = vector.broadcast %cst_14 : f32 to vector<256x384xf32>
    %32 = arith.select %30, %22, %31 : vector<256x384xi1>, vector<256x384xf32>
    %c0_15 = arith.constant 0 : index
    %c0_16 = arith.constant 0 : index
    %33 = vector.load %arg7[%c0_15, %c0_16] : memref<2x384xf32, #tpu.memory_space<vmem>>, vector<1x384xf32>
    %cst_17 = arith.constant dense<0.000000e+00> : vector<384xf32>
    %34 = vector.multi_reduction <add>, %32, %cst_17 [0] : vector<256x384xf32> to vector<384xf32>
    %35 = vector.shape_cast %34 : vector<384xf32> to vector<1x384xf32>
    %36 = arith.addf %33, %35 : vector<1x384xf32>
    %c0_18 = arith.constant 0 : index
    %c0_19 = arith.constant 0 : index
    %37 = vector.load %arg7[%c0_18, %c0_19] : memref<2x384xf32, #tpu.memory_space<vmem>>, vector<1x384xf32>
    tpu.vector_store %arg7[%c0_18, %c0_19], %36 {strides = array<i32>} : memref<2x384xf32, #tpu.memory_space<vmem>>, vector<1x384xf32>,
    %c1 = arith.constant 1 : index
    %c0_20 = arith.constant 0 : index
    %38 = vector.load %arg7[%c1, %c0_20] : memref<2x384xf32, #tpu.memory_space<vmem>>, vector<1x384xf32>
    %39 = arith.mulf %32, %32 : vector<256x384xf32>
    %cst_21 = arith.constant dense<0.000000e+00> : vector<384xf32>
    %40 = vector.multi_reduction <add>, %39, %cst_21 [0] : vector<256x384xf32> to vector<384xf32>
    %41 = vector.shape_cast %40 : vector<384xf32> to vector<1x384xf32>
    %42 = arith.addf %38, %41 : vector<1x384xf32>
    %c1_22 = arith.constant 1 : index
    %c0_23 = arith.constant 0 : index
    %43 = vector.load %arg7[%c1_22, %c0_23] : memref<2x384xf32, #tpu.memory_space<vmem>>, vector<1x384xf32>
    tpu.vector_store %arg7[%c1_22, %c0_23], %42 {strides = array<i32>} : memref<2x384xf32, #tpu.memory_space<vmem>>, vector<1x384xf32>,
    %c3_i32 = arith.constant 3 : i32
    %44 = arith.cmpi eq, %arg0, %c3_i32 : i32
    %45 = arith.extui %44 : i1 to i32
    %c0_i32_24 = arith.constant 0 : i32
    %46 = arith.cmpi ne, %45, %c0_i32_24 : i32
    scf.if %46 {
      %c0_25 = arith.constant 0 : index
      %c0_26 = arith.constant 0 : index
      %47 = vector.load %arg7[%c0_25, %c0_26] : memref<2x384xf32, #tpu.memory_space<vmem>>, vector<1x384xf32>
      %cst_27 = arith.constant 9.765625E-4 : f32
      %48 = vector.broadcast %cst_27 : f32 to vector<1x384xf32>
      %49 = arith.mulf %47, %48 : vector<1x384xf32>
      %c1_28 = arith.constant 1 : index
      %c0_29 = arith.constant 0 : index
      %50 = vector.load %arg7[%c1_28, %c0_29] : memref<2x384xf32, #tpu.memory_space<vmem>>, vector<1x384xf32>
      %cst_30 = arith.constant 9.765625E-4 : f32
      %51 = vector.broadcast %cst_30 : f32 to vector<1x384xf32>
      %52 = arith.mulf %50, %51 : vector<1x384xf32>
      %53 = arith.mulf %49, %49 : vector<1x384xf32>
      %54 = arith.subf %52, %53 : vector<1x384xf32>
      %cst_31 = arith.constant 0.000000e+00 : f32
      %55 = vector.broadcast %cst_31 : f32 to vector<1x384xf32>
      %56 = arith.maximumf %54, %55 : vector<1x384xf32>
      %cst_32 = arith.constant 9.99999974E-6 : f32
      %57 = vector.broadcast %cst_32 : f32 to vector<1x384xf32>
      %58 = arith.addf %56, %57 : vector<1x384xf32>
      %59 = math.sqrt %58 : vector<1x384xf32>
      %cst_33 = arith.constant 1.000000e+00 : f32
      %60 = vector.broadcast %cst_33 : f32 to vector<1x384xf32>
      %61 = arith.divf %60, %59 : vector<1x384xf32>
      %c0_34 = arith.constant 0 : index
      %c0_35 = arith.constant 0 : index
      %62 = vector.load %arg5[%c0_34, %c0_35] : memref<1x384xf32, #tpu.memory_space<vmem>>, vector<1x384xf32>
      %63 = arith.mulf %62, %61 : vector<1x384xf32>
      %c0_36 = arith.constant 0 : index
      %c0_37 = arith.constant 0 : index
      %64 = vector.load %arg6[%c0_36, %c0_37] : memref<1x384xf32, #tpu.memory_space<vmem>>, vector<1x384xf32>
      %65 = arith.mulf %49, %63 : vector<1x384xf32>
      %66 = arith.subf %64, %65 : vector<1x384xf32>
      %c0_38 = arith.constant 0 : index
      %c0_39 = arith.constant 0 : index
      %67 = vector.load %arg7[%c0_38, %c0_39] : memref<2x384xf32, #tpu.memory_space<vmem>>, vector<1x384xf32>
      tpu.vector_store %arg7[%c0_38, %c0_39], %63 {strides = array<i32>} : memref<2x384xf32, #tpu.memory_space<vmem>>, vector<1x384xf32>,
      %c1_40 = arith.constant 1 : index
      %c0_41 = arith.constant 0 : index
      %68 = vector.load %arg7[%c1_40, %c0_41] : memref<2x384xf32, #tpu.memory_space<vmem>>, vector<1x384xf32>
      tpu.vector_store %arg7[%c1_40, %c0_41], %66 {strides = array<i32>} : memref<2x384xf32, #tpu.memory_space<vmem>>, vector<1x384xf32>,
    } else {
    }
    return
  }
  func.func @transform_0(%arg0: i32) -> (i32, i32) {
    %c0_i32 = arith.constant 0 : i32
    %c0_i32_0 = arith.constant 0 : i32
    return %arg0, %c0_i32 : i32, i32
  }
  func.func @transform_1(%arg0: i32) -> (i32, i32) {
    %c0_i32 = arith.constant 0 : i32
    %c0_i32_0 = arith.constant 0 : i32
    %c0_i32_1 = arith.constant 0 : i32
    return %c0_i32, %c0_i32_0 : i32, i32
  }
  func.func @transform_2(%arg0: i32) -> (i32, i32) {
    %c0_i32 = arith.constant 0 : i32
    %c0_i32_0 = arith.constant 0 : i32
    %c0_i32_1 = arith.constant 0 : i32
    return %c0_i32, %c0_i32_0 : i32, i32
  }
  func.func @transform_3(%arg0: i32) -> (i32, i32) {
    %c0_i32 = arith.constant 0 : i32
    %c0_i32_0 = arith.constant 0 : i32
    %c0_i32_1 = arith.constant 0 : i32
    return %c0_i32, %c0_i32_0 : i32, i32
  }
  func.func @transform_4(%arg0: i32) -> (i32, i32) {
    %c0_i32 = arith.constant 0 : i32
    %c0_i32_0 = arith.constant 0 : i32
    %c0_i32_1 = arith.constant 0 : i32
    return %c0_i32, %c0_i32_0 : i32, i32
  }
  func.func @transform_5(%arg0: i32) -> (i32, i32) {
    %c0_i32 = arith.constant 0 : i32
    %c0_i32_0 = arith.constant 0 : i32
    %c0_i32_1 = arith.constant 0 : i32
    return %c0_i32, %c0_i32_0 : i32, i32
  }
  func.func @transform_6(%arg0: i32) -> (i32, i32) {
    %c0_i32 = arith.constant 0 : i32
    %c0_i32_0 = arith.constant 0 : i32
    %c0_i32_1 = arith.constant 0 : i32
    return %c0_i32, %c0_i32_0 : i32, i32
  }
}

module attributes {stable_mosaic.version = 11 : i64} {
  func.func @_apply_kernel(%arg0: i32, %arg1: memref<256x16xf32, #tpu.memory_space<vmem>>, %arg2: memref<16x384xf32, #tpu.memory_space<vmem>>, %arg3: memref<16x384xf32, #tpu.memory_space<vmem>>, %arg4: memref<16x4xf32, #tpu.memory_space<vmem>>, %arg5: memref<2x384xf32, #tpu.memory_space<vmem>>, %arg6: memref<256x384xf32, #tpu.memory_space<vmem>>) attributes {dimension_semantics = [#tpu.dimension_semantics<parallel>], iteration_bounds = array<i64: 4>, scalar_prefetch = 0 : i64, scratch_operands = 0 : i64, tpu.core_type = #tpu.core_type<tc>, window_params = [{transform_indices = @transform_0, window_bounds = array<i64: 256, 16>}, {pipeline_mode = #tpu.pipeline_mode<synchronous>, transform_indices = @transform_1, window_bounds = array<i64: 16, 384>}, {pipeline_mode = #tpu.pipeline_mode<synchronous>, transform_indices = @transform_2, window_bounds = array<i64: 16, 384>}, {pipeline_mode = #tpu.pipeline_mode<synchronous>, transform_indices = @transform_3, window_bounds = array<i64: 16, 4>}, {pipeline_mode = #tpu.pipeline_mode<synchronous>, transform_indices = @transform_4, window_bounds = array<i64: 2, 384>}, {transform_indices = @transform_5, window_bounds = array<i64: 256, 384>}]} {
    %c0 = arith.constant 0 : index
    %c0_0 = arith.constant 0 : index
    %0 = vector.load %arg1[%c0, %c0_0] : memref<256x16xf32, #tpu.memory_space<vmem>>, vector<256x16xf32>
    %c0_1 = arith.constant 0 : index
    %c0_2 = arith.constant 0 : index
    %1 = vector.load %arg2[%c0_1, %c0_2] : memref<16x384xf32, #tpu.memory_space<vmem>>, vector<16x384xf32>
    %c0_3 = arith.constant 0 : index
    %c0_4 = arith.constant 0 : index
    %2 = vector.load %arg3[%c0_3, %c0_4] : memref<16x384xf32, #tpu.memory_space<vmem>>, vector<16x384xf32>
    %c0_5 = arith.constant 0 : index
    %c0_6 = arith.constant 0 : index
    %3 = vector.load %arg4[%c0_5, %c0_6] : memref<16x4xf32, #tpu.memory_space<vmem>>, vector<16x4xf32>
    %cst = arith.constant dense<0.000000e+00> : vector<256x4xf32>
    %4 = tpu.matmul %0, %3, %cst {dimension_numbers = #tpu.dot_dimension_numbers<[1], [0], [0], [1], [0, 0, 1, 1], [], []>} : vector<256x16xf32>, vector<16x4xf32>, vector<256x4xf32> -> vector<256x4xf32>
    %cst_7 = arith.constant 0.000000e+00 : f32
    %5 = vector.broadcast %cst_7 : f32 to vector<256x4xf32>
    %6 = arith.cmpf one, %4, %5 : vector<256x4xf32>
    %7 = arith.extui %6 : vector<256x4xi1> to vector<256x4xi32>
    %8 = arith.sitofp %7 : vector<256x4xi32> to vector<256x4xf32>
    %cst_8 = arith.constant dense<0.000000e+00> : vector<256xf32>
    %9 = vector.multi_reduction <add>, %8, %cst_8 [1] : vector<256x4xf32> to vector<256xf32>
    %10 = vector.shape_cast %9 : vector<256xf32> to vector<256x1xf32>
    %cst_9 = arith.constant 1.000000e+00 : f32
    %11 = vector.broadcast %cst_9 : f32 to vector<256x1xf32>
    %12 = arith.maximumf %10, %11 : vector<256x1xf32>
    %cst_10 = arith.constant 1.000000e+00 : f32
    %13 = vector.broadcast %cst_10 : f32 to vector<256x1xf32>
    %14 = arith.divf %13, %12 : vector<256x1xf32>
    %cst_11 = arith.constant dense<0.000000e+00> : vector<256x384xf32>
    %15 = tpu.matmul %0, %1, %cst_11 {dimension_numbers = #tpu.dot_dimension_numbers<[1], [0], [0], [1], [0, 0, 1, 1], [], []>} : vector<256x16xf32>, vector<16x384xf32>, vector<256x384xf32> -> vector<256x384xf32>
    %cst_12 = arith.constant dense<0.000000e+00> : vector<256x384xf32>
    %16 = tpu.matmul %0, %2, %cst_12 {dimension_numbers = #tpu.dot_dimension_numbers<[1], [0], [0], [1], [0, 0, 1, 1], [], []>} : vector<256x16xf32>, vector<16x384xf32>, vector<256x384xf32> -> vector<256x384xf32>
    %17 = vector.broadcast %14 : vector<256x1xf32> to vector<256x384xf32>
    %18 = arith.mulf %17, %16 : vector<256x384xf32>
    %19 = arith.subf %15, %18 : vector<256x384xf32>
    %c0_13 = arith.constant 0 : index
    %c0_14 = arith.constant 0 : index
    %20 = vector.load %arg5[%c0_13, %c0_14] : memref<2x384xf32, #tpu.memory_space<vmem>>, vector<1x384xf32>
    %21 = vector.broadcast %20 : vector<1x384xf32> to vector<256x384xf32>
    %22 = arith.mulf %19, %21 : vector<256x384xf32>
    %c1 = arith.constant 1 : index
    %c0_15 = arith.constant 0 : index
    %23 = vector.load %arg5[%c1, %c0_15] : memref<2x384xf32, #tpu.memory_space<vmem>>, vector<1x384xf32>
    %24 = vector.broadcast %23 : vector<1x384xf32> to vector<256x384xf32>
    %25 = arith.addf %22, %24 : vector<256x384xf32>
    %cst_16 = arith.constant 0.000000e+00 : f32
    %26 = vector.broadcast %cst_16 : f32 to vector<256x384xf32>
    %27 = arith.maximumf %25, %26 : vector<256x384xf32>
    %c0_17 = arith.constant 0 : index
    %c0_18 = arith.constant 0 : index
    %28 = vector.load %arg6[%c0_17, %c0_18] : memref<256x384xf32, #tpu.memory_space<vmem>>, vector<256x384xf32>
    tpu.vector_store %arg6[%c0_17, %c0_18], %27 {strides = array<i32>} : memref<256x384xf32, #tpu.memory_space<vmem>>, vector<256x384xf32>,
    return
  }
  func.func @transform_0(%arg0: i32) -> (i32, i32) {
    %c0_i32 = arith.constant 0 : i32
    %c0_i32_0 = arith.constant 0 : i32
    return %arg0, %c0_i32 : i32, i32
  }
  func.func @transform_1(%arg0: i32) -> (i32, i32) {
    %c0_i32 = arith.constant 0 : i32
    %c0_i32_0 = arith.constant 0 : i32
    %c0_i32_1 = arith.constant 0 : i32
    return %c0_i32, %c0_i32_0 : i32, i32
  }
  func.func @transform_2(%arg0: i32) -> (i32, i32) {
    %c0_i32 = arith.constant 0 : i32
    %c0_i32_0 = arith.constant 0 : i32
    %c0_i32_1 = arith.constant 0 : i32
    return %c0_i32, %c0_i32_0 : i32, i32
  }
  func.func @transform_3(%arg0: i32) -> (i32, i32) {
    %c0_i32 = arith.constant 0 : i32
    %c0_i32_0 = arith.constant 0 : i32
    %c0_i32_1 = arith.constant 0 : i32
    return %c0_i32, %c0_i32_0 : i32, i32
  }
  func.func @transform_4(%arg0: i32) -> (i32, i32) {
    %c0_i32 = arith.constant 0 : i32
    %c0_i32_0 = arith.constant 0 : i32
    %c0_i32_1 = arith.constant 0 : i32
    return %c0_i32, %c0_i32_0 : i32, i32
  }
  func.func @transform_5(%arg0: i32) -> (i32, i32) {
    %c0_i32 = arith.constant 0 : i32
    %c0_i32_0 = arith.constant 0 : i32
    return %arg0, %c0_i32 : i32, i32
  }
}

</mosaic_0001>

<llo_original>
// kernel: voxel_feature_encoding_forward.2
$region0: #{voxel_feature_encoding_forward.2}
  #allocation0 [shape = 'u32[]', space=smem, size = 0x4, offset = 0x4, fixed_abs, tag = 'smem constant byte address 0x4 - core index']
  #allocation1 [shape = 'u32[72,128]{1,0:T(1,128)}', space=vmem, size = 0x9000, scoped, tag = 'internal scratch']
  %s0 = inlined_call_operand.vmem [shape: f32[1024,16], index: 0, kind: input, shape index: {}]
  %s1 = inlined_call_operand.hbm [shape: f32[16,384], index: 1, kind: input, shape index: {}]
  %s2 = inlined_call_operand.hbm [shape: f32[16,384], index: 2, kind: input, shape index: {}]
  %s3 = inlined_call_operand.vmem [shape: f32[16,4], index: 3, kind: input, shape index: {}]
  %s4 = inlined_call_operand.hbm [shape: f32[1,384], index: 4, kind: input, shape index: {}]
  %s5 = inlined_call_operand.hbm [shape: f32[1,384], index: 5, kind: input, shape index: {}]
  %s6 = inlined_call_operand.vmem [shape: f32[2,384], index: 6, kind: output, shape index: {}]
  %s7 = sld [smem:[#allocation0]]
  $region81: #{voxel_feature_encoding_forward.2} parent=0
    _
  %s9 = ssub.s32 1, %s7
  %s10 = scalar_select 0, %s9, %s7
  $region1: #{voxel_feature_encoding_forward.2} parent=0
    #allocation2 [shape = 'u8[24576]{0}', space=vmem, size = 0x6000, scoped, tag = 'input window, operand 1, single buffered']
    #allocation3 [shape = 's32[2]{0}', space=sflag, size = 0x8, scoped, tag = 'scoped memory for voxel_feature_encoding_forward.2']
    #allocation4 [shape = 'u8[24576]{0}', space=vmem, size = 0x6000, scoped, tag = 'input window, operand 2, single buffered']
    #allocation5 [shape = 's32[1]{0}', space=sflag, size = 0x4, scoped, tag = 'scoped memory for voxel_feature_encoding_forward.2']
    #allocation6 [shape = 'u8[1536]{0}', space=vmem, size = 0x800, scoped, tag = 'input window, operand 4, single buffered']
    #allocation7 [shape = 'u8[1536]{0}', space=vmem, size = 0x800, scoped, tag = 'input window, operand 5, single buffered']
    #allocation8 [shape = 's32[1]{0}', space=sflag, size = 0x4, scoped, tag = 'scoped memory for voxel_feature_encoding_forward.2']
    %11 = vsyncpa [#allocation3], 0
    %12 = vsyncpa [#allocation5], 0
    %13 = vsyncpa [#allocation8], 0
    loop: start=0, step=1, limit=6
    $region2: #{voxel_feature_encoding_forward.2} parent=1 // loop_pre_header
      _
    $region3: #{voxel_feature_encoding_forward.2} parent=1 // loop_header
      %s15 = sphi 0, %s19
      %p16 = scmp.ge.s32.totalorder %s15, 6
      %s25 = sphi 0, %s27
      %s28 = sphi 0, %s25
      %s29 = sphi 0, %s28
      %s45 = sphi 0, %s29
      %s49 = sphi 0, %s49
      %s51 = sphi 0, %s49
      %s52 = sphi 0, %s51
      %s66 = sphi 0, %s52
      %s70 = sphi 0, %s70
      %s72 = sphi 0, %s70
      %s73 = sphi 0, %s72
      %s87 = sphi 0, %s73
      %s91 = sphi 0, %s91
      %s93 = sphi 0, %s91
      %s94 = sphi 0, %s93
      %s108 = sphi 0, %s94
      %s112 = sphi 0, %s112
      %s114 = sphi 0, %s112
      %s115 = sphi 0, %s114
      %s129 = sphi 0, %s115
      %s133 = sphi 0, %s133
      %s135 = sphi 0, %s133
      %s136 = sphi 0, %s135
      %s150 = sphi 0, %s136
      %s154 = sphi 0, %s154
      %s156 = sphi 0, %s154
      %s157 = sphi 0, %s156
      %s171 = sphi 0, %s157
    $region4: #{voxel_feature_encoding_forward.2} parent=1 // loop_header_branch
      %18 = sbr.rel (%p16) target = $region8
    $region5: #{voxel_feature_encoding_forward.2} parent=1 // loop_body
      %s20 = ssub.s32 %s15, 1
      %s21 = ssub.s32 %s15, 2
      %s22 = sadd.s32 %s15, 1
      %s23 = ssub.s32 %s15, %s22
      %p24 = scmp.eq.s32.totalorder %s23, 0
      %s26 = sadd.s32 %s25, 1
      %s27 = scalar_select %p24, %s25, %s26
      %p30 = pneg %p24
      %p31 = scmp.eq.s32.totalorder %s15, 3
      %p32 = por %p30, %p31
      %p33 = scmp.ne.s32.totalorder %s25, %s28
      %p34 = scmp.eq.s32.totalorder %s15, 0
      %p35 = por %p33, %p34
      %p36 = scmp.ne.s32.totalorder %s25, %s28
      %p37 = scmp.eq.s32.totalorder %s20, 3
      %p38 = por %p36, %p37
      %p39 = scmp.ne.s32.totalorder %s28, %s29
      %p40 = scmp.eq.s32.totalorder %s20, 0
      %p41 = por %p39, %p40
      %p42 = scmp.ne.s32.totalorder %s28, %s29
      %p43 = scmp.eq.s32.totalorder %s21, 3
      %p44 = por %p42, %p43
      %p46 = scmp.ne.s32.totalorder %s29, %s45
      %p47 = scmp.eq.s32.totalorder %s21, 0
      %p48 = por %p46, %p47
      %s50 = sadd.s32 %s49, 1
      %p53 = scmp.eq.s32.totalorder %s15, 3
      %p54 = scmp.ne.s32.totalorder %s49, %s51
      %p55 = scmp.eq.s32.totalorder %s15, 0
      %p56 = por %p54, %p55
      %p57 = scmp.ne.s32.totalorder %s49, %s51
      %p58 = scmp.eq.s32.totalorder %s20, 3
      %p59 = por %p57, %p58
      %p60 = scmp.ne.s32.totalorder %s51, %s52
      %p61 = scmp.eq.s32.totalorder %s20, 0
      %p62 = por %p60, %p61
      %p63 = scmp.ne.s32.totalorder %s51, %s52
      %p64 = scmp.eq.s32.totalorder %s21, 3
      %p65 = por %p63, %p64
      %p67 = scmp.ne.s32.totalorder %s52, %s66
      %p68 = scmp.eq.s32.totalorder %s21, 0
      %p69 = por %p67, %p68
      %s71 = sadd.s32 %s70, 1
      %p74 = scmp.eq.s32.totalorder %s15, 3
      %p75 = scmp.ne.s32.totalorder %s70, %s72
      %p76 = scmp.eq.s32.totalorder %s15, 0
      %p77 = por %p75, %p76
      %p78 = scmp.ne.s32.totalorder %s70, %s72
      %p79 = scmp.eq.s32.totalorder %s20, 3
      %p80 = por %p78, %p79
      %p81 = scmp.ne.s32.totalorder %s72, %s73
      %p82 = scmp.eq.s32.totalorder %s20, 0
      %p83 = por %p81, %p82
      %p84 = scmp.ne.s32.totalorder %s72, %s73
      %p85 = scmp.eq.s32.totalorder %s21, 3
      %p86 = por %p84, %p85
      %p88 = scmp.ne.s32.totalorder %s73, %s87
      %p89 = scmp.eq.s32.totalorder %s21, 0
      %p90 = por %p88, %p89
      %s92 = sadd.s32 %s91, 1
      %p95 = scmp.eq.s32.totalorder %s15, 3
      %p96 = scmp.ne.s32.totalorder %s91, %s93
      %p97 = scmp.eq.s32.totalorder %s15, 0
      %p98 = por %p96, %p97
      %p99 = scmp.ne.s32.totalorder %s91, %s93
      %p100 = scmp.eq.s32.totalorder %s20, 3
      %p101 = por %p99, %p100
      %p102 = scmp.ne.s32.totalorder %s93, %s94
      %p103 = scmp.eq.s32.totalorder %s20, 0
      %p104 = por %p102, %p103
      %p105 = scmp.ne.s32.totalorder %s93, %s94
      %p106 = scmp.eq.s32.totalorder %s21, 3
      %p107 = por %p105, %p106
      %p109 = scmp.ne.s32.totalorder %s94, %s108
      %p110 = scmp.eq.s32.totalorder %s21, 0
      %p111 = por %p109, %p110
      %s113 = sadd.s32 %s112, 1
      %p116 = scmp.eq.s32.totalorder %s15, 3
      %p117 = scmp.ne.s32.totalorder %s112, %s114
      %p118 = scmp.eq.s32.totalorder %s15, 0
      %p119 = por %p117, %p118
      %p120 = scmp.ne.s32.totalorder %s112, %s114
      %p121 = scmp.eq.s32.totalorder %s20, 3
      %p122 = por %p120, %p121
      %p123 = scmp.ne.s32.totalorder %s114, %s115
      %p124 = scmp.eq.s32.totalorder %s20, 0
      %p125 = por %p123, %p124
      %p126 = scmp.ne.s32.totalorder %s114, %s115
      %p127 = scmp.eq.s32.totalorder %s21, 3
      %p128 = por %p126, %p127
      %p130 = scmp.ne.s32.totalorder %s115, %s129
      %p131 = scmp.eq.s32.totalorder %s21, 0
      %p132 = por %p130, %p131
      %s134 = sadd.s32 %s133, 1
      %p137 = scmp.eq.s32.totalorder %s15, 3
      %p138 = scmp.ne.s32.totalorder %s133, %s135
      %p139 = scmp.eq.s32.totalorder %s15, 0
      %p140 = por %p138, %p139
      %p141 = scmp.ne.s32.totalorder %s133, %s135
      %p142 = scmp.eq.s32.totalorder %s20, 3
      %p143 = por %p141, %p142
      %p144 = scmp.ne.s32.totalorder %s135, %s136
      %p145 = scmp.eq.s32.totalorder %s20, 0
      %p146 = por %p144, %p145
      %p147 = scmp.ne.s32.totalorder %s135, %s136
      %p148 = scmp.eq.s32.totalorder %s21, 3
      %p149 = por %p147, %p148
      %p151 = scmp.ne.s32.totalorder %s136, %s150
      %p152 = scmp.eq.s32.totalorder %s21, 0
      %p153 = por %p151, %p152
      %s155 = sadd.s32 %s154, 1
      %p158 = scmp.eq.s32.totalorder %s15, 3
      %p159 = scmp.ne.s32.totalorder %s154, %s156
      %p160 = scmp.eq.s32.totalorder %s15, 0
      %p161 = por %p159, %p160
      %p162 = scmp.ne.s32.totalorder %s154, %s156
      %p163 = scmp.eq.s32.totalorder %s20, 3
      %p164 = por %p162, %p163
      %p165 = scmp.ne.s32.totalorder %s156, %s157
      %p166 = scmp.eq.s32.totalorder %s20, 0
      %p167 = por %p165, %p166
      %p168 = scmp.ne.s32.totalorder %s156, %s157
      %p169 = scmp.eq.s32.totalorder %s21, 3
      %p170 = por %p168, %p169
      %p172 = scmp.ne.s32.totalorder %s157, %s171
      %p173 = scmp.eq.s32.totalorder %s21, 0
      %p174 = por %p172, %p173
      %p175 = scmp.le.s32.totalorder 1, %s15
      %p176 = scmp.lt.s32.totalorder %s15, 5
      %p177 = pnand %p175, %p176
      %p178 = pneg %p177
      // Predicated region
      $region9: #{voxel_feature_encoding_forward.2} parent=5 // pred_check
        _
      $region10: #{voxel_feature_encoding_forward.2} parent=5 // pred_check_branch
        %180 = sbr.rel (%p177) target = $region12
      $region11: #{voxel_feature_encoding_forward.2} parent=5 // pred_region
        %s181 = ssub.s32 %s15, 1
        // Predicated region
        $region13: #{voxel_feature_encoding_forward.2} parent=11 // pred_check
          %p182 = pneg %p62
        $region14: #{voxel_feature_encoding_forward.2} parent=11 // pred_check_branch
          %184 = sbr.rel (%p182) target = $region16
        $region15: #{voxel_feature_encoding_forward.2} parent=11 // pred_region
          %186 = vsyncadd [#allocation3], 0
          %s187 = sshll.u32 %s1, 4
          %s188 = int_to_ptr.hbm [resolvable:$true] %s187
          %s189 = sshll.u32 [#allocation2], 4
          %s190 = int_to_ptr.vmem [resolvable:$true] %s189
          %195 = dma.hbm_to_vmem [thread:$0]  %s188, 768, %s190, [#allocation3], 384, 384, 24
        $region16: #{voxel_feature_encoding_forward.2} parent=11 // pred_fallthru
          _
        // Predicated region
        $region17: #{voxel_feature_encoding_forward.2} parent=11 // pred_check
          %p196 = pneg %p83
        $region18: #{voxel_feature_encoding_forward.2} parent=11 // pred_check_branch
          %198 = sbr.rel (%p196) target = $region20
        $region19: #{voxel_feature_encoding_forward.2} parent=11 // pred_region
          %200 = vsyncadd [#allocation5], 0
          %s201 = sshll.u32 %s2, 4
          %s202 = int_to_ptr.hbm [resolvable:$true] %s201
          %s203 = sshll.u32 [#allocation4], 4
          %s204 = int_to_ptr.vmem [resolvable:$true] %s203
          %209 = dma.hbm_to_vmem [thread:$0]  %s202, 768, %s204, [#allocation5], 384, 384, 24
        $region20: #{voxel_feature_encoding_forward.2} parent=11 // pred_fallthru
          _
        // Predicated region
        $region21: #{voxel_feature_encoding_forward.2} parent=11 // pred_check
          %p210 = pneg %p104
        $region22: #{voxel_feature_encoding_forward.2} parent=11 // pred_check_branch
          %212 = sbr.rel (%p210) target = $region24
        $region23: #{voxel_feature_encoding_forward.2} parent=11 // pred_region
          _
        $region24: #{voxel_feature_encoding_forward.2} parent=11 // pred_fallthru
          _
        // Predicated region
        $region25: #{voxel_feature_encoding_forward.2} parent=11 // pred_check
          %p213 = pneg %p125
        $region26: #{voxel_feature_encoding_forward.2} parent=11 // pred_check_branch
          %215 = sbr.rel (%p213) target = $region28
        $region27: #{voxel_feature_encoding_forward.2} parent=11 // pred_region
          %217 = vsyncadd [#allocation5], 0
          %s219 = sshll.u32 %s4, 4
          %s220 = int_to_ptr.hbm [resolvable:$true] %s219
          %s221 = sshll.u32 [#allocation6], 4
          %s222 = int_to_ptr.vmem [resolvable:$true] %s221
          %224 = dma.hbm_to_vmem [thread:$0]  %s220, 48, %s222, [#allocation5]
        $region28: #{voxel_feature_encoding_forward.2} parent=11 // pred_fallthru
          _
        // Predicated region
        $region29: #{voxel_feature_encoding_forward.2} parent=11 // pred_check
          %p225 = pneg %p146
        $region30: #{voxel_feature_encoding_forward.2} parent=11 // pred_check_branch
          %227 = sbr.rel (%p225) target = $region32
        $region31: #{voxel_feature_encoding_forward.2} parent=11 // pred_region
          %229 = vsyncadd [#allocation8], 0
          %s231 = sshll.u32 %s5, 4
          %s232 = int_to_ptr.hbm [resolvable:$true] %s231
          %s233 = sshll.u32 [#allocation7], 4
          %s234 = int_to_ptr.vmem [resolvable:$true] %s233
          %236 = dma.hbm_to_vmem [thread:$0]  %s232, 48, %s234, [#allocation8]
        $region32: #{voxel_feature_encoding_forward.2} parent=11 // pred_fallthru
          _
      $region12: #{voxel_feature_encoding_forward.2} parent=5 // pred_fallthru
        _
      %p237 = scmp.lt.s32.totalorder %s15, 4
      // Predicated region
      $region33: #{voxel_feature_encoding_forward.2} parent=5 // pred_check
        %p238 = pneg %p237
      $region34: #{voxel_feature_encoding_forward.2} parent=5 // pred_check_branch
        %240 = sbr.rel (%p238) target = $region36
      $region35: #{voxel_feature_encoding_forward.2} parent=5 // pred_region
        // Predicated region
        $region37: #{voxel_feature_encoding_forward.2} parent=35 // pred_check
          %p241 = pneg %p35
        $region38: #{voxel_feature_encoding_forward.2} parent=35 // pred_check_branch
          %243 = sbr.rel (%p241) target = $region40
        $region39: #{voxel_feature_encoding_forward.2} parent=35 // pred_region
          %s244 = smul.u32 32, %s15
          %p245 = scmp.lt.s32.totalorder %s244, 127
          %s246 = scalar_select %p245, %s244, 127
          %s247 = smul.addr %s246, 8
          %s248 = scalar_lea.vmem %s0, %s247
          %s249 = smul.u32 32, %s15
        $region40: #{voxel_feature_encoding_forward.2} parent=35 // pred_fallthru
          _
      $region36: #{voxel_feature_encoding_forward.2} parent=5 // pred_fallthru
        _
      %p250 = scmp.le.s32.totalorder 1, %s15
      %p251 = scmp.lt.s32.totalorder %s15, 5
      %p252 = pnand %p250, %p251
      %p253 = pneg %p252
      // Predicated region
      $region41: #{voxel_feature_encoding_forward.2} parent=5 // pred_check
        _
      $region42: #{voxel_feature_encoding_forward.2} parent=5 // pred_check_branch
        %255 = sbr.rel (%p252) target = $region44
      $region43: #{voxel_feature_encoding_forward.2} parent=5 // pred_region
        %s256 = ssub.s32 %s15, 1
        // Predicated region
        $region45: #{voxel_feature_encoding_forward.2} parent=43 // pred_check
          %p257 = pneg %p62
        $region46: #{voxel_feature_encoding_forward.2} parent=43 // pred_check_branch
          %259 = sbr.rel (%p257) target = $region48
        $region47: #{voxel_feature_encoding_forward.2} parent=43 // pred_region
          %261 = dma.done [#allocation3], 768
        $region48: #{voxel_feature_encoding_forward.2} parent=43 // pred_fallthru
          _
        // Predicated region
        $region49: #{voxel_feature_encoding_forward.2} parent=43 // pred_check
          %p262 = pneg %p83
        $region50: #{voxel_feature_encoding_forward.2} parent=43 // pred_check_branch
          %264 = sbr.rel (%p262) target = $region52
        $region51: #{voxel_feature_encoding_forward.2} parent=43 // pred_region
          %266 = dma.done [#allocation5], 768
        $region52: #{voxel_feature_encoding_forward.2} parent=43 // pred_fallthru
          _
        // Predicated region
        $region53: #{voxel_feature_encoding_forward.2} parent=43 // pred_check
          %p267 = pneg %p125
        $region54: #{voxel_feature_encoding_forward.2} parent=43 // pred_check_branch
          %269 = sbr.rel (%p267) target = $region56
        $region55: #{voxel_feature_encoding_forward.2} parent=43 // pred_region
          %271 = dma.done [#allocation5], 48
        $region56: #{voxel_feature_encoding_forward.2} parent=43 // pred_fallthru
          _
        // Predicated region
        $region57: #{voxel_feature_encoding_forward.2} parent=43 // pred_check
          %p272 = pneg %p146
        $region58: #{voxel_feature_encoding_forward.2} parent=43 // pred_check_branch
          %274 = sbr.rel (%p272) target = $region60
        $region59: #{voxel_feature_encoding_forward.2} parent=43 // pred_region
          %276 = dma.done [#allocation8], 48
        $region60: #{voxel_feature_encoding_forward.2} parent=43 // pred_fallthru
          _
        %s277 = smul.u32 32, %s20
        %p278 = scmp.lt.s32.totalorder %s277, 127
        %s279 = scalar_select %p278, %s277, 127
        %s280 = smul.addr %s279, 8
        %s281 = scalar_lea.vmem %s0, %s280
        %p282 = pneg %p41
        %p283 = pneg %p38
        %p284 = pneg %p62
        %p285 = pneg %p59
        %p286 = pneg %p83
        %p287 = pneg %p80
        %p288 = pneg %p104
        %p289 = pneg %p101
        %p290 = pneg %p125
        %p291 = pneg %p122
        %p292 = pneg %p146
        %p293 = pneg %p143
        %p294 = pneg %p167
        %p295 = pneg %p164
        %s296 = smul.u32 32, %s20
        %p297 = scmp.lt.s32.totalorder %s296, 127
        %s298 = scalar_select %p297, %s296, 127
        %s299 = smul.addr %s298, 8
        %s300 = scalar_lea.vmem %s0, %s299
        %s301 = smul.u32 32, %s20
        %p302 = scmp.eq.s32.totalorder %s20, 0
        // Predicated region
        $region61: #{voxel_feature_encoding_forward.2} parent=43 // pred_check
          %p303 = pneg %p302
        $region62: #{voxel_feature_encoding_forward.2} parent=43 // pred_check_branch
          %305 = sbr.rel (%p303) target = $region64
        $region63: #{voxel_feature_encoding_forward.2} parent=43 // pred_region
          %306 = vst [vmem:[%s6] sm:$0x3f] 0.0
        $region64: #{voxel_feature_encoding_forward.2} parent=43 // pred_fallthru
          _
        %v307 = vld [vmem:[%s300] sm:$0xff]
        %v308 = vld [vmem:[%s300 + $0x8] sm:$0xff]
        %v309 = vld [vmem:[%s300 + $0x10] sm:$0xff]
        %v310 = vld [vmem:[%s300 + $0x18] sm:$0xff]
        %v311 = vld [vmem:[%s300 + $0x20] sm:$0xff]
        %v312 = vld [vmem:[%s300 + $0x28] sm:$0xff]
        %v313 = vld [vmem:[%s300 + $0x30] sm:$0xff]
        %v314 = vld [vmem:[%s300 + $0x38] sm:$0xff]
        %v315 = vld [vmem:[%s300 + $0x40] sm:$0xff]
        %v316 = vld [vmem:[%s300 + $0x48] sm:$0xff]
        %v317 = vld [vmem:[%s300 + $0x50] sm:$0xff]
        %v318 = vld [vmem:[%s300 + $0x58] sm:$0xff]
        %v319 = vld [vmem:[%s300 + $0x60] sm:$0xff]
        %v320 = vld [vmem:[%s300 + $0x68] sm:$0xff]
        %v321 = vld [vmem:[%s300 + $0x70] sm:$0xff]
        %v322 = vld [vmem:[%s300 + $0x78] sm:$0xff]
        %v323 = vld [vmem:[%s300 + $0x80] sm:$0xff]
        %v324 = vld [vmem:[%s300 + $0x88] sm:$0xff]
        %v325 = vld [vmem:[%s300 + $0x90] sm:$0xff]
        %v326 = vld [vmem:[%s300 + $0x98] sm:$0xff]
        %v327 = vld [vmem:[%s300 + $0xa0] sm:$0xff]
        %v328 = vld [vmem:[%s300 + $0xa8] sm:$0xff]
        %v329 = vld [vmem:[%s300 + $0xb0] sm:$0xff]
        %v330 = vld [vmem:[%s300 + $0xb8] sm:$0xff]
        %v331 = vld [vmem:[%s300 + $0xc0] sm:$0xff]
        %v332 = vld [vmem:[%s300 + $0xc8] sm:$0xff]
        %v333 = vld [vmem:[%s300 + $0xd0] sm:$0xff]
        %v334 = vld [vmem:[%s300 + $0xd8] sm:$0xff]
        %v335 = vld [vmem:[%s300 + $0xe0] sm:$0xff]
        %v336 = vld [vmem:[%s300 + $0xe8] sm:$0xff]
        %v337 = vld [vmem:[%s300 + $0xf0] sm:$0xff]
        %v338 = vld [vmem:[%s300 + $0xf8] sm:$0xff]
        %v339 = vld [vmem:[#allocation2] sm:$0xff]
        %v340 = vld [vmem:[#allocation2 + $0x8] sm:$0xff]
        %v341 = vld [vmem:[#allocation2 + $0x10] sm:$0xff]
        %v342 = vld [vmem:[#allocation2 + $0x18] sm:$0xff]
        %v343 = vld [vmem:[#allocation2 + $0x20] sm:$0xff]
        %v344 = vld [vmem:[#allocation2 + $0x28] sm:$0xff]
        %v345 = vld [vmem:[#allocation4] sm:$0xff]
        %v346 = vld [vmem:[#allocation4 + $0x8] sm:$0xff]
        %v347 = vld [vmem:[#allocation4 + $0x10] sm:$0xff]
        %v348 = vld [vmem:[#allocation4 + $0x18] sm:$0xff]
        %v349 = vld [vmem:[#allocation4 + $0x20] sm:$0xff]
        %v350 = vld [vmem:[#allocation4 + $0x28] sm:$0xff]
        %v351 = vld [vmem:[%s3] sm:$0xff]
        %v352 = vld [vmem:[%s3 + $0x8] sm:$0xff]
        %vm353 = vcmask 130048
        %v355 = vsel %vm353, %v307, 0
        %v358 = vsel %vm353, %v308, 0
        %v361 = vsel %vm353, %v309, 0
        %v364 = vsel %vm353, %v310, 0
        %v367 = vsel %vm353, %v311, 0
        %v370 = vsel %vm353, %v312, 0
        %v373 = vsel %vm353, %v313, 0
        %v376 = vsel %vm353, %v314, 0
        %v379 = vsel %vm353, %v315, 0
        %v382 = vsel %vm353, %v316, 0
        %v385 = vsel %vm353, %v317, 0
        %v388 = vsel %vm353, %v318, 0
        %v391 = vsel %vm353, %v319, 0
        %v394 = vsel %vm353, %v320, 0
        %v397 = vsel %vm353, %v321, 0
        %v400 = vsel %vm353, %v322, 0
        %v403 = vsel %vm353, %v323, 0
        %v406 = vsel %vm353, %v324, 0
        %v409 = vsel %vm353, %v325, 0
        %v412 = vsel %vm353, %v326, 0
        %v415 = vsel %vm353, %v327, 0
        %v418 = vsel %vm353, %v328, 0
        %v421 = vsel %vm353, %v329, 0
        %v424 = vsel %vm353, %v330, 0
        %v427 = vsel %vm353, %v331, 0
        %v430 = vsel %vm353, %v332, 0
        %v433 = vsel %vm353, %v333, 0
        %v436 = vsel %vm353, %v334, 0
        %v439 = vsel %vm353, %v335, 0
        %v442 = vsel %vm353, %v336, 0
        %v445 = vsel %vm353, %v337, 0
        %v448 = vsel %vm353, %v338, 0
        %450 = vmatpush.msra.mxu0 0.0
        %451 = vmatpush.msra.mxu0 0.0
        %452 = vmatpush.msra.mxu0 0.0
        %453 = vmatpush.msra.mxu0 0.0
        %454 = vmatpush.msra.mxu0 0.0
        %455 = vmatpush.msra.mxu0 0.0
        %456 = vmatpush.msra.mxu0 0.0
        %457 = vmatpush.msra.mxu0 0.0
        %458 = vmatpush.msra.mxu0 0.0
        %459 = vmatpush.msra.mxu0 0.0
        %460 = vmatpush.msra.mxu0 0.0
        %461 = vmatpush.msra.mxu0 0.0
        %462 = vmatpush.msra.mxu0 0.0
        %463 = vmatpush.msra.mxu0 0.0
        %464 = vmatpush.msra.mxu0 %v352
        %465 = vmatpush.msra.mxu0 %v351
        %466 = vmatmul.f32.gmra.mxu0 %v355
        %v467 = vpop.f32.mrf.mxu0
        %v468 = vadd.f32 0.0, %v467
        %469 = vmatmul.f32.gmra.mxu0 %v358
        %v470 = vpop.f32.mrf.mxu0
        %v471 = vadd.f32 0.0, %v470
        %472 = vmatmul.f32.gmra.mxu0 %v361
        %v473 = vpop.f32.mrf.mxu0
        %v474 = vadd.f32 0.0, %v473
        %475 = vmatmul.f32.gmra.mxu0 %v364
        %v476 = vpop.f32.mrf.mxu0
        %v477 = vadd.f32 0.0, %v476
        %478 = vmatmul.f32.gmra.mxu0 %v367
        %v479 = vpop.f32.mrf.mxu0
        %v480 = vadd.f32 0.0, %v479
        %481 = vmatmul.f32.gmra.mxu0 %v370
        %v482 = vpop.f32.mrf.mxu0
        %v483 = vadd.f32 0.0, %v482
        %484 = vmatmul.f32.gmra.mxu0 %v373
        %v485 = vpop.f32.mrf.mxu0
        %v486 = vadd.f32 0.0, %v485
        %487 = vmatmul.f32.gmra.mxu0 %v376
        %v488 = vpop.f32.mrf.mxu0
        %v489 = vadd.f32 0.0, %v488
        %490 = vmatmul.f32.gmra.mxu0 %v379
        %v491 = vpop.f32.mrf.mxu0
        %v492 = vadd.f32 0.0, %v491
        %493 = vmatmul.f32.gmra.mxu0 %v382
        %v494 = vpop.f32.mrf.mxu0
        %v495 = vadd.f32 0.0, %v494
        %496 = vmatmul.f32.gmra.mxu0 %v385
        %v497 = vpop.f32.mrf.mxu0
        %v498 = vadd.f32 0.0, %v497
        %499 = vmatmul.f32.gmra.mxu0 %v388
        %v500 = vpop.f32.mrf.mxu0
        %v501 = vadd.f32 0.0, %v500
        %502 = vmatmul.f32.gmra.mxu0 %v391
        %v503 = vpop.f32.mrf.mxu0
        %v504 = vadd.f32 0.0, %v503
        %505 = vmatmul.f32.gmra.mxu0 %v394
        %v506 = vpop.f32.mrf.mxu0
        %v507 = vadd.f32 0.0, %v506
        %508 = vmatmul.f32.gmra.mxu0 %v397
        %v509 = vpop.f32.mrf.mxu0
        %v510 = vadd.f32 0.0, %v509
        %511 = vmatmul.f32.gmra.mxu0 %v400
        %v512 = vpop.f32.mrf.mxu0
        %v513 = vadd.f32 0.0, %v512
        %514 = vmatmul.f32.gmra.mxu0 %v403
        %v515 = vpop.f32.mrf.mxu0
        %v516 = vadd.f32 0.0, %v515
        %517 = vmatmul.f32.gmra.mxu0 %v406
        %v518 = vpop.f32.mrf.mxu0
        %v519 = vadd.f32 0.0, %v518
        %520 = vmatmul.f32.gmra.mxu0 %v409
        %v521 = vpop.f32.mrf.mxu0
        %v522 = vadd.f32 0.0, %v521
        %523 = vmatmul.f32.gmra.mxu0 %v412
        %v524 = vpop.f32.mrf.mxu0
        %v525 = vadd.f32 0.0, %v524
        %526 = vmatmul.f32.gmra.mxu0 %v415
        %v527 = vpop.f32.mrf.mxu0
        %v528 = vadd.f32 0.0, %v527
        %529 = vmatmul.f32.gmra.mxu0 %v418
        %v530 = vpop.f32.mrf.mxu0
        %v531 = vadd.f32 0.0, %v530
        %532 = vmatmul.f32.gmra.mxu0 %v421
        %v533 = vpop.f32.mrf.mxu0
        %v534 = vadd.f32 0.0, %v533
        %535 = vmatmul.f32.gmra.mxu0 %v424
        %v536 = vpop.f32.mrf.mxu0
        %v537 = vadd.f32 0.0, %v536
        %538 = vmatmul.f32.gmra.mxu0 %v427
        %v539 = vpop.f32.mrf.mxu0
        %v540 = vadd.f32 0.0, %v539
        %541 = vmatmul.f32.gmra.mxu0 %v430
        %v542 = vpop.f32.mrf.mxu0
        %v543 = vadd.f32 0.0, %v542
        %544 = vmatmul.f32.gmra.mxu0 %v433
        %v545 = vpop.f32.mrf.mxu0
        %v546 = vadd.f32 0.0, %v545
        %547 = vmatmul.f32.gmra.mxu0 %v436
        %v548 = vpop.f32.mrf.mxu0
        %v549 = vadd.f32 0.0, %v548
        %550 = vmatmul.f32.gmra.mxu0 %v439
        %v551 = vpop.f32.mrf.mxu0
        %v552 = vadd.f32 0.0, %v551
        %553 = vmatmul.f32.gmra.mxu0 %v442
        %v554 = vpop.f32.mrf.mxu0
        %v555 = vadd.f32 0.0, %v554
        %556 = vmatmul.f32.gmra.mxu0 %v445
        %v557 = vpop.f32.mrf.mxu0
        %v558 = vadd.f32 0.0, %v557
        %559 = vmatmul.f32.gmra.mxu0 %v448
        %v560 = vpop.f32.mrf.mxu0
        %v561 = vadd.f32 0.0, %v560
        %562 = vdwg.mxu0
        %vm563 = vcmp.ne.f32.partialorder %v468, 0.0
        %vm564 = vcmp.ne.f32.partialorder %v471, 0.0
        %vm565 = vcmp.ne.f32.partialorder %v474, 0.0
        %vm566 = vcmp.ne.f32.partialorder %v477, 0.0
        %vm567 = vcmp.ne.f32.partialorder %v480, 0.0
        %vm568 = vcmp.ne.f32.partialorder %v483, 0.0
        %vm569 = vcmp.ne.f32.partialorder %v486, 0.0
        %vm570 = vcmp.ne.f32.partialorder %v489, 0.0
        %vm571 = vcmp.ne.f32.partialorder %v492, 0.0
        %vm572 = vcmp.ne.f32.partialorder %v495, 0.0
        %vm573 = vcmp.ne.f32.partialorder %v498, 0.0
        %vm574 = vcmp.ne.f32.partialorder %v501, 0.0
        %vm575 = vcmp.ne.f32.partialorder %v504, 0.0
        %vm576 = vcmp.ne.f32.partialorder %v507, 0.0
        %vm577 = vcmp.ne.f32.partialorder %v510, 0.0
        %vm578 = vcmp.ne.f32.partialorder %v513, 0.0
        %vm579 = vcmp.ne.f32.partialorder %v516, 0.0
        %vm580 = vcmp.ne.f32.partialorder %v519, 0.0
        %vm581 = vcmp.ne.f32.partialorder %v522, 0.0
        %vm582 = vcmp.ne.f32.partialorder %v525, 0.0
        %vm583 = vcmp.ne.f32.partialorder %v528, 0.0
        %vm584 = vcmp.ne.f32.partialorder %v531, 0.0
        %vm585 = vcmp.ne.f32.partialorder %v534, 0.0
        %vm586 = vcmp.ne.f32.partialorder %v537, 0.0
        %vm587 = vcmp.ne.f32.partialorder %v540, 0.0
        %vm588 = vcmp.ne.f32.partialorder %v543, 0.0
        %vm589 = vcmp.ne.f32.partialorder %v546, 0.0
        %vm590 = vcmp.ne.f32.partialorder %v549, 0.0
        %vm591 = vcmp.ne.f32.partialorder %v552, 0.0
        %vm592 = vcmp.ne.f32.partialorder %v555, 0.0
        %vm593 = vcmp.ne.f32.partialorder %v558, 0.0
        %vm594 = vcmp.ne.f32.partialorder %v561, 0.0
        %v595 = vsel %vm563, 1, 0
        %v596 = vsel %vm564, 1, 0
        %v597 = vsel %vm565, 1, 0
        %v598 = vsel %vm566, 1, 0
        %v599 = vsel %vm567, 1, 0
        %v600 = vsel %vm568, 1, 0
        %v601 = vsel %vm569, 1, 0
        %v602 = vsel %vm570, 1, 0
        %v603 = vsel %vm571, 1, 0
        %v604 = vsel %vm572, 1, 0
        %v605 = vsel %vm573, 1, 0
        %v606 = vsel %vm574, 1, 0
        %v607 = vsel %vm575, 1, 0
        %v608 = vsel %vm576, 1, 0
        %v609 = vsel %vm577, 1, 0
        %v610 = vsel %vm578, 1, 0
        %v611 = vsel %vm579, 1, 0
        %v612 = vsel %vm580, 1, 0
        %v613 = vsel %vm581, 1, 0
        %v614 = vsel %vm582, 1, 0
        %v615 = vsel %vm583, 1, 0
        %v616 = vsel %vm584, 1, 0
        %v617 = vsel %vm585, 1, 0
        %v618 = vsel %vm586, 1, 0
        %v619 = vsel %vm587, 1, 0
        %v620 = vsel %vm588, 1, 0
        %v621 = vsel %vm589, 1, 0
        %v622 = vsel %vm590, 1, 0
        %v623 = vsel %vm591, 1, 0
        %v624 = vsel %vm592, 1, 0
        %v625 = vsel %vm593, 1, 0
        %v626 = vsel %vm594, 1, 0
        %v627 = vcvt.s32.f32 %v595
        %v628 = vcvt.s32.f32 %v596
        %v629 = vcvt.s32.f32 %v597
        %v630 = vcvt.s32.f32 %v598
        %v631 = vcvt.s32.f32 %v599
        %v632 = vcvt.s32.f32 %v600
        %v633 = vcvt.s32.f32 %v601
        %v634 = vcvt.s32.f32 %v602
        %v635 = vcvt.s32.f32 %v603
        %v636 = vcvt.s32.f32 %v604
        %v637 = vcvt.s32.f32 %v605
        %v638 = vcvt.s32.f32 %v606
        %v639 = vcvt.s32.f32 %v607
        %v640 = vcvt.s32.f32 %v608
        %v641 = vcvt.s32.f32 %v609
        %v642 = vcvt.s32.f32 %v610
        %v643 = vcvt.s32.f32 %v611
        %v644 = vcvt.s32.f32 %v612
        %v645 = vcvt.s32.f32 %v613
        %v646 = vcvt.s32.f32 %v614
        %v647 = vcvt.s32.f32 %v615
        %v648 = vcvt.s32.f32 %v616
        %v649 = vcvt.s32.f32 %v617
        %v650 = vcvt.s32.f32 %v618
        %v651 = vcvt.s32.f32 %v619
        %v652 = vcvt.s32.f32 %v620
        %v653 = vcvt.s32.f32 %v621
        %v654 = vcvt.s32.f32 %v622
        %v655 = vcvt.s32.f32 %v623
        %v656 = vcvt.s32.f32 %v624
        %v657 = vcvt.s32.f32 %v625
        %v658 = vcvt.s32.f32 %v626
        %vm659 = vcmask 31744
        %v660 = vsel %vm659, %v627, 0.0
        %661 = vadd.xlane.f32.xlu0 %v660
        %v662 = vpop.xlane.xlu0 %661
        %v663 = vsel %vm659, %v628, 0.0
        %664 = vadd.xlane.f32.xlu0 %v663
        %v665 = vpop.xlane.xlu0 %664
        %v666 = vsel %vm659, %v629, 0.0
        %667 = vadd.xlane.f32.xlu0 %v666
        %v668 = vpop.xlane.xlu0 %667
        %v669 = vsel %vm659, %v630, 0.0
        %670 = vadd.xlane.f32.xlu0 %v669
        %v671 = vpop.xlane.xlu0 %670
        %v672 = vsel %vm659, %v631, 0.0
        %673 = vadd.xlane.f32.xlu0 %v672
        %v674 = vpop.xlane.xlu0 %673
        %v675 = vsel %vm659, %v632, 0.0
        %676 = vadd.xlane.f32.xlu0 %v675
        %v677 = vpop.xlane.xlu0 %676
        %v678 = vsel %vm659, %v633, 0.0
        %679 = vadd.xlane.f32.xlu0 %v678
        %v680 = vpop.xlane.xlu0 %679
        %v681 = vsel %vm659, %v634, 0.0
        %682 = vadd.xlane.f32.xlu0 %v681
        %v683 = vpop.xlane.xlu0 %682
        %v684 = vsel %vm659, %v635, 0.0
        %685 = vadd.xlane.f32.xlu0 %v684
        %v686 = vpop.xlane.xlu0 %685
        %v687 = vsel %vm659, %v636, 0.0
        %688 = vadd.xlane.f32.xlu0 %v687
        %v689 = vpop.xlane.xlu0 %688
        %v690 = vsel %vm659, %v637, 0.0
        %691 = vadd.xlane.f32.xlu0 %v690
        %v692 = vpop.xlane.xlu0 %691
        %v693 = vsel %vm659, %v638, 0.0
        %694 = vadd.xlane.f32.xlu0 %v693
        %v695 = vpop.xlane.xlu0 %694
        %v696 = vsel %vm659, %v639, 0.0
        %697 = vadd.xlane.f32.xlu0 %v696
        %v698 = vpop.xlane.xlu0 %697
        %v699 = vsel %vm659, %v640, 0.0
        %700 = vadd.xlane.f32.xlu0 %v699
        %v701 = vpop.xlane.xlu0 %700
        %v702 = vsel %vm659, %v641, 0.0
        %703 = vadd.xlane.f32.xlu0 %v702
        %v704 = vpop.xlane.xlu0 %703
        %v705 = vsel %vm659, %v642, 0.0
        %706 = vadd.xlane.f32.xlu0 %v705
        %v707 = vpop.xlane.xlu0 %706
        %v708 = vsel %vm659, %v643, 0.0
        %709 = vadd.xlane.f32.xlu0 %v708
        %v710 = vpop.xlane.xlu0 %709
        %v711 = vsel %vm659, %v644, 0.0
        %712 = vadd.xlane.f32.xlu0 %v711
        %v713 = vpop.xlane.xlu0 %712
        %v714 = vsel %vm659, %v645, 0.0
        %715 = vadd.xlane.f32.xlu0 %v714
        %v716 = vpop.xlane.xlu0 %715
        %v717 = vsel %vm659, %v646, 0.0
        %718 = vadd.xlane.f32.xlu0 %v717
        %v719 = vpop.xlane.xlu0 %718
        %v720 = vsel %vm659, %v647, 0.0
        %721 = vadd.xlane.f32.xlu0 %v720
        %v722 = vpop.xlane.xlu0 %721
        %v723 = vsel %vm659, %v648, 0.0
        %724 = vadd.xlane.f32.xlu0 %v723
        %v725 = vpop.xlane.xlu0 %724
        %v726 = vsel %vm659, %v649, 0.0
        %727 = vadd.xlane.f32.xlu0 %v726
        %v728 = vpop.xlane.xlu0 %727
        %v729 = vsel %vm659, %v650, 0.0
        %730 = vadd.xlane.f32.xlu0 %v729
        %v731 = vpop.xlane.xlu0 %730
        %v732 = vsel %vm659, %v651, 0.0
        %733 = vadd.xlane.f32.xlu0 %v732
        %v734 = vpop.xlane.xlu0 %733
        %v735 = vsel %vm659, %v652, 0.0
        %736 = vadd.xlane.f32.xlu0 %v735
        %v737 = vpop.xlane.xlu0 %736
        %v738 = vsel %vm659, %v653, 0.0
        %739 = vadd.xlane.f32.xlu0 %v738
        %v740 = vpop.xlane.xlu0 %739
        %v741 = vsel %vm659, %v654, 0.0
        %742 = vadd.xlane.f32.xlu0 %v741
        %v743 = vpop.xlane.xlu0 %742
        %v744 = vsel %vm659, %v655, 0.0
        %745 = vadd.xlane.f32.xlu0 %v744
        %v746 = vpop.xlane.xlu0 %745
        %v747 = vsel %vm659, %v656, 0.0
        %748 = vadd.xlane.f32.xlu0 %v747
        %v749 = vpop.xlane.xlu0 %748
        %v750 = vsel %vm659, %v657, 0.0
        %751 = vadd.xlane.f32.xlu0 %v750
        %v752 = vpop.xlane.xlu0 %751
        %v753 = vsel %vm659, %v658, 0.0
        %754 = vadd.xlane.f32.xlu0 %v753
        %v755 = vpop.xlane.xlu0 %754
        %v756 = vmax.f32 %v662, 1.0
        %v757 = vmax.f32 %v665, 1.0
        %v758 = vmax.f32 %v668, 1.0
        %v759 = vmax.f32 %v671, 1.0
        %v760 = vmax.f32 %v674, 1.0
        %v761 = vmax.f32 %v677, 1.0
        %v762 = vmax.f32 %v680, 1.0
        %v763 = vmax.f32 %v683, 1.0
        %v764 = vmax.f32 %v686, 1.0
        %v765 = vmax.f32 %v689, 1.0
        %v766 = vmax.f32 %v692, 1.0
        %v767 = vmax.f32 %v695, 1.0
        %v768 = vmax.f32 %v698, 1.0
        %v769 = vmax.f32 %v701, 1.0
        %v770 = vmax.f32 %v704, 1.0
        %v771 = vmax.f32 %v707, 1.0
        %v772 = vmax.f32 %v710, 1.0
        %v773 = vmax.f32 %v713, 1.0
        %v774 = vmax.f32 %v716, 1.0
        %v775 = vmax.f32 %v719, 1.0
        %v776 = vmax.f32 %v722, 1.0
        %v777 = vmax.f32 %v725, 1.0
        %v778 = vmax.f32 %v728, 1.0
        %v779 = vmax.f32 %v731, 1.0
        %v780 = vmax.f32 %v734, 1.0
        %v781 = vmax.f32 %v737, 1.0
        %v782 = vmax.f32 %v740, 1.0
        %v783 = vmax.f32 %v743, 1.0
        %v784 = vmax.f32 %v746, 1.0
        %v785 = vmax.f32 %v749, 1.0
        %v786 = vmax.f32 %v752, 1.0
        %v787 = vmax.f32 %v755, 1.0
        %v788 = vrcp.pop %v756
        %v789 = vmul.f32 %v756, %v788
        %v790 = vsub.f32 1.0, %v789
        %v791 = vmul.f32 %v788, %v790
        %v792 = vadd.f32 %v788, %v791
        %vm793 = vweird.f32 %v756
        %vm794 = vweird.f32 %v788
        %vm795 = vmor %vm793, %vm794
        %v796 = vsel %vm795, %v788, %v792
        %v797 = vand.u32 2147483647, %v756
        %vm798 = vcmp.eq.f32.partialorder %v797, 8.507059e+37
        %v799 = vand.u32 %v756, 2147483648
        %v800 = vor.u32 1.1754944e-38, %v799
        %v801 = vsel %vm798, %v800, %v796
        %v802 = vmul.f32 1.0, %v801
        %v803 = vrcp.pop %v757
        %v804 = vmul.f32 %v757, %v803
        %v805 = vsub.f32 1.0, %v804
        %v806 = vmul.f32 %v803, %v805
        %v807 = vadd.f32 %v803, %v806
        %vm808 = vweird.f32 %v757
        %vm809 = vweird.f32 %v803
        %vm810 = vmor %vm808, %vm809
        %v811 = vsel %vm810, %v803, %v807
        %v812 = vand.u32 2147483647, %v757
        %vm813 = vcmp.eq.f32.partialorder %v812, 8.507059e+37
        %v814 = vand.u32 %v757, 2147483648
        %v815 = vor.u32 1.1754944e-38, %v814
        %v816 = vsel %vm813, %v815, %v811
        %v817 = vmul.f32 1.0, %v816
        %v818 = vrcp.pop %v758
        %v819 = vmul.f32 %v758, %v818
        %v820 = vsub.f32 1.0, %v819
        %v821 = vmul.f32 %v818, %v820
        %v822 = vadd.f32 %v818, %v821
        %vm823 = vweird.f32 %v758
        %vm824 = vweird.f32 %v818
        %vm825 = vmor %vm823, %vm824
        %v826 = vsel %vm825, %v818, %v822
        %v827 = vand.u32 2147483647, %v758
        %vm828 = vcmp.eq.f32.partialorder %v827, 8.507059e+37
        %v829 = vand.u32 %v758, 2147483648
        %v830 = vor.u32 1.1754944e-38, %v829
        %v831 = vsel %vm828, %v830, %v826
        %v832 = vmul.f32 1.0, %v831
        %v833 = vrcp.pop %v759
        %v834 = vmul.f32 %v759, %v833
        %v835 = vsub.f32 1.0, %v834
        %v836 = vmul.f32 %v833, %v835
        %v837 = vadd.f32 %v833, %v836
        %vm838 = vweird.f32 %v759
        %vm839 = vweird.f32 %v833
        %vm840 = vmor %vm838, %vm839
        %v841 = vsel %vm840, %v833, %v837
        %v842 = vand.u32 2147483647, %v759
        %vm843 = vcmp.eq.f32.partialorder %v842, 8.507059e+37
        %v844 = vand.u32 %v759, 2147483648
        %v845 = vor.u32 1.1754944e-38, %v844
        %v846 = vsel %vm843, %v845, %v841
        %v847 = vmul.f32 1.0, %v846
        %v848 = vrcp.pop %v760
        %v849 = vmul.f32 %v760, %v848
        %v850 = vsub.f32 1.0, %v849
        %v851 = vmul.f32 %v848, %v850
        %v852 = vadd.f32 %v848, %v851
        %vm853 = vweird.f32 %v760
        %vm854 = vweird.f32 %v848
        %vm855 = vmor %vm853, %vm854
        %v856 = vsel %vm855, %v848, %v852
        %v857 = vand.u32 2147483647, %v760
        %vm858 = vcmp.eq.f32.partialorder %v857, 8.507059e+37
        %v859 = vand.u32 %v760, 2147483648
        %v860 = vor.u32 1.1754944e-38, %v859
        %v861 = vsel %vm858, %v860, %v856
        %v862 = vmul.f32 1.0, %v861
        %v863 = vrcp.pop %v761
        %v864 = vmul.f32 %v761, %v863
        %v865 = vsub.f32 1.0, %v864
        %v866 = vmul.f32 %v863, %v865
        %v867 = vadd.f32 %v863, %v866
        %vm868 = vweird.f32 %v761
        %vm869 = vweird.f32 %v863
        %vm870 = vmor %vm868, %vm869
        %v871 = vsel %vm870, %v863, %v867
        %v872 = vand.u32 2147483647, %v761
        %vm873 = vcmp.eq.f32.partialorder %v872, 8.507059e+37
        %v874 = vand.u32 %v761, 2147483648
        %v875 = vor.u32 1.1754944e-38, %v874
        %v876 = vsel %vm873, %v875, %v871
        %v877 = vmul.f32 1.0, %v876
        %v878 = vrcp.pop %v762
        %v879 = vmul.f32 %v762, %v878
        %v880 = vsub.f32 1.0, %v879
        %v881 = vmul.f32 %v878, %v880
        %v882 = vadd.f32 %v878, %v881
        %vm883 = vweird.f32 %v762
        %vm884 = vweird.f32 %v878
        %vm885 = vmor %vm883, %vm884
        %v886 = vsel %vm885, %v878, %v882
        %v887 = vand.u32 2147483647, %v762
        %vm888 = vcmp.eq.f32.partialorder %v887, 8.507059e+37
        %v889 = vand.u32 %v762, 2147483648
        %v890 = vor.u32 1.1754944e-38, %v889
        %v891 = vsel %vm888, %v890, %v886
        %v892 = vmul.f32 1.0, %v891
        %v893 = vrcp.pop %v763
        %v894 = vmul.f32 %v763, %v893
        %v895 = vsub.f32 1.0, %v894
        %v896 = vmul.f32 %v893, %v895
        %v897 = vadd.f32 %v893, %v896
        %vm898 = vweird.f32 %v763
        %vm899 = vweird.f32 %v893
        %vm900 = vmor %vm898, %vm899
        %v901 = vsel %vm900, %v893, %v897
        %v902 = vand.u32 2147483647, %v763
        %vm903 = vcmp.eq.f32.partialorder %v902, 8.507059e+37
        %v904 = vand.u32 %v763, 2147483648
        %v905 = vor.u32 1.1754944e-38, %v904
        %v906 = vsel %vm903, %v905, %v901
        %v907 = vmul.f32 1.0, %v906
        %v908 = vrcp.pop %v764
        %v909 = vmul.f32 %v764, %v908
        %v910 = vsub.f32 1.0, %v909
        %v911 = vmul.f32 %v908, %v910
        %v912 = vadd.f32 %v908, %v911
        %vm913 = vweird.f32 %v764
        %vm914 = vweird.f32 %v908
        %vm915 = vmor %vm913, %vm914
        %v916 = vsel %vm915, %v908, %v912
        %v917 = vand.u32 2147483647, %v764
        %vm918 = vcmp.eq.f32.partialorder %v917, 8.507059e+37
        %v919 = vand.u32 %v764, 2147483648
        %v920 = vor.u32 1.1754944e-38, %v919
        %v921 = vsel %vm918, %v920, %v916
        %v922 = vmul.f32 1.0, %v921
        %v923 = vrcp.pop %v765
        %v924 = vmul.f32 %v765, %v923
        %v925 = vsub.f32 1.0, %v924
        %v926 = vmul.f32 %v923, %v925
        %v927 = vadd.f32 %v923, %v926
        %vm928 = vweird.f32 %v765
        %vm929 = vweird.f32 %v923
        %vm930 = vmor %vm928, %vm929
        %v931 = vsel %vm930, %v923, %v927
        %v932 = vand.u32 2147483647, %v765
        %vm933 = vcmp.eq.f32.partialorder %v932, 8.507059e+37
        %v934 = vand.u32 %v765, 2147483648
        %v935 = vor.u32 1.1754944e-38, %v934
        %v936 = vsel %vm933, %v935, %v931
        %v937 = vmul.f32 1.0, %v936
        %v938 = vrcp.pop %v766
        %v939 = vmul.f32 %v766, %v938
        %v940 = vsub.f32 1.0, %v939
        %v941 = vmul.f32 %v938, %v940
        %v942 = vadd.f32 %v938, %v941
        %vm943 = vweird.f32 %v766
        %vm944 = vweird.f32 %v938
        %vm945 = vmor %vm943, %vm944
        %v946 = vsel %vm945, %v938, %v942
        %v947 = vand.u32 2147483647, %v766
        %vm948 = vcmp.eq.f32.partialorder %v947, 8.507059e+37
        %v949 = vand.u32 %v766, 2147483648
        %v950 = vor.u32 1.1754944e-38, %v949
        %v951 = vsel %vm948, %v950, %v946
        %v952 = vmul.f32 1.0, %v951
        %v953 = vrcp.pop %v767
        %v954 = vmul.f32 %v767, %v953
        %v955 = vsub.f32 1.0, %v954
        %v956 = vmul.f32 %v953, %v955
        %v957 = vadd.f32 %v953, %v956
        %vm958 = vweird.f32 %v767
        %vm959 = vweird.f32 %v953
        %vm960 = vmor %vm958, %vm959
        %v961 = vsel %vm960, %v953, %v957
        %v962 = vand.u32 2147483647, %v767
        %vm963 = vcmp.eq.f32.partialorder %v962, 8.507059e+37
        %v964 = vand.u32 %v767, 2147483648
        %v965 = vor.u32 1.1754944e-38, %v964
        %v966 = vsel %vm963, %v965, %v961
        %v967 = vmul.f32 1.0, %v966
        %v968 = vrcp.pop %v768
        %v969 = vmul.f32 %v768, %v968
        %v970 = vsub.f32 1.0, %v969
        %v971 = vmul.f32 %v968, %v970
        %v972 = vadd.f32 %v968, %v971
        %vm973 = vweird.f32 %v768
        %vm974 = vweird.f32 %v968
        %vm975 = vmor %vm973, %vm974
        %v976 = vsel %vm975, %v968, %v972
        %v977 = vand.u32 2147483647, %v768
        %vm978 = vcmp.eq.f32.partialorder %v977, 8.507059e+37
        %v979 = vand.u32 %v768, 2147483648
        %v980 = vor.u32 1.1754944e-38, %v979
        %v981 = vsel %vm978, %v980, %v976
        %v982 = vmul.f32 1.0, %v981
        %v983 = vrcp.pop %v769
        %v984 = vmul.f32 %v769, %v983
        %v985 = vsub.f32 1.0, %v984
        %v986 = vmul.f32 %v983, %v985
        %v987 = vadd.f32 %v983, %v986
        %vm988 = vweird.f32 %v769
        %vm989 = vweird.f32 %v983
        %vm990 = vmor %vm988, %vm989
        %v991 = vsel %vm990, %v983, %v987
        %v992 = vand.u32 2147483647, %v769
        %vm993 = vcmp.eq.f32.partialorder %v992, 8.507059e+37
        %v994 = vand.u32 %v769, 2147483648
        %v995 = vor.u32 1.1754944e-38, %v994
        %v996 = vsel %vm993, %v995, %v991
        %v997 = vmul.f32 1.0, %v996
        %v998 = vrcp.pop %v770
        %v999 = vmul.f32 %v770, %v998
        %v1000 = vsub.f32 1.0, %v999
        %v1001 = vmul.f32 %v998, %v1000
        %v1002 = vadd.f32 %v998, %v1001
        %vm1003 = vweird.f32 %v770
        %vm1004 = vweird.f32 %v998
        %vm1005 = vmor %vm1003, %vm1004
        %v1006 = vsel %vm1005, %v998, %v1002
        %v1007 = vand.u32 2147483647, %v770
        %vm1008 = vcmp.eq.f32.partialorder %v1007, 8.507059e+37
        %v1009 = vand.u32 %v770, 2147483648
        %v1010 = vor.u32 1.1754944e-38, %v1009
        %v1011 = vsel %vm1008, %v1010, %v1006
        %v1012 = vmul.f32 1.0, %v1011
        %v1013 = vrcp.pop %v771
        %v1014 = vmul.f32 %v771, %v1013
        %v1015 = vsub.f32 1.0, %v1014
        %v1016 = vmul.f32 %v1013, %v1015
        %v1017 = vadd.f32 %v1013, %v1016
        %vm1018 = vweird.f32 %v771
        %vm1019 = vweird.f32 %v1013
        %vm1020 = vmor %vm1018, %vm1019
        %v1021 = vsel %vm1020, %v1013, %v1017
        %v1022 = vand.u32 2147483647, %v771
        %vm1023 = vcmp.eq.f32.partialorder %v1022, 8.507059e+37
        %v1024 = vand.u32 %v771, 2147483648
        %v1025 = vor.u32 1.1754944e-38, %v1024
        %v1026 = vsel %vm1023, %v1025, %v1021
        %v1027 = vmul.f32 1.0, %v1026
        %v1028 = vrcp.pop %v772
        %v1029 = vmul.f32 %v772, %v1028
        %v1030 = vsub.f32 1.0, %v1029
        %v1031 = vmul.f32 %v1028, %v1030
        %v1032 = vadd.f32 %v1028, %v1031
        %vm1033 = vweird.f32 %v772
        %vm1034 = vweird.f32 %v1028
        %vm1035 = vmor %vm1033, %vm1034
        %v1036 = vsel %vm1035, %v1028, %v1032
        %v1037 = vand.u32 2147483647, %v772
        %vm1038 = vcmp.eq.f32.partialorder %v1037, 8.507059e+37
        %v1039 = vand.u32 %v772, 2147483648
        %v1040 = vor.u32 1.1754944e-38, %v1039
        %v1041 = vsel %vm1038, %v1040, %v1036
        %v1042 = vmul.f32 1.0, %v1041
        %v1043 = vrcp.pop %v773
        %v1044 = vmul.f32 %v773, %v1043
        %v1045 = vsub.f32 1.0, %v1044
        %v1046 = vmul.f32 %v1043, %v1045
        %v1047 = vadd.f32 %v1043, %v1046
        %vm1048 = vweird.f32 %v773
        %vm1049 = vweird.f32 %v1043
        %vm1050 = vmor %vm1048, %vm1049
        %v1051 = vsel %vm1050, %v1043, %v1047
        %v1052 = vand.u32 2147483647, %v773
        %vm1053 = vcmp.eq.f32.partialorder %v1052, 8.507059e+37
        %v1054 = vand.u32 %v773, 2147483648
        %v1055 = vor.u32 1.1754944e-38, %v1054
        %v1056 = vsel %vm1053, %v1055, %v1051
        %v1057 = vmul.f32 1.0, %v1056
        %v1058 = vrcp.pop %v774
        %v1059 = vmul.f32 %v774, %v1058
        %v1060 = vsub.f32 1.0, %v1059
        %v1061 = vmul.f32 %v1058, %v1060
        %v1062 = vadd.f32 %v1058, %v1061
        %vm1063 = vweird.f32 %v774
        %vm1064 = vweird.f32 %v1058
        %vm1065 = vmor %vm1063, %vm1064
        %v1066 = vsel %vm1065, %v1058, %v1062
        %v1067 = vand.u32 2147483647, %v774
        %vm1068 = vcmp.eq.f32.partialorder %v1067, 8.507059e+37
        %v1069 = vand.u32 %v774, 2147483648
        %v1070 = vor.u32 1.1754944e-38, %v1069
        %v1071 = vsel %vm1068, %v1070, %v1066
        %v1072 = vmul.f32 1.0, %v1071
        %v1073 = vrcp.pop %v775
        %v1074 = vmul.f32 %v775, %v1073
        %v1075 = vsub.f32 1.0, %v1074
        %v1076 = vmul.f32 %v1073, %v1075
        %v1077 = vadd.f32 %v1073, %v1076
        %vm1078 = vweird.f32 %v775
        %vm1079 = vweird.f32 %v1073
        %vm1080 = vmor %vm1078, %vm1079
        %v1081 = vsel %vm1080, %v1073, %v1077
        %v1082 = vand.u32 2147483647, %v775
        %vm1083 = vcmp.eq.f32.partialorder %v1082, 8.507059e+37
        %v1084 = vand.u32 %v775, 2147483648
        %v1085 = vor.u32 1.1754944e-38, %v1084
        %v1086 = vsel %vm1083, %v1085, %v1081
        %v1087 = vmul.f32 1.0, %v1086
        %v1088 = vrcp.pop %v776
        %v1089 = vmul.f32 %v776, %v1088
        %v1090 = vsub.f32 1.0, %v1089
        %v1091 = vmul.f32 %v1088, %v1090
        %v1092 = vadd.f32 %v1088, %v1091
        %vm1093 = vweird.f32 %v776
        %vm1094 = vweird.f32 %v1088
        %vm1095 = vmor %vm1093, %vm1094
        %v1096 = vsel %vm1095, %v1088, %v1092
        %v1097 = vand.u32 2147483647, %v776
        %vm1098 = vcmp.eq.f32.partialorder %v1097, 8.507059e+37
        %v1099 = vand.u32 %v776, 2147483648
        %v1100 = vor.u32 1.1754944e-38, %v1099
        %v1101 = vsel %vm1098, %v1100, %v1096
        %v1102 = vmul.f32 1.0, %v1101
        %v1103 = vrcp.pop %v777
        %v1104 = vmul.f32 %v777, %v1103
        %v1105 = vsub.f32 1.0, %v1104
        %v1106 = vmul.f32 %v1103, %v1105
        %v1107 = vadd.f32 %v1103, %v1106
        %vm1108 = vweird.f32 %v777
        %vm1109 = vweird.f32 %v1103
        %vm1110 = vmor %vm1108, %vm1109
        %v1111 = vsel %vm1110, %v1103, %v1107
        %v1112 = vand.u32 2147483647, %v777
        %vm1113 = vcmp.eq.f32.partialorder %v1112, 8.507059e+37
        %v1114 = vand.u32 %v777, 2147483648
        %v1115 = vor.u32 1.1754944e-38, %v1114
        %v1116 = vsel %vm1113, %v1115, %v1111
        %v1117 = vmul.f32 1.0, %v1116
        %v1118 = vrcp.pop %v778
        %v1119 = vmul.f32 %v778, %v1118
        %v1120 = vsub.f32 1.0, %v1119
        %v1121 = vmul.f32 %v1118, %v1120
        %v1122 = vadd.f32 %v1118, %v1121
        %vm1123 = vweird.f32 %v778
        %vm1124 = vweird.f32 %v1118
        %vm1125 = vmor %vm1123, %vm1124
        %v1126 = vsel %vm1125, %v1118, %v1122
        %v1127 = vand.u32 2147483647, %v778
        %vm1128 = vcmp.eq.f32.partialorder %v1127, 8.507059e+37
        %v1129 = vand.u32 %v778, 2147483648
        %v1130 = vor.u32 1.1754944e-38, %v1129
        %v1131 = vsel %vm1128, %v1130, %v1126
        %v1132 = vmul.f32 1.0, %v1131
        %v1133 = vrcp.pop %v779
        %v1134 = vmul.f32 %v779, %v1133
        %v1135 = vsub.f32 1.0, %v1134
        %v1136 = vmul.f32 %v1133, %v1135
        %v1137 = vadd.f32 %v1133, %v1136
        %vm1138 = vweird.f32 %v779
        %vm1139 = vweird.f32 %v1133
        %vm1140 = vmor %vm1138, %vm1139
        %v1141 = vsel %vm1140, %v1133, %v1137
        %v1142 = vand.u32 2147483647, %v779
        %vm1143 = vcmp.eq.f32.partialorder %v1142, 8.507059e+37
        %v1144 = vand.u32 %v779, 2147483648
        %v1145 = vor.u32 1.1754944e-38, %v1144
        %v1146 = vsel %vm1143, %v1145, %v1141
        %v1147 = vmul.f32 1.0, %v1146
        %v1148 = vrcp.pop %v780
        %v1149 = vmul.f32 %v780, %v1148
        %v1150 = vsub.f32 1.0, %v1149
        %v1151 = vmul.f32 %v1148, %v1150
        %v1152 = vadd.f32 %v1148, %v1151
        %vm1153 = vweird.f32 %v780
        %vm1154 = vweird.f32 %v1148
        %vm1155 = vmor %vm1153, %vm1154
        %v1156 = vsel %vm1155, %v1148, %v1152
        %v1157 = vand.u32 2147483647, %v780
        %vm1158 = vcmp.eq.f32.partialorder %v1157, 8.507059e+37
        %v1159 = vand.u32 %v780, 2147483648
        %v1160 = vor.u32 1.1754944e-38, %v1159
        %v1161 = vsel %vm1158, %v1160, %v1156
        %v1162 = vmul.f32 1.0, %v1161
        %v1163 = vrcp.pop %v781
        %v1164 = vmul.f32 %v781, %v1163
        %v1165 = vsub.f32 1.0, %v1164
        %v1166 = vmul.f32 %v1163, %v1165
        %v1167 = vadd.f32 %v1163, %v1166
        %vm1168 = vweird.f32 %v781
        %vm1169 = vweird.f32 %v1163
        %vm1170 = vmor %vm1168, %vm1169
        %v1171 = vsel %vm1170, %v1163, %v1167
        %v1172 = vand.u32 2147483647, %v781
        %vm1173 = vcmp.eq.f32.partialorder %v1172, 8.507059e+37
        %v1174 = vand.u32 %v781, 2147483648
        %v1175 = vor.u32 1.1754944e-38, %v1174
        %v1176 = vsel %vm1173, %v1175, %v1171
        %v1177 = vmul.f32 1.0, %v1176
        %v1178 = vrcp.pop %v782
        %v1179 = vmul.f32 %v782, %v1178
        %v1180 = vsub.f32 1.0, %v1179
        %v1181 = vmul.f32 %v1178, %v1180
        %v1182 = vadd.f32 %v1178, %v1181
        %vm1183 = vweird.f32 %v782
        %vm1184 = vweird.f32 %v1178
        %vm1185 = vmor %vm1183, %vm1184
        %v1186 = vsel %vm1185, %v1178, %v1182
        %v1187 = vand.u32 2147483647, %v782
        %vm1188 = vcmp.eq.f32.partialorder %v1187, 8.507059e+37
        %v1189 = vand.u32 %v782, 2147483648
        %v1190 = vor.u32 1.1754944e-38, %v1189
        %v1191 = vsel %vm1188, %v1190, %v1186
        %v1192 = vmul.f32 1.0, %v1191
        %v1193 = vrcp.pop %v783
        %v1194 = vmul.f32 %v783, %v1193
        %v1195 = vsub.f32 1.0, %v1194
        %v1196 = vmul.f32 %v1193, %v1195
        %v1197 = vadd.f32 %v1193, %v1196
        %vm1198 = vweird.f32 %v783
        %vm1199 = vweird.f32 %v1193
        %vm1200 = vmor %vm1198, %vm1199
        %v1201 = vsel %vm1200, %v1193, %v1197
        %v1202 = vand.u32 2147483647, %v783
        %vm1203 = vcmp.eq.f32.partialorder %v1202, 8.507059e+37
        %v1204 = vand.u32 %v783, 2147483648
        %v1205 = vor.u32 1.1754944e-38, %v1204
        %v1206 = vsel %vm1203, %v1205, %v1201
        %v1207 = vmul.f32 1.0, %v1206
        %v1208 = vrcp.pop %v784
        %v1209 = vmul.f32 %v784, %v1208
        %v1210 = vsub.f32 1.0, %v1209
        %v1211 = vmul.f32 %v1208, %v1210
        %v1212 = vadd.f32 %v1208, %v1211
        %vm1213 = vweird.f32 %v784
        %vm1214 = vweird.f32 %v1208
        %vm1215 = vmor %vm1213, %vm1214
        %v1216 = vsel %vm1215, %v1208, %v1212
        %v1217 = vand.u32 2147483647, %v784
        %vm1218 = vcmp.eq.f32.partialorder %v1217, 8.507059e+37
        %v1219 = vand.u32 %v784, 2147483648
        %v1220 = vor.u32 1.1754944e-38, %v1219
        %v1221 = vsel %vm1218, %v1220, %v1216
        %v1222 = vmul.f32 1.0, %v1221
        %v1223 = vrcp.pop %v785
        %v1224 = vmul.f32 %v785, %v1223
        %v1225 = vsub.f32 1.0, %v1224
        %v1226 = vmul.f32 %v1223, %v1225
        %v1227 = vadd.f32 %v1223, %v1226
        %vm1228 = vweird.f32 %v785
        %vm1229 = vweird.f32 %v1223
        %vm1230 = vmor %vm1228, %vm1229
        %v1231 = vsel %vm1230, %v1223, %v1227
        %v1232 = vand.u32 2147483647, %v785
        %vm1233 = vcmp.eq.f32.partialorder %v1232, 8.507059e+37
        %v1234 = vand.u32 %v785, 2147483648
        %v1235 = vor.u32 1.1754944e-38, %v1234
        %v1236 = vsel %vm1233, %v1235, %v1231
        %v1237 = vmul.f32 1.0, %v1236
        %v1238 = vrcp.pop %v786
        %v1239 = vmul.f32 %v786, %v1238
        %v1240 = vsub.f32 1.0, %v1239
        %v1241 = vmul.f32 %v1238, %v1240
        %v1242 = vadd.f32 %v1238, %v1241
        %vm1243 = vweird.f32 %v786
        %vm1244 = vweird.f32 %v1238
        %vm1245 = vmor %vm1243, %vm1244
        %v1246 = vsel %vm1245, %v1238, %v1242
        %v1247 = vand.u32 2147483647, %v786
        %vm1248 = vcmp.eq.f32.partialorder %v1247, 8.507059e+37
        %v1249 = vand.u32 %v786, 2147483648
        %v1250 = vor.u32 1.1754944e-38, %v1249
        %v1251 = vsel %vm1248, %v1250, %v1246
        %v1252 = vmul.f32 1.0, %v1251
        %v1253 = vrcp.pop %v787
        %v1254 = vmul.f32 %v787, %v1253
        %v1255 = vsub.f32 1.0, %v1254
        %v1256 = vmul.f32 %v1253, %v1255
        %v1257 = vadd.f32 %v1253, %v1256
        %vm1258 = vweird.f32 %v787
        %vm1259 = vweird.f32 %v1253
        %vm1260 = vmor %vm1258, %vm1259
        %v1261 = vsel %vm1260, %v1253, %v1257
        %v1262 = vand.u32 2147483647, %v787
        %vm1263 = vcmp.eq.f32.partialorder %v1262, 8.507059e+37
        %v1264 = vand.u32 %v787, 2147483648
        %v1265 = vor.u32 1.1754944e-38, %v1264
        %v1266 = vsel %vm1263, %v1265, %v1261
        %v1267 = vmul.f32 1.0, %v1266
        %1268 = vmatpush.msra.mxu0 0.0
        %1269 = vmatpush.msra.mxu0 0.0
        %1270 = vmatpush.msra.mxu0 0.0
        %1271 = vmatpush.msra.mxu0 0.0
        %1272 = vmatpush.msra.mxu0 0.0
        %1273 = vmatpush.msra.mxu0 0.0
        %1274 = vmatpush.msra.mxu0 0.0
        %1275 = vmatpush.msra.mxu0 0.0
        %1276 = vmatpush.msra.mxu0 0.0
        %1277 = vmatpush.msra.mxu0 0.0
        %1278 = vmatpush.msra.mxu0 0.0
        %1279 = vmatpush.msra.mxu0 0.0
        %1280 = vmatpush.msra.mxu0 0.0
        %1281 = vmatpush.msra.mxu0 0.0
        %1282 = vmatpush.msra.mxu0 %v342
        %1283 = vmatpush.msra.mxu0 %v339
        %1284 = vmatmul.f32.gmra.mxu0 %v355
        %v1285 = vpop.f32.mrf.mxu0
        %v1286 = vadd.f32 0.0, %v1285
        %1287 = vmatmul.f32.gmra.mxu0 %v358
        %v1288 = vpop.f32.mrf.mxu0
        %v1289 = vadd.f32 0.0, %v1288
        %1290 = vmatmul.f32.gmra.mxu0 %v361
        %v1291 = vpop.f32.mrf.mxu0
        %v1292 = vadd.f32 0.0, %v1291
        %1293 = vmatmul.f32.gmra.mxu0 %v364
        %v1294 = vpop.f32.mrf.mxu0
        %v1295 = vadd.f32 0.0, %v1294
        %1296 = vmatmul.f32.gmra.mxu0 %v367
        %v1297 = vpop.f32.mrf.mxu0
        %v1298 = vadd.f32 0.0, %v1297
        %1299 = vmatmul.f32.gmra.mxu0 %v370
        %v1300 = vpop.f32.mrf.mxu0
        %v1301 = vadd.f32 0.0, %v1300
        %1302 = vmatmul.f32.gmra.mxu0 %v373
        %v1303 = vpop.f32.mrf.mxu0
        %v1304 = vadd.f32 0.0, %v1303
        %1305 = vmatmul.f32.gmra.mxu0 %v376
        %v1306 = vpop.f32.mrf.mxu0
        %v1307 = vadd.f32 0.0, %v1306
        %1308 = vmatmul.f32.gmra.mxu0 %v379
        %v1309 = vpop.f32.mrf.mxu0
        %v1310 = vadd.f32 0.0, %v1309
        %1311 = vmatmul.f32.gmra.mxu0 %v382
        %v1312 = vpop.f32.mrf.mxu0
        %v1313 = vadd.f32 0.0, %v1312
        %1314 = vmatmul.f32.gmra.mxu0 %v385
        %v1315 = vpop.f32.mrf.mxu0
        %v1316 = vadd.f32 0.0, %v1315
        %1317 = vmatmul.f32.gmra.mxu0 %v388
        %v1318 = vpop.f32.mrf.mxu0
        %v1319 = vadd.f32 0.0, %v1318
        %1320 = vmatmul.f32.gmra.mxu0 %v391
        %v1321 = vpop.f32.mrf.mxu0
        %v1322 = vadd.f32 0.0, %v1321
        %1323 = vmatmul.f32.gmra.mxu0 %v394
        %v1324 = vpop.f32.mrf.mxu0
        %v1325 = vadd.f32 0.0, %v1324
        %1326 = vmatmul.f32.gmra.mxu0 %v397
        %v1327 = vpop.f32.mrf.mxu0
        %v1328 = vadd.f32 0.0, %v1327
        %1329 = vmatmul.f32.gmra.mxu0 %v400
        %v1330 = vpop.f32.mrf.mxu0
        %v1331 = vadd.f32 0.0, %v1330
        %1332 = vmatmul.f32.gmra.mxu0 %v403
        %v1333 = vpop.f32.mrf.mxu0
        %v1334 = vadd.f32 0.0, %v1333
        %1335 = vmatmul.f32.gmra.mxu0 %v406
        %v1336 = vpop.f32.mrf.mxu0
        %v1337 = vadd.f32 0.0, %v1336
        %1338 = vmatmul.f32.gmra.mxu0 %v409
        %v1339 = vpop.f32.mrf.mxu0
        %v1340 = vadd.f32 0.0, %v1339
        %1341 = vmatmul.f32.gmra.mxu0 %v412
        %v1342 = vpop.f32.mrf.mxu0
        %v1343 = vadd.f32 0.0, %v1342
        %1344 = vmatmul.f32.gmra.mxu0 %v415
        %v1345 = vpop.f32.mrf.mxu0
        %v1346 = vadd.f32 0.0, %v1345
        %1347 = vmatmul.f32.gmra.mxu0 %v418
        %v1348 = vpop.f32.mrf.mxu0
        %v1349 = vadd.f32 0.0, %v1348
        %1350 = vmatmul.f32.gmra.mxu0 %v421
        %v1351 = vpop.f32.mrf.mxu0
        %v1352 = vadd.f32 0.0, %v1351
        %1353 = vmatmul.f32.gmra.mxu0 %v424
        %v1354 = vpop.f32.mrf.mxu0
        %v1355 = vadd.f32 0.0, %v1354
        %1356 = vmatmul.f32.gmra.mxu0 %v427
        %v1357 = vpop.f32.mrf.mxu0
        %v1358 = vadd.f32 0.0, %v1357
        %1359 = vmatmul.f32.gmra.mxu0 %v430
        %v1360 = vpop.f32.mrf.mxu0
        %v1361 = vadd.f32 0.0, %v1360
        %1362 = vmatmul.f32.gmra.mxu0 %v433
        %v1363 = vpop.f32.mrf.mxu0
        %v1364 = vadd.f32 0.0, %v1363
        %1365 = vmatmul.f32.gmra.mxu0 %v436
        %v1366 = vpop.f32.mrf.mxu0
        %v1367 = vadd.f32 0.0, %v1366
        %1368 = vmatmul.f32.gmra.mxu0 %v439
        %v1369 = vpop.f32.mrf.mxu0
        %v1370 = vadd.f32 0.0, %v1369
        %1371 = vmatmul.f32.gmra.mxu0 %v442
        %v1372 = vpop.f32.mrf.mxu0
        %v1373 = vadd.f32 0.0, %v1372
        %1374 = vmatmul.f32.gmra.mxu0 %v445
        %v1375 = vpop.f32.mrf.mxu0
        %v1376 = vadd.f32 0.0, %v1375
        %1377 = vmatmul.f32.gmra.mxu0 %v448
        %v1378 = vpop.f32.mrf.mxu0
        %v1379 = vadd.f32 0.0, %v1378
        %1380 = vdwg.mxu0
        %1381 = vmatpush.msra.mxu0 0.0
        %1382 = vmatpush.msra.mxu0 0.0
        %1383 = vmatpush.msra.mxu0 0.0
        %1384 = vmatpush.msra.mxu0 0.0
        %1385 = vmatpush.msra.mxu0 0.0
        %1386 = vmatpush.msra.mxu0 0.0
        %1387 = vmatpush.msra.mxu0 0.0
        %1388 = vmatpush.msra.mxu0 0.0
        %1389 = vmatpush.msra.mxu0 0.0
        %1390 = vmatpush.msra.mxu0 0.0
        %1391 = vmatpush.msra.mxu0 0.0
        %1392 = vmatpush.msra.mxu0 0.0
        %1393 = vmatpush.msra.mxu0 0.0
        %1394 = vmatpush.msra.mxu0 0.0
        %1395 = vmatpush.msra.mxu0 %v343
        %1396 = vmatpush.msra.mxu0 %v340
        %1397 = vmatmul.f32.gmra.mxu0 %v355
        %v1398 = vpop.f32.mrf.mxu0
        %v1399 = vadd.f32 0.0, %v1398
        %1400 = vmatmul.f32.gmra.mxu0 %v358
        %v1401 = vpop.f32.mrf.mxu0
        %v1402 = vadd.f32 0.0, %v1401
        %1403 = vmatmul.f32.gmra.mxu0 %v361
        %v1404 = vpop.f32.mrf.mxu0
        %v1405 = vadd.f32 0.0, %v1404
        %1406 = vmatmul.f32.gmra.mxu0 %v364
        %v1407 = vpop.f32.mrf.mxu0
        %v1408 = vadd.f32 0.0, %v1407
        %1409 = vmatmul.f32.gmra.mxu0 %v367
        %v1410 = vpop.f32.mrf.mxu0
        %v1411 = vadd.f32 0.0, %v1410
        %1412 = vmatmul.f32.gmra.mxu0 %v370
        %v1413 = vpop.f32.mrf.mxu0
        %v1414 = vadd.f32 0.0, %v1413
        %1415 = vmatmul.f32.gmra.mxu0 %v373
        %v1416 = vpop.f32.mrf.mxu0
        %v1417 = vadd.f32 0.0, %v1416
        %1418 = vmatmul.f32.gmra.mxu0 %v376
        %v1419 = vpop.f32.mrf.mxu0
        %v1420 = vadd.f32 0.0, %v1419
        %1421 = vmatmul.f32.gmra.mxu0 %v379
        %v1422 = vpop.f32.mrf.mxu0
        %v1423 = vadd.f32 0.0, %v1422
        %1424 = vmatmul.f32.gmra.mxu0 %v382
        %v1425 = vpop.f32.mrf.mxu0
        %v1426 = vadd.f32 0.0, %v1425
        %1427 = vmatmul.f32.gmra.mxu0 %v385
        %v1428 = vpop.f32.mrf.mxu0
        %v1429 = vadd.f32 0.0, %v1428
        %1430 = vmatmul.f32.gmra.mxu0 %v388
        %v1431 = vpop.f32.mrf.mxu0
        %v1432 = vadd.f32 0.0, %v1431
        %1433 = vmatmul.f32.gmra.mxu0 %v391
        %v1434 = vpop.f32.mrf.mxu0
        %v1435 = vadd.f32 0.0, %v1434
        %1436 = vmatmul.f32.gmra.mxu0 %v394
        %v1437 = vpop.f32.mrf.mxu0
        %v1438 = vadd.f32 0.0, %v1437
        %1439 = vmatmul.f32.gmra.mxu0 %v397
        %v1440 = vpop.f32.mrf.mxu0
        %v1441 = vadd.f32 0.0, %v1440
        %1442 = vmatmul.f32.gmra.mxu0 %v400
        %v1443 = vpop.f32.mrf.mxu0
        %v1444 = vadd.f32 0.0, %v1443
        %1445 = vmatmul.f32.gmra.mxu0 %v403
        %v1446 = vpop.f32.mrf.mxu0
        %v1447 = vadd.f32 0.0, %v1446
        %1448 = vmatmul.f32.gmra.mxu0 %v406
        %v1449 = vpop.f32.mrf.mxu0
        %v1450 = vadd.f32 0.0, %v1449
        %1451 = vmatmul.f32.gmra.mxu0 %v409
        %v1452 = vpop.f32.mrf.mxu0
        %v1453 = vadd.f32 0.0, %v1452
        %1454 = vmatmul.f32.gmra.mxu0 %v412
        %v1455 = vpop.f32.mrf.mxu0
        %v1456 = vadd.f32 0.0, %v1455
        %1457 = vmatmul.f32.gmra.mxu0 %v415
        %v1458 = vpop.f32.mrf.mxu0
        %v1459 = vadd.f32 0.0, %v1458
        %1460 = vmatmul.f32.gmra.mxu0 %v418
        %v1461 = vpop.f32.mrf.mxu0
        %v1462 = vadd.f32 0.0, %v1461
        %1463 = vmatmul.f32.gmra.mxu0 %v421
        %v1464 = vpop.f32.mrf.mxu0
        %v1465 = vadd.f32 0.0, %v1464
        %1466 = vmatmul.f32.gmra.mxu0 %v424
        %v1467 = vpop.f32.mrf.mxu0
        %v1468 = vadd.f32 0.0, %v1467
        %1469 = vmatmul.f32.gmra.mxu0 %v427
        %v1470 = vpop.f32.mrf.mxu0
        %v1471 = vadd.f32 0.0, %v1470
        %1472 = vmatmul.f32.gmra.mxu0 %v430
        %v1473 = vpop.f32.mrf.mxu0
        %v1474 = vadd.f32 0.0, %v1473
        %1475 = vmatmul.f32.gmra.mxu0 %v433
        %v1476 = vpop.f32.mrf.mxu0
        %v1477 = vadd.f32 0.0, %v1476
        %1478 = vmatmul.f32.gmra.mxu0 %v436
        %v1479 = vpop.f32.mrf.mxu0
        %v1480 = vadd.f32 0.0, %v1479
        %1481 = vmatmul.f32.gmra.mxu0 %v439
        %v1482 = vpop.f32.mrf.mxu0
        %v1483 = vadd.f32 0.0, %v1482
        %1484 = vmatmul.f32.gmra.mxu0 %v442
        %v1485 = vpop.f32.mrf.mxu0
        %v1486 = vadd.f32 0.0, %v1485
        %1487 = vmatmul.f32.gmra.mxu0 %v445
        %v1488 = vpop.f32.mrf.mxu0
        %v1489 = vadd.f32 0.0, %v1488
        %1490 = vmatmul.f32.gmra.mxu0 %v448
        %v1491 = vpop.f32.mrf.mxu0
        %v1492 = vadd.f32 0.0, %v1491
        %1493 = vdwg.mxu0
        %1494 = vmatpush.msra.mxu0 0.0
        %1495 = vmatpush.msra.mxu0 0.0
        %1496 = vmatpush.msra.mxu0 0.0
        %1497 = vmatpush.msra.mxu0 0.0
        %1498 = vmatpush.msra.mxu0 0.0
        %1499 = vmatpush.msra.mxu0 0.0
        %1500 = vmatpush.msra.mxu0 0.0
        %1501 = vmatpush.msra.mxu0 0.0
        %1502 = vmatpush.msra.mxu0 0.0
        %1503 = vmatpush.msra.mxu0 0.0
        %1504 = vmatpush.msra.mxu0 0.0
        %1505 = vmatpush.msra.mxu0 0.0
        %1506 = vmatpush.msra.mxu0 0.0
        %1507 = vmatpush.msra.mxu0 0.0
        %1508 = vmatpush.msra.mxu0 %v344
        %1509 = vmatpush.msra.mxu0 %v341
        %1510 = vmatmul.f32.gmra.mxu0 %v355
        %v1511 = vpop.f32.mrf.mxu0
        %v1512 = vadd.f32 0.0, %v1511
        %1513 = vmatmul.f32.gmra.mxu0 %v358
        %v1514 = vpop.f32.mrf.mxu0
        %v1515 = vadd.f32 0.0, %v1514
        %1516 = vmatmul.f32.gmra.mxu0 %v361
        %v1517 = vpop.f32.mrf.mxu0
        %v1518 = vadd.f32 0.0, %v1517
        %1519 = vmatmul.f32.gmra.mxu0 %v364
        %v1520 = vpop.f32.mrf.mxu0
        %v1521 = vadd.f32 0.0, %v1520
        %1522 = vmatmul.f32.gmra.mxu0 %v367
        %v1523 = vpop.f32.mrf.mxu0
        %v1524 = vadd.f32 0.0, %v1523
        %1525 = vmatmul.f32.gmra.mxu0 %v370
        %v1526 = vpop.f32.mrf.mxu0
        %v1527 = vadd.f32 0.0, %v1526
        %1528 = vmatmul.f32.gmra.mxu0 %v373
        %v1529 = vpop.f32.mrf.mxu0
        %v1530 = vadd.f32 0.0, %v1529
        %1531 = vmatmul.f32.gmra.mxu0 %v376
        %v1532 = vpop.f32.mrf.mxu0
        %v1533 = vadd.f32 0.0, %v1532
        %1534 = vmatmul.f32.gmra.mxu0 %v379
        %v1535 = vpop.f32.mrf.mxu0
        %v1536 = vadd.f32 0.0, %v1535
        %1537 = vmatmul.f32.gmra.mxu0 %v382
        %v1538 = vpop.f32.mrf.mxu0
        %v1539 = vadd.f32 0.0, %v1538
        %1540 = vmatmul.f32.gmra.mxu0 %v385
        %v1541 = vpop.f32.mrf.mxu0
        %v1542 = vadd.f32 0.0, %v1541
        %1543 = vmatmul.f32.gmra.mxu0 %v388
        %v1544 = vpop.f32.mrf.mxu0
        %v1545 = vadd.f32 0.0, %v1544
        %1546 = vmatmul.f32.gmra.mxu0 %v391
        %v1547 = vpop.f32.mrf.mxu0
        %v1548 = vadd.f32 0.0, %v1547
        %1549 = vmatmul.f32.gmra.mxu0 %v394
        %v1550 = vpop.f32.mrf.mxu0
        %v1551 = vadd.f32 0.0, %v1550
        %1552 = vmatmul.f32.gmra.mxu0 %v397
        %v1553 = vpop.f32.mrf.mxu0
        %v1554 = vadd.f32 0.0, %v1553
        %1555 = vmatmul.f32.gmra.mxu0 %v400
        %v1556 = vpop.f32.mrf.mxu0
        %v1557 = vadd.f32 0.0, %v1556
        %1558 = vmatmul.f32.gmra.mxu0 %v403
        %v1559 = vpop.f32.mrf.mxu0
        %v1560 = vadd.f32 0.0, %v1559
        %1561 = vmatmul.f32.gmra.mxu0 %v406
        %v1562 = vpop.f32.mrf.mxu0
        %v1563 = vadd.f32 0.0, %v1562
        %1564 = vmatmul.f32.gmra.mxu0 %v409
        %v1565 = vpop.f32.mrf.mxu0
        %v1566 = vadd.f32 0.0, %v1565
        %1567 = vmatmul.f32.gmra.mxu0 %v412
        %v1568 = vpop.f32.mrf.mxu0
        %v1569 = vadd.f32 0.0, %v1568
        %1570 = vmatmul.f32.gmra.mxu0 %v415
        %v1571 = vpop.f32.mrf.mxu0
        %v1572 = vadd.f32 0.0, %v1571
        %1573 = vmatmul.f32.gmra.mxu0 %v418
        %v1574 = vpop.f32.mrf.mxu0
        %v1575 = vadd.f32 0.0, %v1574
        %1576 = vmatmul.f32.gmra.mxu0 %v421
        %v1577 = vpop.f32.mrf.mxu0
        %v1578 = vadd.f32 0.0, %v1577
        %1579 = vmatmul.f32.gmra.mxu0 %v424
        %v1580 = vpop.f32.mrf.mxu0
        %v1581 = vadd.f32 0.0, %v1580
        %1582 = vmatmul.f32.gmra.mxu0 %v427
        %v1583 = vpop.f32.mrf.mxu0
        %v1584 = vadd.f32 0.0, %v1583
        %1585 = vmatmul.f32.gmra.mxu0 %v430
        %v1586 = vpop.f32.mrf.mxu0
        %v1587 = vadd.f32 0.0, %v1586
        %1588 = vmatmul.f32.gmra.mxu0 %v433
        %v1589 = vpop.f32.mrf.mxu0
        %v1590 = vadd.f32 0.0, %v1589
        %1591 = vmatmul.f32.gmra.mxu0 %v436
        %v1592 = vpop.f32.mrf.mxu0
        %v1593 = vadd.f32 0.0, %v1592
        %1594 = vmatmul.f32.gmra.mxu0 %v439
        %v1595 = vpop.f32.mrf.mxu0
        %v1596 = vadd.f32 0.0, %v1595
        %1597 = vmatmul.f32.gmra.mxu0 %v442
        %v1598 = vpop.f32.mrf.mxu0
        %v1599 = vadd.f32 0.0, %v1598
        %1600 = vmatmul.f32.gmra.mxu0 %v445
        %v1601 = vpop.f32.mrf.mxu0
        %v1602 = vadd.f32 0.0, %v1601
        %1603 = vmatmul.f32.gmra.mxu0 %v448
        %v1604 = vpop.f32.mrf.mxu0
        %v1605 = vadd.f32 0.0, %v1604
        %1606 = vdwg.mxu0
        %1607 = vmatpush.msra.mxu0 0.0
        %1608 = vmatpush.msra.mxu0 0.0
        %1609 = vmatpush.msra.mxu0 0.0
        %1610 = vmatpush.msra.mxu0 0.0
        %1611 = vmatpush.msra.mxu0 0.0
        %1612 = vmatpush.msra.mxu0 0.0
        %1613 = vmatpush.msra.mxu0 0.0
        %1614 = vmatpush.msra.mxu0 0.0
        %1615 = vmatpush.msra.mxu0 0.0
        %1616 = vmatpush.msra.mxu0 0.0
        %1617 = vmatpush.msra.mxu0 0.0
        %1618 = vmatpush.msra.mxu0 0.0
        %1619 = vmatpush.msra.mxu0 0.0
        %1620 = vmatpush.msra.mxu0 0.0
        %1621 = vmatpush.msra.mxu0 %v348
        %1622 = vmatpush.msra.mxu0 %v345
        %1623 = vmatmul.f32.gmra.mxu0 %v355
        %v1624 = vpop.f32.mrf.mxu0
        %v1625 = vadd.f32 0.0, %v1624
        %1626 = vmatmul.f32.gmra.mxu0 %v358
        %v1627 = vpop.f32.mrf.mxu0
        %v1628 = vadd.f32 0.0, %v1627
        %1629 = vmatmul.f32.gmra.mxu0 %v361
        %v1630 = vpop.f32.mrf.mxu0
        %v1631 = vadd.f32 0.0, %v1630
        %1632 = vmatmul.f32.gmra.mxu0 %v364
        %v1633 = vpop.f32.mrf.mxu0
        %v1634 = vadd.f32 0.0, %v1633
        %1635 = vmatmul.f32.gmra.mxu0 %v367
        %v1636 = vpop.f32.mrf.mxu0
        %v1637 = vadd.f32 0.0, %v1636
        %1638 = vmatmul.f32.gmra.mxu0 %v370
        %v1639 = vpop.f32.mrf.mxu0
        %v1640 = vadd.f32 0.0, %v1639
        %1641 = vmatmul.f32.gmra.mxu0 %v373
        %v1642 = vpop.f32.mrf.mxu0
        %v1643 = vadd.f32 0.0, %v1642
        %1644 = vmatmul.f32.gmra.mxu0 %v376
        %v1645 = vpop.f32.mrf.mxu0
        %v1646 = vadd.f32 0.0, %v1645
        %1647 = vmatmul.f32.gmra.mxu0 %v379
        %v1648 = vpop.f32.mrf.mxu0
        %v1649 = vadd.f32 0.0, %v1648
        %1650 = vmatmul.f32.gmra.mxu0 %v382
        %v1651 = vpop.f32.mrf.mxu0
        %v1652 = vadd.f32 0.0, %v1651
        %1653 = vmatmul.f32.gmra.mxu0 %v385
        %v1654 = vpop.f32.mrf.mxu0
        %v1655 = vadd.f32 0.0, %v1654
        %1656 = vmatmul.f32.gmra.mxu0 %v388
        %v1657 = vpop.f32.mrf.mxu0
        %v1658 = vadd.f32 0.0, %v1657
        %1659 = vmatmul.f32.gmra.mxu0 %v391
        %v1660 = vpop.f32.mrf.mxu0
        %v1661 = vadd.f32 0.0, %v1660
        %1662 = vmatmul.f32.gmra.mxu0 %v394
        %v1663 = vpop.f32.mrf.mxu0
        %v1664 = vadd.f32 0.0, %v1663
        %1665 = vmatmul.f32.gmra.mxu0 %v397
        %v1666 = vpop.f32.mrf.mxu0
        %v1667 = vadd.f32 0.0, %v1666
        %1668 = vmatmul.f32.gmra.mxu0 %v400
        %v1669 = vpop.f32.mrf.mxu0
        %v1670 = vadd.f32 0.0, %v1669
        %1671 = vmatmul.f32.gmra.mxu0 %v403
        %v1672 = vpop.f32.mrf.mxu0
        %v1673 = vadd.f32 0.0, %v1672
        %1674 = vmatmul.f32.gmra.mxu0 %v406
        %v1675 = vpop.f32.mrf.mxu0
        %v1676 = vadd.f32 0.0, %v1675
        %1677 = vmatmul.f32.gmra.mxu0 %v409
        %v1678 = vpop.f32.mrf.mxu0
        %v1679 = vadd.f32 0.0, %v1678
        %1680 = vmatmul.f32.gmra.mxu0 %v412
        %v1681 = vpop.f32.mrf.mxu0
        %v1682 = vadd.f32 0.0, %v1681
        %1683 = vmatmul.f32.gmra.mxu0 %v415
        %v1684 = vpop.f32.mrf.mxu0
        %v1685 = vadd.f32 0.0, %v1684
        %1686 = vmatmul.f32.gmra.mxu0 %v418
        %v1687 = vpop.f32.mrf.mxu0
        %v1688 = vadd.f32 0.0, %v1687
        %1689 = vmatmul.f32.gmra.mxu0 %v421
        %v1690 = vpop.f32.mrf.mxu0
        %v1691 = vadd.f32 0.0, %v1690
        %1692 = vmatmul.f32.gmra.mxu0 %v424
        %v1693 = vpop.f32.mrf.mxu0
        %v1694 = vadd.f32 0.0, %v1693
        %1695 = vmatmul.f32.gmra.mxu0 %v427
        %v1696 = vpop.f32.mrf.mxu0
        %v1697 = vadd.f32 0.0, %v1696
        %1698 = vmatmul.f32.gmra.mxu0 %v430
        %v1699 = vpop.f32.mrf.mxu0
        %v1700 = vadd.f32 0.0, %v1699
        %1701 = vmatmul.f32.gmra.mxu0 %v433
        %v1702 = vpop.f32.mrf.mxu0
        %v1703 = vadd.f32 0.0, %v1702
        %1704 = vmatmul.f32.gmra.mxu0 %v436
        %v1705 = vpop.f32.mrf.mxu0
        %v1706 = vadd.f32 0.0, %v1705
        %1707 = vmatmul.f32.gmra.mxu0 %v439
        %v1708 = vpop.f32.mrf.mxu0
        %v1709 = vadd.f32 0.0, %v1708
        %1710 = vmatmul.f32.gmra.mxu0 %v442
        %v1711 = vpop.f32.mrf.mxu0
        %v1712 = vadd.f32 0.0, %v1711
        %1713 = vmatmul.f32.gmra.mxu0 %v445
        %v1714 = vpop.f32.mrf.mxu0
        %v1715 = vadd.f32 0.0, %v1714
        %1716 = vmatmul.f32.gmra.mxu0 %v448
        %v1717 = vpop.f32.mrf.mxu0
        %v1718 = vadd.f32 0.0, %v1717
        %1719 = vdwg.mxu0
        %1720 = vmatpush.msra.mxu0 0.0
        %1721 = vmatpush.msra.mxu0 0.0
        %1722 = vmatpush.msra.mxu0 0.0
        %1723 = vmatpush.msra.mxu0 0.0
        %1724 = vmatpush.msra.mxu0 0.0
        %1725 = vmatpush.msra.mxu0 0.0
        %1726 = vmatpush.msra.mxu0 0.0
        %1727 = vmatpush.msra.mxu0 0.0
        %1728 = vmatpush.msra.mxu0 0.0
        %1729 = vmatpush.msra.mxu0 0.0
        %1730 = vmatpush.msra.mxu0 0.0
        %1731 = vmatpush.msra.mxu0 0.0
        %1732 = vmatpush.msra.mxu0 0.0
        %1733 = vmatpush.msra.mxu0 0.0
        %1734 = vmatpush.msra.mxu0 %v349
        %1735 = vmatpush.msra.mxu0 %v346
        %1736 = vmatmul.f32.gmra.mxu0 %v355
        %v1737 = vpop.f32.mrf.mxu0
        %v1738 = vadd.f32 0.0, %v1737
        %1739 = vmatmul.f32.gmra.mxu0 %v358
        %v1740 = vpop.f32.mrf.mxu0
        %v1741 = vadd.f32 0.0, %v1740
        %1742 = vmatmul.f32.gmra.mxu0 %v361
        %v1743 = vpop.f32.mrf.mxu0
        %v1744 = vadd.f32 0.0, %v1743
        %1745 = vmatmul.f32.gmra.mxu0 %v364
        %v1746 = vpop.f32.mrf.mxu0
        %v1747 = vadd.f32 0.0, %v1746
        %1748 = vmatmul.f32.gmra.mxu0 %v367
        %v1749 = vpop.f32.mrf.mxu0
        %v1750 = vadd.f32 0.0, %v1749
        %1751 = vmatmul.f32.gmra.mxu0 %v370
        %v1752 = vpop.f32.mrf.mxu0
        %v1753 = vadd.f32 0.0, %v1752
        %1754 = vmatmul.f32.gmra.mxu0 %v373
        %v1755 = vpop.f32.mrf.mxu0
        %v1756 = vadd.f32 0.0, %v1755
        %1757 = vmatmul.f32.gmra.mxu0 %v376
        %v1758 = vpop.f32.mrf.mxu0
        %v1759 = vadd.f32 0.0, %v1758
        %1760 = vmatmul.f32.gmra.mxu0 %v379
        %v1761 = vpop.f32.mrf.mxu0
        %v1762 = vadd.f32 0.0, %v1761
        %1763 = vmatmul.f32.gmra.mxu0 %v382
        %v1764 = vpop.f32.mrf.mxu0
        %v1765 = vadd.f32 0.0, %v1764
        %1766 = vmatmul.f32.gmra.mxu0 %v385
        %v1767 = vpop.f32.mrf.mxu0
        %v1768 = vadd.f32 0.0, %v1767
        %1769 = vmatmul.f32.gmra.mxu0 %v388
        %v1770 = vpop.f32.mrf.mxu0
        %v1771 = vadd.f32 0.0, %v1770
        %1772 = vmatmul.f32.gmra.mxu0 %v391
        %v1773 = vpop.f32.mrf.mxu0
        %v1774 = vadd.f32 0.0, %v1773
        %1775 = vmatmul.f32.gmra.mxu0 %v394
        %v1776 = vpop.f32.mrf.mxu0
        %v1777 = vadd.f32 0.0, %v1776
        %1778 = vmatmul.f32.gmra.mxu0 %v397
        %v1779 = vpop.f32.mrf.mxu0
        %v1780 = vadd.f32 0.0, %v1779
        %1781 = vmatmul.f32.gmra.mxu0 %v400
        %v1782 = vpop.f32.mrf.mxu0
        %v1783 = vadd.f32 0.0, %v1782
        %1784 = vmatmul.f32.gmra.mxu0 %v403
        %v1785 = vpop.f32.mrf.mxu0
        %v1786 = vadd.f32 0.0, %v1785
        %1787 = vmatmul.f32.gmra.mxu0 %v406
        %v1788 = vpop.f32.mrf.mxu0
        %v1789 = vadd.f32 0.0, %v1788
        %1790 = vmatmul.f32.gmra.mxu0 %v409
        %v1791 = vpop.f32.mrf.mxu0
        %v1792 = vadd.f32 0.0, %v1791
        %1793 = vmatmul.f32.gmra.mxu0 %v412
        %v1794 = vpop.f32.mrf.mxu0
        %v1795 = vadd.f32 0.0, %v1794
        %1796 = vmatmul.f32.gmra.mxu0 %v415
        %v1797 = vpop.f32.mrf.mxu0
        %v1798 = vadd.f32 0.0, %v1797
        %1799 = vmatmul.f32.gmra.mxu0 %v418
        %v1800 = vpop.f32.mrf.mxu0
        %v1801 = vadd.f32 0.0, %v1800
        %1802 = vmatmul.f32.gmra.mxu0 %v421
        %v1803 = vpop.f32.mrf.mxu0
        %v1804 = vadd.f32 0.0, %v1803
        %1805 = vmatmul.f32.gmra.mxu0 %v424
        %v1806 = vpop.f32.mrf.mxu0
        %v1807 = vadd.f32 0.0, %v1806
        %1808 = vmatmul.f32.gmra.mxu0 %v427
        %v1809 = vpop.f32.mrf.mxu0
        %v1810 = vadd.f32 0.0, %v1809
        %1811 = vmatmul.f32.gmra.mxu0 %v430
        %v1812 = vpop.f32.mrf.mxu0
        %v1813 = vadd.f32 0.0, %v1812
        %1814 = vmatmul.f32.gmra.mxu0 %v433
        %v1815 = vpop.f32.mrf.mxu0
        %v1816 = vadd.f32 0.0, %v1815
        %1817 = vmatmul.f32.gmra.mxu0 %v436
        %v1818 = vpop.f32.mrf.mxu0
        %v1819 = vadd.f32 0.0, %v1818
        %1820 = vmatmul.f32.gmra.mxu0 %v439
        %v1821 = vpop.f32.mrf.mxu0
        %v1822 = vadd.f32 0.0, %v1821
        %1823 = vmatmul.f32.gmra.mxu0 %v442
        %v1824 = vpop.f32.mrf.mxu0
        %v1825 = vadd.f32 0.0, %v1824
        %1826 = vmatmul.f32.gmra.mxu0 %v445
        %v1827 = vpop.f32.mrf.mxu0
        %v1828 = vadd.f32 0.0, %v1827
        %1829 = vmatmul.f32.gmra.mxu0 %v448
        %v1830 = vpop.f32.mrf.mxu0
        %v1831 = vadd.f32 0.0, %v1830
        %1832 = vdwg.mxu0
        %1833 = vmatpush.msra.mxu0 0.0
        %1834 = vmatpush.msra.mxu0 0.0
        %1835 = vmatpush.msra.mxu0 0.0
        %1836 = vmatpush.msra.mxu0 0.0
        %1837 = vmatpush.msra.mxu0 0.0
        %1838 = vmatpush.msra.mxu0 0.0
        %1839 = vmatpush.msra.mxu0 0.0
        %1840 = vmatpush.msra.mxu0 0.0
        %1841 = vmatpush.msra.mxu0 0.0
        %1842 = vmatpush.msra.mxu0 0.0
        %1843 = vmatpush.msra.mxu0 0.0
        %1844 = vmatpush.msra.mxu0 0.0
        %1845 = vmatpush.msra.mxu0 0.0
        %1846 = vmatpush.msra.mxu0 0.0
        %1847 = vmatpush.msra.mxu0 %v350
        %1848 = vmatpush.msra.mxu0 %v347
        %1849 = vmatmul.f32.gmra.mxu0 %v355
        %v1850 = vpop.f32.mrf.mxu0
        %v1851 = vadd.f32 0.0, %v1850
        %1852 = vmatmul.f32.gmra.mxu0 %v358
        %v1853 = vpop.f32.mrf.mxu0
        %v1854 = vadd.f32 0.0, %v1853
        %1855 = vmatmul.f32.gmra.mxu0 %v361
        %v1856 = vpop.f32.mrf.mxu0
        %v1857 = vadd.f32 0.0, %v1856
        %1858 = vmatmul.f32.gmra.mxu0 %v364
        %v1859 = vpop.f32.mrf.mxu0
        %v1860 = vadd.f32 0.0, %v1859
        %1861 = vmatmul.f32.gmra.mxu0 %v367
        %v1862 = vpop.f32.mrf.mxu0
        %v1863 = vadd.f32 0.0, %v1862
        %1864 = vmatmul.f32.gmra.mxu0 %v370
        %v1865 = vpop.f32.mrf.mxu0
        %v1866 = vadd.f32 0.0, %v1865
        %1867 = vmatmul.f32.gmra.mxu0 %v373
        %v1868 = vpop.f32.mrf.mxu0
        %v1869 = vadd.f32 0.0, %v1868
        %1870 = vmatmul.f32.gmra.mxu0 %v376
        %v1871 = vpop.f32.mrf.mxu0
        %v1872 = vadd.f32 0.0, %v1871
        %1873 = vmatmul.f32.gmra.mxu0 %v379
        %v1874 = vpop.f32.mrf.mxu0
        %v1875 = vadd.f32 0.0, %v1874
        %1876 = vmatmul.f32.gmra.mxu0 %v382
        %v1877 = vpop.f32.mrf.mxu0
        %v1878 = vadd.f32 0.0, %v1877
        %1879 = vmatmul.f32.gmra.mxu0 %v385
        %v1880 = vpop.f32.mrf.mxu0
        %v1881 = vadd.f32 0.0, %v1880
        %1882 = vmatmul.f32.gmra.mxu0 %v388
        %v1883 = vpop.f32.mrf.mxu0
        %v1884 = vadd.f32 0.0, %v1883
        %1885 = vmatmul.f32.gmra.mxu0 %v391
        %v1886 = vpop.f32.mrf.mxu0
        %v1887 = vadd.f32 0.0, %v1886
        %1888 = vmatmul.f32.gmra.mxu0 %v394
        %v1889 = vpop.f32.mrf.mxu0
        %v1890 = vadd.f32 0.0, %v1889
        %1891 = vmatmul.f32.gmra.mxu0 %v397
        %v1892 = vpop.f32.mrf.mxu0
        %v1893 = vadd.f32 0.0, %v1892
        %1894 = vmatmul.f32.gmra.mxu0 %v400
        %v1895 = vpop.f32.mrf.mxu0
        %v1896 = vadd.f32 0.0, %v1895
        %1897 = vmatmul.f32.gmra.mxu0 %v403
        %v1898 = vpop.f32.mrf.mxu0
        %v1899 = vadd.f32 0.0, %v1898
        %1900 = vmatmul.f32.gmra.mxu0 %v406
        %v1901 = vpop.f32.mrf.mxu0
        %v1902 = vadd.f32 0.0, %v1901
        %1903 = vmatmul.f32.gmra.mxu0 %v409
        %v1904 = vpop.f32.mrf.mxu0
        %v1905 = vadd.f32 0.0, %v1904
        %1906 = vmatmul.f32.gmra.mxu0 %v412
        %v1907 = vpop.f32.mrf.mxu0
        %v1908 = vadd.f32 0.0, %v1907
        %1909 = vmatmul.f32.gmra.mxu0 %v415
        %v1910 = vpop.f32.mrf.mxu0
        %v1911 = vadd.f32 0.0, %v1910
        %1912 = vmatmul.f32.gmra.mxu0 %v418
        %v1913 = vpop.f32.mrf.mxu0
        %v1914 = vadd.f32 0.0, %v1913
        %1915 = vmatmul.f32.gmra.mxu0 %v421
        %v1916 = vpop.f32.mrf.mxu0
        %v1917 = vadd.f32 0.0, %v1916
        %1918 = vmatmul.f32.gmra.mxu0 %v424
        %v1919 = vpop.f32.mrf.mxu0
        %v1920 = vadd.f32 0.0, %v1919
        %1921 = vmatmul.f32.gmra.mxu0 %v427
        %v1922 = vpop.f32.mrf.mxu0
        %v1923 = vadd.f32 0.0, %v1922
        %1924 = vmatmul.f32.gmra.mxu0 %v430
        %v1925 = vpop.f32.mrf.mxu0
        %v1926 = vadd.f32 0.0, %v1925
        %1927 = vmatmul.f32.gmra.mxu0 %v433
        %v1928 = vpop.f32.mrf.mxu0
        %v1929 = vadd.f32 0.0, %v1928
        %1930 = vmatmul.f32.gmra.mxu0 %v436
        %v1931 = vpop.f32.mrf.mxu0
        %v1932 = vadd.f32 0.0, %v1931
        %1933 = vmatmul.f32.gmra.mxu0 %v439
        %v1934 = vpop.f32.mrf.mxu0
        %v1935 = vadd.f32 0.0, %v1934
        %1936 = vmatmul.f32.gmra.mxu0 %v442
        %v1937 = vpop.f32.mrf.mxu0
        %v1938 = vadd.f32 0.0, %v1937
        %1939 = vmatmul.f32.gmra.mxu0 %v445
        %v1940 = vpop.f32.mrf.mxu0
        %v1941 = vadd.f32 0.0, %v1940
        %1942 = vmatmul.f32.gmra.mxu0 %v448
        %v1943 = vpop.f32.mrf.mxu0
        %v1944 = vadd.f32 0.0, %v1943
        %1945 = vdwg.mxu0
        %v1946 = vmul.f32 %v802, %v1625
        %v1947 = vmul.f32 %v802, %v1738
        %v1948 = vmul.f32 %v802, %v1851
        %v1949 = vmul.f32 %v817, %v1628
        %v1950 = vmul.f32 %v817, %v1741
        %v1951 = vmul.f32 %v817, %v1854
        %v1952 = vmul.f32 %v832, %v1631
        %v1953 = vmul.f32 %v832, %v1744
        %v1954 = vmul.f32 %v832, %v1857
        %v1955 = vmul.f32 %v847, %v1634
        %v1956 = vmul.f32 %v847, %v1747
        %v1957 = vmul.f32 %v847, %v1860
        %v1958 = vmul.f32 %v862, %v1637
        %v1959 = vmul.f32 %v862, %v1750
        %v1960 = vmul.f32 %v862, %v1863
        %v1961 = vmul.f32 %v877, %v1640
        %v1962 = vmul.f32 %v877, %v1753
        %v1963 = vmul.f32 %v877, %v1866
        %v1964 = vmul.f32 %v892, %v1643
        %v1965 = vmul.f32 %v892, %v1756
        %v1966 = vmul.f32 %v892, %v1869
        %v1967 = vmul.f32 %v907, %v1646
        %v1968 = vmul.f32 %v907, %v1759
        %v1969 = vmul.f32 %v907, %v1872
        %v1970 = vmul.f32 %v922, %v1649
        %v1971 = vmul.f32 %v922, %v1762
        %v1972 = vmul.f32 %v922, %v1875
        %v1973 = vmul.f32 %v937, %v1652
        %v1974 = vmul.f32 %v937, %v1765
        %v1975 = vmul.f32 %v937, %v1878
        %v1976 = vmul.f32 %v952, %v1655
        %v1977 = vmul.f32 %v952, %v1768
        %v1978 = vmul.f32 %v952, %v1881
        %v1979 = vmul.f32 %v967, %v1658
        %v1980 = vmul.f32 %v967, %v1771
        %v1981 = vmul.f32 %v967, %v1884
        %v1982 = vmul.f32 %v982, %v1661
        %v1983 = vmul.f32 %v982, %v1774
        %v1984 = vmul.f32 %v982, %v1887
        %v1985 = vmul.f32 %v997, %v1664
        %v1986 = vmul.f32 %v997, %v1777
        %v1987 = vmul.f32 %v997, %v1890
        %v1988 = vmul.f32 %v1012, %v1667
        %v1989 = vmul.f32 %v1012, %v1780
        %v1990 = vmul.f32 %v1012, %v1893
        %v1991 = vmul.f32 %v1027, %v1670
        %v1992 = vmul.f32 %v1027, %v1783
        %v1993 = vmul.f32 %v1027, %v1896
        %v1994 = vmul.f32 %v1042, %v1673
        %v1995 = vmul.f32 %v1042, %v1786
        %v1996 = vmul.f32 %v1042, %v1899
        %v1997 = vmul.f32 %v1057, %v1676
        %v1998 = vmul.f32 %v1057, %v1789
        %v1999 = vmul.f32 %v1057, %v1902
        %v2000 = vmul.f32 %v1072, %v1679
        %v2001 = vmul.f32 %v1072, %v1792
        %v2002 = vmul.f32 %v1072, %v1905
        %v2003 = vmul.f32 %v1087, %v1682
        %v2004 = vmul.f32 %v1087, %v1795
        %v2005 = vmul.f32 %v1087, %v1908
        %v2006 = vmul.f32 %v1102, %v1685
        %v2007 = vmul.f32 %v1102, %v1798
        %v2008 = vmul.f32 %v1102, %v1911
        %v2009 = vmul.f32 %v1117, %v1688
        %v2010 = vmul.f32 %v1117, %v1801
        %v2011 = vmul.f32 %v1117, %v1914
        %v2012 = vmul.f32 %v1132, %v1691
        %v2013 = vmul.f32 %v1132, %v1804
        %v2014 = vmul.f32 %v1132, %v1917
        %v2015 = vmul.f32 %v1147, %v1694
        %v2016 = vmul.f32 %v1147, %v1807
        %v2017 = vmul.f32 %v1147, %v1920
        %v2018 = vmul.f32 %v1162, %v1697
        %v2019 = vmul.f32 %v1162, %v1810
        %v2020 = vmul.f32 %v1162, %v1923
        %v2021 = vmul.f32 %v1177, %v1700
        %v2022 = vmul.f32 %v1177, %v1813
        %v2023 = vmul.f32 %v1177, %v1926
        %v2024 = vmul.f32 %v1192, %v1703
        %v2025 = vmul.f32 %v1192, %v1816
        %v2026 = vmul.f32 %v1192, %v1929
        %v2027 = vmul.f32 %v1207, %v1706
        %v2028 = vmul.f32 %v1207, %v1819
        %v2029 = vmul.f32 %v1207, %v1932
        %v2030 = vmul.f32 %v1222, %v1709
        %v2031 = vmul.f32 %v1222, %v1822
        %v2032 = vmul.f32 %v1222, %v1935
        %v2033 = vmul.f32 %v1237, %v1712
        %v2034 = vmul.f32 %v1237, %v1825
        %v2035 = vmul.f32 %v1237, %v1938
        %v2036 = vmul.f32 %v1252, %v1715
        %v2037 = vmul.f32 %v1252, %v1828
        %v2038 = vmul.f32 %v1252, %v1941
        %v2039 = vmul.f32 %v1267, %v1718
        %v2040 = vmul.f32 %v1267, %v1831
        %v2041 = vmul.f32 %v1267, %v1944
        %v2042 = vsub.f32 %v1286, %v1946
        %v2043 = vsub.f32 %v1399, %v1947
        %v2044 = vsub.f32 %v1512, %v1948
        %v2045 = vsub.f32 %v1289, %v1949
        %v2046 = vsub.f32 %v1402, %v1950
        %v2047 = vsub.f32 %v1515, %v1951
        %v2048 = vsub.f32 %v1292, %v1952
        %v2049 = vsub.f32 %v1405, %v1953
        %v2050 = vsub.f32 %v1518, %v1954
        %v2051 = vsub.f32 %v1295, %v1955
        %v2052 = vsub.f32 %v1408, %v1956
        %v2053 = vsub.f32 %v1521, %v1957
        %v2054 = vsub.f32 %v1298, %v1958
        %v2055 = vsub.f32 %v1411, %v1959
        %v2056 = vsub.f32 %v1524, %v1960
        %v2057 = vsub.f32 %v1301, %v1961
        %v2058 = vsub.f32 %v1414, %v1962
        %v2059 = vsub.f32 %v1527, %v1963
        %v2060 = vsub.f32 %v1304, %v1964
        %v2061 = vsub.f32 %v1417, %v1965
        %v2062 = vsub.f32 %v1530, %v1966
        %v2063 = vsub.f32 %v1307, %v1967
        %v2064 = vsub.f32 %v1420, %v1968
        %v2065 = vsub.f32 %v1533, %v1969
        %v2066 = vsub.f32 %v1310, %v1970
        %v2067 = vsub.f32 %v1423, %v1971
        %v2068 = vsub.f32 %v1536, %v1972
        %v2069 = vsub.f32 %v1313, %v1973
        %v2070 = vsub.f32 %v1426, %v1974
        %v2071 = vsub.f32 %v1539, %v1975
        %v2072 = vsub.f32 %v1316, %v1976
        %v2073 = vsub.f32 %v1429, %v1977
        %v2074 = vsub.f32 %v1542, %v1978
        %v2075 = vsub.f32 %v1319, %v1979
        %v2076 = vsub.f32 %v1432, %v1980
        %v2077 = vsub.f32 %v1545, %v1981
        %v2078 = vsub.f32 %v1322, %v1982
        %v2079 = vsub.f32 %v1435, %v1983
        %v2080 = vsub.f32 %v1548, %v1984
        %v2081 = vsub.f32 %v1325, %v1985
        %v2082 = vsub.f32 %v1438, %v1986
        %v2083 = vsub.f32 %v1551, %v1987
        %v2084 = vsub.f32 %v1328, %v1988
        %v2085 = vsub.f32 %v1441, %v1989
        %v2086 = vsub.f32 %v1554, %v1990
        %v2087 = vsub.f32 %v1331, %v1991
        %v2088 = vsub.f32 %v1444, %v1992
        %v2089 = vsub.f32 %v1557, %v1993
        %v2090 = vsub.f32 %v1334, %v1994
        %v2091 = vsub.f32 %v1447, %v1995
        %v2092 = vsub.f32 %v1560, %v1996
        %v2093 = vsub.f32 %v1337, %v1997
        %v2094 = vsub.f32 %v1450, %v1998
        %v2095 = vsub.f32 %v1563, %v1999
        %v2096 = vsub.f32 %v1340, %v2000
        %v2097 = vsub.f32 %v1453, %v2001
        %v2098 = vsub.f32 %v1566, %v2002
        %v2099 = vsub.f32 %v1343, %v2003
        %v2100 = vsub.f32 %v1456, %v2004
        %v2101 = vsub.f32 %v1569, %v2005
        %v2102 = vsub.f32 %v1346, %v2006
        %v2103 = vsub.f32 %v1459, %v2007
        %v2104 = vsub.f32 %v1572, %v2008
        %v2105 = vsub.f32 %v1349, %v2009
        %v2106 = vsub.f32 %v1462, %v2010
        %v2107 = vsub.f32 %v1575, %v2011
        %v2108 = vsub.f32 %v1352, %v2012
        %v2109 = vsub.f32 %v1465, %v2013
        %v2110 = vsub.f32 %v1578, %v2014
        %v2111 = vsub.f32 %v1355, %v2015
        %v2112 = vsub.f32 %v1468, %v2016
        %v2113 = vsub.f32 %v1581, %v2017
        %v2114 = vsub.f32 %v1358, %v2018
        %v2115 = vsub.f32 %v1471, %v2019
        %v2116 = vsub.f32 %v1584, %v2020
        %v2117 = vsub.f32 %v1361, %v2021
        %v2118 = vsub.f32 %v1474, %v2022
        %v2119 = vsub.f32 %v1587, %v2023
        %v2120 = vsub.f32 %v1364, %v2024
        %v2121 = vsub.f32 %v1477, %v2025
        %v2122 = vsub.f32 %v1590, %v2026
        %v2123 = vsub.f32 %v1367, %v2027
        %v2124 = vsub.f32 %v1480, %v2028
        %v2125 = vsub.f32 %v1593, %v2029
        %v2126 = vsub.f32 %v1370, %v2030
        %v2127 = vsub.f32 %v1483, %v2031
        %v2128 = vsub.f32 %v1596, %v2032
        %v2129 = vsub.f32 %v1373, %v2033
        %v2130 = vsub.f32 %v1486, %v2034
        %v2131 = vsub.f32 %v1599, %v2035
        %v2132 = vsub.f32 %v1376, %v2036
        %v2133 = vsub.f32 %v1489, %v2037
        %v2134 = vsub.f32 %v1602, %v2038
        %v2135 = vsub.f32 %v1379, %v2039
        %v2136 = vsub.f32 %v1492, %v2040
        %v2137 = vsub.f32 %v1605, %v2041
        %s2138 = smul.u32 %s20, 256
        %v2139 = vlaneseq
        %v2140 = vshrl.u32 %v2139, 7
        %v2141 = vadd.s32 %v2140, 8
        %v2142 = vadd.s32 %v2140, 16
        %v2143 = vadd.s32 %v2140, 24
        %v2144 = vadd.s32 %v2140, 32
        %v2145 = vadd.s32 %v2140, 40
        %v2146 = vadd.s32 %v2140, 48
        %v2147 = vadd.s32 %v2140, 56
        %v2148 = vadd.s32 %v2140, 64
        %v2149 = vadd.s32 %v2140, 72
        %v2150 = vadd.s32 %v2140, 80
        %v2151 = vadd.s32 %v2140, 88
        %v2152 = vadd.s32 %v2140, 96
        %v2153 = vadd.s32 %v2140, 104
        %v2154 = vadd.s32 %v2140, 112
        %v2155 = vadd.s32 %v2140, 120
        %v2156 = vadd.s32 %v2140, 128
        %v2157 = vadd.s32 %v2140, 136
        %v2158 = vadd.s32 %v2140, 144
        %v2159 = vadd.s32 %v2140, 152
        %v2160 = vadd.s32 %v2140, 160
        %v2161 = vadd.s32 %v2140, 168
        %v2162 = vadd.s32 %v2140, 176
        %v2163 = vadd.s32 %v2140, 184
        %v2164 = vadd.s32 %v2140, 192
        %v2165 = vadd.s32 %v2140, 200
        %v2166 = vadd.s32 %v2140, 208
        %v2167 = vadd.s32 %v2140, 216
        %v2168 = vadd.s32 %v2140, 224
        %v2169 = vadd.s32 %v2140, 232
        %v2170 = vadd.s32 %v2140, 240
        %v2171 = vadd.s32 %v2140, 248
        %v2172 = vstv %s2138
        %v2173 = vadd.s32 %v2172, %v2140
        %v2174 = vadd.s32 %v2172, %v2141
        %v2175 = vadd.s32 %v2172, %v2142
        %v2176 = vadd.s32 %v2172, %v2143
        %v2177 = vadd.s32 %v2172, %v2144
        %v2178 = vadd.s32 %v2172, %v2145
        %v2179 = vadd.s32 %v2172, %v2146
        %v2180 = vadd.s32 %v2172, %v2147
        %v2181 = vadd.s32 %v2172, %v2148
        %v2182 = vadd.s32 %v2172, %v2149
        %v2183 = vadd.s32 %v2172, %v2150
        %v2184 = vadd.s32 %v2172, %v2151
        %v2185 = vadd.s32 %v2172, %v2152
        %v2186 = vadd.s32 %v2172, %v2153
        %v2187 = vadd.s32 %v2172, %v2154
        %v2188 = vadd.s32 %v2172, %v2155
        %v2189 = vadd.s32 %v2172, %v2156
        %v2190 = vadd.s32 %v2172, %v2157
        %v2191 = vadd.s32 %v2172, %v2158
        %v2192 = vadd.s32 %v2172, %v2159
        %v2193 = vadd.s32 %v2172, %v2160
        %v2194 = vadd.s32 %v2172, %v2161
        %v2195 = vadd.s32 %v2172, %v2162
        %v2196 = vadd.s32 %v2172, %v2163
        %v2197 = vadd.s32 %v2172, %v2164
        %v2198 = vadd.s32 %v2172, %v2165
        %v2199 = vadd.s32 %v2172, %v2166
        %v2200 = vadd.s32 %v2172, %v2167
        %v2201 = vadd.s32 %v2172, %v2168
        %v2202 = vadd.s32 %v2172, %v2169
        %v2203 = vadd.s32 %v2172, %v2170
        %v2204 = vadd.s32 %v2172, %v2171
        %vm2205 = vcmp.lt.s32.totalorder %v2173, 1024
        %vm2206 = vcmp.lt.s32.totalorder %v2174, 1024
        %vm2207 = vcmp.lt.s32.totalorder %v2175, 1024
        %vm2208 = vcmp.lt.s32.totalorder %v2176, 1024
        %vm2209 = vcmp.lt.s32.totalorder %v2177, 1024
        %vm2210 = vcmp.lt.s32.totalorder %v2178, 1024
        %vm2211 = vcmp.lt.s32.totalorder %v2179, 1024
        %vm2212 = vcmp.lt.s32.totalorder %v2180, 1024
        %vm2213 = vcmp.lt.s32.totalorder %v2181, 1024
        %vm2214 = vcmp.lt.s32.totalorder %v2182, 1024
        %vm2215 = vcmp.lt.s32.totalorder %v2183, 1024
        %vm2216 = vcmp.lt.s32.totalorder %v2184, 1024
        %vm2217 = vcmp.lt.s32.totalorder %v2185, 1024
        %vm2218 = vcmp.lt.s32.totalorder %v2186, 1024
        %vm2219 = vcmp.lt.s32.totalorder %v2187, 1024
        %vm2220 = vcmp.lt.s32.totalorder %v2188, 1024
        %vm2221 = vcmp.lt.s32.totalorder %v2189, 1024
        %vm2222 = vcmp.lt.s32.totalorder %v2190, 1024
        %vm2223 = vcmp.lt.s32.totalorder %v2191, 1024
        %vm2224 = vcmp.lt.s32.totalorder %v2192, 1024
        %vm2225 = vcmp.lt.s32.totalorder %v2193, 1024
        %vm2226 = vcmp.lt.s32.totalorder %v2194, 1024
        %vm2227 = vcmp.lt.s32.totalorder %v2195, 1024
        %vm2228 = vcmp.lt.s32.totalorder %v2196, 1024
        %vm2229 = vcmp.lt.s32.totalorder %v2197, 1024
        %vm2230 = vcmp.lt.s32.totalorder %v2198, 1024
        %vm2231 = vcmp.lt.s32.totalorder %v2199, 1024
        %vm2232 = vcmp.lt.s32.totalorder %v2200, 1024
        %vm2233 = vcmp.lt.s32.totalorder %v2201, 1024
        %vm2234 = vcmp.lt.s32.totalorder %v2202, 1024
        %vm2235 = vcmp.lt.s32.totalorder %v2203, 1024
        %vm2236 = vcmp.lt.s32.totalorder %v2204, 1024
        %v2237 = vsel %vm2205, 1, 0
        %v2238 = vsel %vm2206, 1, 0
        %v2239 = vsel %vm2207, 1, 0
        %v2240 = vsel %vm2208, 1, 0
        %v2241 = vsel %vm2209, 1, 0
        %v2242 = vsel %vm2210, 1, 0
        %v2243 = vsel %vm2211, 1, 0
        %v2244 = vsel %vm2212, 1, 0
        %v2245 = vsel %vm2213, 1, 0
        %v2246 = vsel %vm2214, 1, 0
        %v2247 = vsel %vm2215, 1, 0
        %v2248 = vsel %vm2216, 1, 0
        %v2249 = vsel %vm2217, 1, 0
        %v2250 = vsel %vm2218, 1, 0
        %v2251 = vsel %vm2219, 1, 0
        %v2252 = vsel %vm2220, 1, 0
        %v2253 = vsel %vm2221, 1, 0
        %v2254 = vsel %vm2222, 1, 0
        %v2255 = vsel %vm2223, 1, 0
        %v2256 = vsel %vm2224, 1, 0
        %v2257 = vsel %vm2225, 1, 0
        %v2258 = vsel %vm2226, 1, 0
        %v2259 = vsel %vm2227, 1, 0
        %v2260 = vsel %vm2228, 1, 0
        %v2261 = vsel %vm2229, 1, 0
        %v2262 = vsel %vm2230, 1, 0
        %v2263 = vsel %vm2231, 1, 0
        %v2264 = vsel %vm2232, 1, 0
        %v2265 = vsel %vm2233, 1, 0
        %v2266 = vsel %vm2234, 1, 0
        %v2267 = vsel %vm2235, 1, 0
        %v2268 = vsel %vm2236, 1, 0
        %vm2269 = vcmp.eq.s32.totalorder %v2237, 1
        %vm2270 = vcmp.eq.s32.totalorder %v2238, 1
        %vm2271 = vcmp.eq.s32.totalorder %v2239, 1
        %vm2272 = vcmp.eq.s32.totalorder %v2240, 1
        %vm2273 = vcmp.eq.s32.totalorder %v2241, 1
        %vm2274 = vcmp.eq.s32.totalorder %v2242, 1
        %vm2275 = vcmp.eq.s32.totalorder %v2243, 1
        %vm2276 = vcmp.eq.s32.totalorder %v2244, 1
        %vm2277 = vcmp.eq.s32.totalorder %v2245, 1
        %vm2278 = vcmp.eq.s32.totalorder %v2246, 1
        %vm2279 = vcmp.eq.s32.totalorder %v2247, 1
        %vm2280 = vcmp.eq.s32.totalorder %v2248, 1
        %vm2281 = vcmp.eq.s32.totalorder %v2249, 1
        %vm2282 = vcmp.eq.s32.totalorder %v2250, 1
        %vm2283 = vcmp.eq.s32.totalorder %v2251, 1
        %vm2284 = vcmp.eq.s32.totalorder %v2252, 1
        %vm2285 = vcmp.eq.s32.totalorder %v2253, 1
        %vm2286 = vcmp.eq.s32.totalorder %v2254, 1
        %vm2287 = vcmp.eq.s32.totalorder %v2255, 1
        %vm2288 = vcmp.eq.s32.totalorder %v2256, 1
        %vm2289 = vcmp.eq.s32.totalorder %v2257, 1
        %vm2290 = vcmp.eq.s32.totalorder %v2258, 1
        %vm2291 = vcmp.eq.s32.totalorder %v2259, 1
        %vm2292 = vcmp.eq.s32.totalorder %v2260, 1
        %vm2293 = vcmp.eq.s32.totalorder %v2261, 1
        %vm2294 = vcmp.eq.s32.totalorder %v2262, 1
        %vm2295 = vcmp.eq.s32.totalorder %v2263, 1
        %vm2296 = vcmp.eq.s32.totalorder %v2264, 1
        %vm2297 = vcmp.eq.s32.totalorder %v2265, 1
        %vm2298 = vcmp.eq.s32.totalorder %v2266, 1
        %vm2299 = vcmp.eq.s32.totalorder %v2267, 1
        %vm2300 = vcmp.eq.s32.totalorder %v2268, 1
        %v2301 = vsel %vm2269, %v2042, 0.0
        %v2302 = vsel %vm2269, %v2043, 0.0
        %v2303 = vsel %vm2269, %v2044, 0.0
        %v2304 = vsel %vm2270, %v2045, 0.0
        %v2305 = vsel %vm2270, %v2046, 0.0
        %v2306 = vsel %vm2270, %v2047, 0.0
        %v2307 = vsel %vm2271, %v2048, 0.0
        %v2308 = vsel %vm2271, %v2049, 0.0
        %v2309 = vsel %vm2271, %v2050, 0.0
        %v2310 = vsel %vm2272, %v2051, 0.0
        %v2311 = vsel %vm2272, %v2052, 0.0
        %v2312 = vsel %vm2272, %v2053, 0.0
        %v2313 = vsel %vm2273, %v2054, 0.0
        %v2314 = vsel %vm2273, %v2055, 0.0
        %v2315 = vsel %vm2273, %v2056, 0.0
        %v2316 = vsel %vm2274, %v2057, 0.0
        %v2317 = vsel %vm2274, %v2058, 0.0
        %v2318 = vsel %vm2274, %v2059, 0.0
        %v2319 = vsel %vm2275, %v2060, 0.0
        %v2320 = vsel %vm2275, %v2061, 0.0
        %v2321 = vsel %vm2275, %v2062, 0.0
        %v2322 = vsel %vm2276, %v2063, 0.0
        %v2323 = vsel %vm2276, %v2064, 0.0
        %v2324 = vsel %vm2276, %v2065, 0.0
        %v2325 = vsel %vm2277, %v2066, 0.0
        %v2326 = vsel %vm2277, %v2067, 0.0
        %v2327 = vsel %vm2277, %v2068, 0.0
        %v2328 = vsel %vm2278, %v2069, 0.0
        %v2329 = vsel %vm2278, %v2070, 0.0
        %v2330 = vsel %vm2278, %v2071, 0.0
        %v2331 = vsel %vm2279, %v2072, 0.0
        %v2332 = vsel %vm2279, %v2073, 0.0
        %v2333 = vsel %vm2279, %v2074, 0.0
        %v2334 = vsel %vm2280, %v2075, 0.0
        %v2335 = vsel %vm2280, %v2076, 0.0
        %v2336 = vsel %vm2280, %v2077, 0.0
        %v2337 = vsel %vm2281, %v2078, 0.0
        %v2338 = vsel %vm2281, %v2079, 0.0
        %v2339 = vsel %vm2281, %v2080, 0.0
        %v2340 = vsel %vm2282, %v2081, 0.0
        %v2341 = vsel %vm2282, %v2082, 0.0
        %v2342 = vsel %vm2282, %v2083, 0.0
        %v2343 = vsel %vm2283, %v2084, 0.0
        %v2344 = vsel %vm2283, %v2085, 0.0
        %v2345 = vsel %vm2283, %v2086, 0.0
        %v2346 = vsel %vm2284, %v2087, 0.0
        %v2347 = vsel %vm2284, %v2088, 0.0
        %v2348 = vsel %vm2284, %v2089, 0.0
        %v2349 = vsel %vm2285, %v2090, 0.0
        %v2350 = vsel %vm2285, %v2091, 0.0
        %v2351 = vsel %vm2285, %v2092, 0.0
        %v2352 = vsel %vm2286, %v2093, 0.0
        %v2353 = vsel %vm2286, %v2094, 0.0
        %v2354 = vsel %vm2286, %v2095, 0.0
        %v2355 = vsel %vm2287, %v2096, 0.0
        %v2356 = vsel %vm2287, %v2097, 0.0
        %v2357 = vsel %vm2287, %v2098, 0.0
        %v2358 = vsel %vm2288, %v2099, 0.0
        %v2359 = vsel %vm2288, %v2100, 0.0
        %v2360 = vsel %vm2288, %v2101, 0.0
        %v2361 = vsel %vm2289, %v2102, 0.0
        %v2362 = vsel %vm2289, %v2103, 0.0
        %v2363 = vsel %vm2289, %v2104, 0.0
        %v2364 = vsel %vm2290, %v2105, 0.0
        %v2365 = vsel %vm2290, %v2106, 0.0
        %v2366 = vsel %vm2290, %v2107, 0.0
        %v2367 = vsel %vm2291, %v2108, 0.0
        %v2368 = vsel %vm2291, %v2109, 0.0
        %v2369 = vsel %vm2291, %v2110, 0.0
        %v2370 = vsel %vm2292, %v2111, 0.0
        %v2371 = vsel %vm2292, %v2112, 0.0
        %v2372 = vsel %vm2292, %v2113, 0.0
        %v2373 = vsel %vm2293, %v2114, 0.0
        %v2374 = vsel %vm2293, %v2115, 0.0
        %v2375 = vsel %vm2293, %v2116, 0.0
        %v2376 = vsel %vm2294, %v2117, 0.0
        %v2377 = vsel %vm2294, %v2118, 0.0
        %v2378 = vsel %vm2294, %v2119, 0.0
        %v2379 = vsel %vm2295, %v2120, 0.0
        %v2380 = vsel %vm2295, %v2121, 0.0
        %v2381 = vsel %vm2295, %v2122, 0.0
        %v2382 = vsel %vm2296, %v2123, 0.0
        %v2383 = vsel %vm2296, %v2124, 0.0
        %v2384 = vsel %vm2296, %v2125, 0.0
        %v2385 = vsel %vm2297, %v2126, 0.0
        %v2386 = vsel %vm2297, %v2127, 0.0
        %v2387 = vsel %vm2297, %v2128, 0.0
        %v2388 = vsel %vm2298, %v2129, 0.0
        %v2389 = vsel %vm2298, %v2130, 0.0
        %v2390 = vsel %vm2298, %v2131, 0.0
        %v2391 = vsel %vm2299, %v2132, 0.0
        %v2392 = vsel %vm2299, %v2133, 0.0
        %v2393 = vsel %vm2299, %v2134, 0.0
        %v2394 = vsel %vm2300, %v2135, 0.0
        %v2395 = vsel %vm2300, %v2136, 0.0
        %v2396 = vsel %vm2300, %v2137, 0.0
        %v2397 = vld [vmem:[%s6] ss:$2 sm:$0x7]
        %v2398 = vadd.f32 %v2301, %v2304
        %v2399 = vadd.f32 %v2398, %v2307
        %v2400 = vadd.f32 %v2399, %v2310
        %v2401 = vadd.f32 %v2400, %v2313
        %v2402 = vadd.f32 %v2401, %v2316
        %v2403 = vadd.f32 %v2402, %v2319
        %v2404 = vadd.f32 %v2403, %v2322
        %v2405 = vadd.f32 %v2404, %v2325
        %v2406 = vadd.f32 %v2405, %v2328
        %v2407 = vadd.f32 %v2406, %v2331
        %v2408 = vadd.f32 %v2407, %v2334
        %v2409 = vadd.f32 %v2408, %v2337
        %v2410 = vadd.f32 %v2409, %v2340
        %v2411 = vadd.f32 %v2410, %v2343
        %v2412 = vadd.f32 %v2411, %v2346
        %v2413 = vadd.f32 %v2412, %v2349
        %v2414 = vadd.f32 %v2413, %v2352
        %v2415 = vadd.f32 %v2414, %v2355
        %v2416 = vadd.f32 %v2415, %v2358
        %v2417 = vadd.f32 %v2416, %v2361
        %v2418 = vadd.f32 %v2417, %v2364
        %v2419 = vadd.f32 %v2418, %v2367
        %v2420 = vadd.f32 %v2419, %v2370
        %v2421 = vadd.f32 %v2420, %v2373
        %v2422 = vadd.f32 %v2421, %v2376
        %v2423 = vadd.f32 %v2422, %v2379
        %v2424 = vadd.f32 %v2423, %v2382
        %v2425 = vadd.f32 %v2424, %v2385
        %v2426 = vadd.f32 %v2425, %v2388
        %v2427 = vadd.f32 %v2426, %v2391
        %v2428 = vadd.f32 %v2427, %v2394
        %v2429 = vrot.slane %v2428, 4
        %v2430 = vadd.f32 %v2428, %v2429
        %v2431 = vrot.slane %v2430, 2
        %v2432 = vadd.f32 %v2430, %v2431
        %v2433 = vrot.slane %v2432, 1
        %v2434 = vadd.f32 %v2432, %v2433
        %v2435 = vadd.f32 %v2302, %v2305
        %v2436 = vadd.f32 %v2435, %v2308
        %v2437 = vadd.f32 %v2436, %v2311
        %v2438 = vadd.f32 %v2437, %v2314
        %v2439 = vadd.f32 %v2438, %v2317
        %v2440 = vadd.f32 %v2439, %v2320
        %v2441 = vadd.f32 %v2440, %v2323
        %v2442 = vadd.f32 %v2441, %v2326
        %v2443 = vadd.f32 %v2442, %v2329
        %v2444 = vadd.f32 %v2443, %v2332
        %v2445 = vadd.f32 %v2444, %v2335
        %v2446 = vadd.f32 %v2445, %v2338
        %v2447 = vadd.f32 %v2446, %v2341
        %v2448 = vadd.f32 %v2447, %v2344
        %v2449 = vadd.f32 %v2448, %v2347
        %v2450 = vadd.f32 %v2449, %v2350
        %v2451 = vadd.f32 %v2450, %v2353
        %v2452 = vadd.f32 %v2451, %v2356
        %v2453 = vadd.f32 %v2452, %v2359
        %v2454 = vadd.f32 %v2453, %v2362
        %v2455 = vadd.f32 %v2454, %v2365
        %v2456 = vadd.f32 %v2455, %v2368
        %v2457 = vadd.f32 %v2456, %v2371
        %v2458 = vadd.f32 %v2457, %v2374
        %v2459 = vadd.f32 %v2458, %v2377
        %v2460 = vadd.f32 %v2459, %v2380
        %v2461 = vadd.f32 %v2460, %v2383
        %v2462 = vadd.f32 %v2461, %v2386
        %v2463 = vadd.f32 %v2462, %v2389
        %v2464 = vadd.f32 %v2463, %v2392
        %v2465 = vadd.f32 %v2464, %v2395
        %v2466 = vrot.slane %v2465, 4
        %v2467 = vadd.f32 %v2465, %v2466
        %v2468 = vrot.slane %v2467, 2
        %v2469 = vadd.f32 %v2467, %v2468
        %v2470 = vrot.slane %v2469, 1
        %v2471 = vadd.f32 %v2469, %v2470
        %v2472 = vadd.f32 %v2303, %v2306
        %v2473 = vadd.f32 %v2472, %v2309
        %v2474 = vadd.f32 %v2473, %v2312
        %v2475 = vadd.f32 %v2474, %v2315
        %v2476 = vadd.f32 %v2475, %v2318
        %v2477 = vadd.f32 %v2476, %v2321
        %v2478 = vadd.f32 %v2477, %v2324
        %v2479 = vadd.f32 %v2478, %v2327
        %v2480 = vadd.f32 %v2479, %v2330
        %v2481 = vadd.f32 %v2480, %v2333
        %v2482 = vadd.f32 %v2481, %v2336
        %v2483 = vadd.f32 %v2482, %v2339
        %v2484 = vadd.f32 %v2483, %v2342
        %v2485 = vadd.f32 %v2484, %v2345
        %v2486 = vadd.f32 %v2485, %v2348
        %v2487 = vadd.f32 %v2486, %v2351
        %v2488 = vadd.f32 %v2487, %v2354
        %v2489 = vadd.f32 %v2488, %v2357
        %v2490 = vadd.f32 %v2489, %v2360
        %v2491 = vadd.f32 %v2490, %v2363
        %v2492 = vadd.f32 %v2491, %v2366
        %v2493 = vadd.f32 %v2492, %v2369
        %v2494 = vadd.f32 %v2493, %v2372
        %v2495 = vadd.f32 %v2494, %v2375
        %v2496 = vadd.f32 %v2495, %v2378
        %v2497 = vadd.f32 %v2496, %v2381
        %v2498 = vadd.f32 %v2497, %v2384
        %v2499 = vadd.f32 %v2498, %v2387
        %v2500 = vadd.f32 %v2499, %v2390
        %v2501 = vadd.f32 %v2500, %v2393
        %v2502 = vadd.f32 %v2501, %v2396
        %v2503 = vrot.slane %v2502, 4
        %v2504 = vadd.f32 %v2502, %v2503
        %v2505 = vrot.slane %v2504, 2
        %v2506 = vadd.f32 %v2504, %v2505
        %v2507 = vrot.slane %v2506, 1
        %v2508 = vadd.f32 %v2506, %v2507
        %v2512 = vrot.slane %v2471, 7
        %v2513 = vrot.slane %v2508, 6
        %vm2514 = vcmask 1040384
        %v2515 = vsel %vm2514, %v2434, %v2512
        %vm2516 = vcmask 1041408
        %v2517 = vsel %vm2516, %v2515, %v2513
        %v2519 = vadd.f32 %v2397, %v2517
        %v2520 = vlaneseq
        %vm2521 = vcmp.ge.s32.totalorder %v2520, 0
        %vm2522 = vcmp.lt.s32.totalorder %v2520, 384
        %vm2523 = vmand %vm2521, %vm2522
        %2524 = vst.msk [vmem:[%s6] ss:$2 sm:$0x7] %vm2523, %v2519
        %s2525 = scalar_lea.vmem %s6, 1
        %v2526 = vld [vmem:[%s2525] ss:$2 sm:$0x7]
        %v2527 = vmul.f32 %v2301, %v2301
        %v2528 = vmul.f32 %v2302, %v2302
        %v2529 = vmul.f32 %v2303, %v2303
        %v2530 = vmul.f32 %v2304, %v2304
        %v2531 = vmul.f32 %v2305, %v2305
        %v2532 = vmul.f32 %v2306, %v2306
        %v2533 = vmul.f32 %v2307, %v2307
        %v2534 = vmul.f32 %v2308, %v2308
        %v2535 = vmul.f32 %v2309, %v2309
        %v2536 = vmul.f32 %v2310, %v2310
        %v2537 = vmul.f32 %v2311, %v2311
        %v2538 = vmul.f32 %v2312, %v2312
        %v2539 = vmul.f32 %v2313, %v2313
        %v2540 = vmul.f32 %v2314, %v2314
        %v2541 = vmul.f32 %v2315, %v2315
        %v2542 = vmul.f32 %v2316, %v2316
        %v2543 = vmul.f32 %v2317, %v2317
        %v2544 = vmul.f32 %v2318, %v2318
        %v2545 = vmul.f32 %v2319, %v2319
        %v2546 = vmul.f32 %v2320, %v2320
        %v2547 = vmul.f32 %v2321, %v2321
        %v2548 = vmul.f32 %v2322, %v2322
        %v2549 = vmul.f32 %v2323, %v2323
        %v2550 = vmul.f32 %v2324, %v2324
        %v2551 = vmul.f32 %v2325, %v2325
        %v2552 = vmul.f32 %v2326, %v2326
        %v2553 = vmul.f32 %v2327, %v2327
        %v2554 = vmul.f32 %v2328, %v2328
        %v2555 = vmul.f32 %v2329, %v2329
        %v2556 = vmul.f32 %v2330, %v2330
        %v2557 = vmul.f32 %v2331, %v2331
        %v2558 = vmul.f32 %v2332, %v2332
        %v2559 = vmul.f32 %v2333, %v2333
        %v2560 = vmul.f32 %v2334, %v2334
        %v2561 = vmul.f32 %v2335, %v2335
        %v2562 = vmul.f32 %v2336, %v2336
        %v2563 = vmul.f32 %v2337, %v2337
        %v2564 = vmul.f32 %v2338, %v2338
        %v2565 = vmul.f32 %v2339, %v2339
        %v2566 = vmul.f32 %v2340, %v2340
        %v2567 = vmul.f32 %v2341, %v2341
        %v2568 = vmul.f32 %v2342, %v2342
        %v2569 = vmul.f32 %v2343, %v2343
        %v2570 = vmul.f32 %v2344, %v2344
        %v2571 = vmul.f32 %v2345, %v2345
        %v2572 = vmul.f32 %v2346, %v2346
        %v2573 = vmul.f32 %v2347, %v2347
        %v2574 = vmul.f32 %v2348, %v2348
        %v2575 = vmul.f32 %v2349, %v2349
        %v2576 = vmul.f32 %v2350, %v2350
        %v2577 = vmul.f32 %v2351, %v2351
        %v2578 = vmul.f32 %v2352, %v2352
        %v2579 = vmul.f32 %v2353, %v2353
        %v2580 = vmul.f32 %v2354, %v2354
        %v2581 = vmul.f32 %v2355, %v2355
        %v2582 = vmul.f32 %v2356, %v2356
        %v2583 = vmul.f32 %v2357, %v2357
        %v2584 = vmul.f32 %v2358, %v2358
        %v2585 = vmul.f32 %v2359, %v2359
        %v2586 = vmul.f32 %v2360, %v2360
        %v2587 = vmul.f32 %v2361, %v2361
        %v2588 = vmul.f32 %v2362, %v2362
        %v2589 = vmul.f32 %v2363, %v2363
        %v2590 = vmul.f32 %v2364, %v2364
        %v2591 = vmul.f32 %v2365, %v2365
        %v2592 = vmul.f32 %v2366, %v2366
        %v2593 = vmul.f32 %v2367, %v2367
        %v2594 = vmul.f32 %v2368, %v2368
        %v2595 = vmul.f32 %v2369, %v2369
        %v2596 = vmul.f32 %v2370, %v2370
        %v2597 = vmul.f32 %v2371, %v2371
        %v2598 = vmul.f32 %v2372, %v2372
        %v2599 = vmul.f32 %v2373, %v2373
        %v2600 = vmul.f32 %v2374, %v2374
        %v2601 = vmul.f32 %v2375, %v2375
        %v2602 = vmul.f32 %v2376, %v2376
        %v2603 = vmul.f32 %v2377, %v2377
        %v2604 = vmul.f32 %v2378, %v2378
        %v2605 = vmul.f32 %v2379, %v2379
        %v2606 = vmul.f32 %v2380, %v2380
        %v2607 = vmul.f32 %v2381, %v2381
        %v2608 = vmul.f32 %v2382, %v2382
        %v2609 = vmul.f32 %v2383, %v2383
        %v2610 = vmul.f32 %v2384, %v2384
        %v2611 = vmul.f32 %v2385, %v2385
        %v2612 = vmul.f32 %v2386, %v2386
        %v2613 = vmul.f32 %v2387, %v2387
        %v2614 = vmul.f32 %v2388, %v2388
        %v2615 = vmul.f32 %v2389, %v2389
        %v2616 = vmul.f32 %v2390, %v2390
        %v2617 = vmul.f32 %v2391, %v2391
        %v2618 = vmul.f32 %v2392, %v2392
        %v2619 = vmul.f32 %v2393, %v2393
        %v2620 = vmul.f32 %v2394, %v2394
        %v2621 = vmul.f32 %v2395, %v2395
        %v2622 = vmul.f32 %v2396, %v2396
        %v2623 = vadd.f32 %v2527, %v2530
        %v2624 = vadd.f32 %v2623, %v2533
        %v2625 = vadd.f32 %v2624, %v2536
        %v2626 = vadd.f32 %v2625, %v2539
        %v2627 = vadd.f32 %v2626, %v2542
        %v2628 = vadd.f32 %v2627, %v2545
        %v2629 = vadd.f32 %v2628, %v2548
        %v2630 = vadd.f32 %v2629, %v2551
        %v2631 = vadd.f32 %v2630, %v2554
        %v2632 = vadd.f32 %v2631, %v2557
        %v2633 = vadd.f32 %v2632, %v2560
        %v2634 = vadd.f32 %v2633, %v2563
        %v2635 = vadd.f32 %v2634, %v2566
        %v2636 = vadd.f32 %v2635, %v2569
        %v2637 = vadd.f32 %v2636, %v2572
        %v2638 = vadd.f32 %v2637, %v2575
        %v2639 = vadd.f32 %v2638, %v2578
        %v2640 = vadd.f32 %v2639, %v2581
        %v2641 = vadd.f32 %v2640, %v2584
        %v2642 = vadd.f32 %v2641, %v2587
        %v2643 = vadd.f32 %v2642, %v2590
        %v2644 = vadd.f32 %v2643, %v2593
        %v2645 = vadd.f32 %v2644, %v2596
        %v2646 = vadd.f32 %v2645, %v2599
        %v2647 = vadd.f32 %v2646, %v2602
        %v2648 = vadd.f32 %v2647, %v2605
        %v2649 = vadd.f32 %v2648, %v2608
        %v2650 = vadd.f32 %v2649, %v2611
        %v2651 = vadd.f32 %v2650, %v2614
        %v2652 = vadd.f32 %v2651, %v2617
        %v2653 = vadd.f32 %v2652, %v2620
        %v2654 = vrot.slane %v2653, 4
        %v2655 = vadd.f32 %v2653, %v2654
        %v2656 = vrot.slane %v2655, 2
        %v2657 = vadd.f32 %v2655, %v2656
        %v2658 = vrot.slane %v2657, 1
        %v2659 = vadd.f32 %v2657, %v2658
        %v2660 = vadd.f32 %v2528, %v2531
        %v2661 = vadd.f32 %v2660, %v2534
        %v2662 = vadd.f32 %v2661, %v2537
        %v2663 = vadd.f32 %v2662, %v2540
        %v2664 = vadd.f32 %v2663, %v2543
        %v2665 = vadd.f32 %v2664, %v2546
        %v2666 = vadd.f32 %v2665, %v2549
        %v2667 = vadd.f32 %v2666, %v2552
        %v2668 = vadd.f32 %v2667, %v2555
        %v2669 = vadd.f32 %v2668, %v2558
        %v2670 = vadd.f32 %v2669, %v2561
        %v2671 = vadd.f32 %v2670, %v2564
        %v2672 = vadd.f32 %v2671, %v2567
        %v2673 = vadd.f32 %v2672, %v2570
        %v2674 = vadd.f32 %v2673, %v2573
        %v2675 = vadd.f32 %v2674, %v2576
        %v2676 = vadd.f32 %v2675, %v2579
        %v2677 = vadd.f32 %v2676, %v2582
        %v2678 = vadd.f32 %v2677, %v2585
        %v2679 = vadd.f32 %v2678, %v2588
        %v2680 = vadd.f32 %v2679, %v2591
        %v2681 = vadd.f32 %v2680, %v2594
        %v2682 = vadd.f32 %v2681, %v2597
        %v2683 = vadd.f32 %v2682, %v2600
        %v2684 = vadd.f32 %v2683, %v2603
        %v2685 = vadd.f32 %v2684, %v2606
        %v2686 = vadd.f32 %v2685, %v2609
        %v2687 = vadd.f32 %v2686, %v2612
        %v2688 = vadd.f32 %v2687, %v2615
        %v2689 = vadd.f32 %v2688, %v2618
        %v2690 = vadd.f32 %v2689, %v2621
        %v2691 = vrot.slane %v2690, 4
        %v2692 = vadd.f32 %v2690, %v2691
        %v2693 = vrot.slane %v2692, 2
        %v2694 = vadd.f32 %v2692, %v2693
        %v2695 = vrot.slane %v2694, 1
        %v2696 = vadd.f32 %v2694, %v2695
        %v2697 = vadd.f32 %v2529, %v2532
        %v2698 = vadd.f32 %v2697, %v2535
        %v2699 = vadd.f32 %v2698, %v2538
        %v2700 = vadd.f32 %v2699, %v2541
        %v2701 = vadd.f32 %v2700, %v2544
        %v2702 = vadd.f32 %v2701, %v2547
        %v2703 = vadd.f32 %v2702, %v2550
        %v2704 = vadd.f32 %v2703, %v2553
        %v2705 = vadd.f32 %v2704, %v2556
        %v2706 = vadd.f32 %v2705, %v2559
        %v2707 = vadd.f32 %v2706, %v2562
        %v2708 = vadd.f32 %v2707, %v2565
        %v2709 = vadd.f32 %v2708, %v2568
        %v2710 = vadd.f32 %v2709, %v2571
        %v2711 = vadd.f32 %v2710, %v2574
        %v2712 = vadd.f32 %v2711, %v2577
        %v2713 = vadd.f32 %v2712, %v2580
        %v2714 = vadd.f32 %v2713, %v2583
        %v2715 = vadd.f32 %v2714, %v2586
        %v2716 = vadd.f32 %v2715, %v2589
        %v2717 = vadd.f32 %v2716, %v2592
        %v2718 = vadd.f32 %v2717, %v2595
        %v2719 = vadd.f32 %v2718, %v2598
        %v2720 = vadd.f32 %v2719, %v2601
        %v2721 = vadd.f32 %v2720, %v2604
        %v2722 = vadd.f32 %v2721, %v2607
        %v2723 = vadd.f32 %v2722, %v2610
        %v2724 = vadd.f32 %v2723, %v2613
        %v2725 = vadd.f32 %v2724, %v2616
        %v2726 = vadd.f32 %v2725, %v2619
        %v2727 = vadd.f32 %v2726, %v2622
        %v2728 = vrot.slane %v2727, 4
        %v2729 = vadd.f32 %v2727, %v2728
        %v2730 = vrot.slane %v2729, 2
        %v2731 = vadd.f32 %v2729, %v2730
        %v2732 = vrot.slane %v2731, 1
        %v2733 = vadd.f32 %v2731, %v2732
        %v2737 = vrot.slane %v2696, 7
        %v2738 = vrot.slane %v2733, 6
        %v2739 = vsel %vm2514, %v2659, %v2737
        %v2740 = vsel %vm2516, %v2739, %v2738
        %v2742 = vadd.f32 %v2526, %v2740
        %2743 = vst.msk [vmem:[%s2525] ss:$2 sm:$0x7] %vm2523, %v2742
        %p2744 = scmp.eq.s32.totalorder %s20, 3
        // Predicated region
        $region65: #{voxel_feature_encoding_forward.2} parent=43 // pred_check
          %p2745 = pneg %p2744
        $region66: #{voxel_feature_encoding_forward.2} parent=43 // pred_check_branch
          %2747 = sbr.rel (%p2745) target = $region68
        $region67: #{voxel_feature_encoding_forward.2} parent=43 // pred_region
          %v2748 = vld [vmem:[%s6] ss:$2 sm:$0x7]
          %v2749 = vmul.f32 %v2748, 0.0009765625
          %v2750 = vld [vmem:[%s2525] ss:$2 sm:$0x7]
          %v2751 = vmul.f32 %v2750, 0.0009765625
          %v2752 = vmul.f32 %v2749, %v2749
          %v2753 = vsub.f32 %v2751, %v2752
          %v2754 = vmax.f32 %v2753, 0.0
          %v2755 = vadd.f32 %v2754, 1e-05
          %v2756 = vrsqrt.pop %v2755
          %v2757 = vmul.f32 %v2756, %v2755
          %v2758 = vmul.f32 %v2757, %v2756
          %v2759 = vmul.f32 0.5, %v2758
          %v2760 = vsub.f32 1.5, %v2759
          %v2761 = vmul.f32 %v2756, %v2760
          %v2762 = vmul.f32 %v2755, %v2761
          %vm2763 = vcmp.eq.f32.partialorder %v2755, inf
          %v2764 = vsel %vm2763, %v2755, %v2762
          %vm2765 = vcmp.eq.f32.partialorder %v2755, 0.0
          %v2766 = vand.u32 %v2755, 2147483648
          %v2767 = vsel %vm2765, %v2766, %v2764
          %v2768 = vrcp.pop %v2767
          %v2769 = vmul.f32 %v2767, %v2768
          %v2770 = vsub.f32 1.0, %v2769
          %v2771 = vmul.f32 %v2768, %v2770
          %v2772 = vadd.f32 %v2768, %v2771
          %vm2773 = vweird.f32 %v2767
          %vm2774 = vweird.f32 %v2768
          %vm2775 = vmor %vm2773, %vm2774
          %v2776 = vsel %vm2775, %v2768, %v2772
          %v2777 = vand.u32 2147483647, %v2767
          %vm2778 = vcmp.eq.f32.partialorder %v2777, 8.507059e+37
          %v2779 = vand.u32 %v2767, 2147483648
          %v2780 = vor.u32 1.1754944e-38, %v2779
          %v2781 = vsel %vm2778, %v2780, %v2776
          %v2782 = vmul.f32 1.0, %v2781
          %v2783 = vld [vmem:[#allocation6] sm:$0x7]
          %v2784 = vmul.f32 %v2783, %v2782
          %v2785 = vld [vmem:[#allocation7] sm:$0x7]
          %v2786 = vmul.f32 %v2749, %v2784
          %v2787 = vsub.f32 %v2785, %v2786
          %2788 = vst.msk [vmem:[%s6] ss:$2 sm:$0x7] %vm2523, %v2784
          %2789 = vst.msk [vmem:[%s2525] ss:$2 sm:$0x7] %vm2523, %v2787
        $region68: #{voxel_feature_encoding_forward.2} parent=43 // pred_fallthru
          _
        // Predicated region
        $region69: #{voxel_feature_encoding_forward.2} parent=43 // pred_check
          %p2790 = pneg %p164
        $region70: #{voxel_feature_encoding_forward.2} parent=43 // pred_check_branch
          %2792 = sbr.rel (%p2790) target = $region72
        $region71: #{voxel_feature_encoding_forward.2} parent=43 // pred_region
          _
        $region72: #{voxel_feature_encoding_forward.2} parent=43 // pred_fallthru
          _
        // Predicated region
        $region73: #{voxel_feature_encoding_forward.2} parent=43 // pred_check
          %p2793 = pneg %p164
        $region74: #{voxel_feature_encoding_forward.2} parent=43 // pred_check_branch
          %2795 = sbr.rel (%p2793) target = $region76
        $region75: #{voxel_feature_encoding_forward.2} parent=43 // pred_region
          _
        $region76: #{voxel_feature_encoding_forward.2} parent=43 // pred_fallthru
          _
      $region44: #{voxel_feature_encoding_forward.2} parent=5 // pred_fallthru
        _
      %p2796 = scmp.le.s32.totalorder 2, %s15
      // Predicated region
      $region77: #{voxel_feature_encoding_forward.2} parent=5 // pred_check
        %p2797 = pneg %p2796
      $region78: #{voxel_feature_encoding_forward.2} parent=5 // pred_check_branch
        %2799 = sbr.rel (%p2797) target = $region80
      $region79: #{voxel_feature_encoding_forward.2} parent=5 // pred_region
        %s2800 = ssub.s32 %s15, 2
      $region80: #{voxel_feature_encoding_forward.2} parent=5 // pred_fallthru
        _
    $region6: #{voxel_feature_encoding_forward.2} parent=1 // loop_footer
      %s19 = sadd.s32 1, %s15
    $region7: #{voxel_feature_encoding_forward.2} parent=1 // loop_footer_branch
      %14 = sbr.rel target = $region3
    $region8: #{voxel_feature_encoding_forward.2} parent=1 // loop_exit
      _
    %2801 = vsyncpa [#allocation3], 1
    %s2802 = scalar_lea.sflag [#allocation3], 1
    %2803 = vsyncpa %s2802, 1
    %2804 = vsyncpa [#allocation5], 1
    %2805 = vsyncpa [#allocation8], 1

// kernel: voxel_feature_encoding_forward.3
$region0: #{voxel_feature_encoding_forward.3}
  #allocation0 [shape = 'u32[]', space=smem, size = 0x4, offset = 0x4, fixed_abs, tag = 'smem constant byte address 0x4 - core index']
  #allocation1 [shape = 'u32[72,128]{1,0:T(1,128)}', space=vmem, size = 0x9000, scoped, tag = 'internal scratch']
  %s0 = inlined_call_operand.vmem [shape: f32[1024,16], index: 0, kind: input, shape index: {}]
  %s1 = inlined_call_operand.hbm [shape: f32[16,384], index: 1, kind: input, shape index: {}]
  %s2 = inlined_call_operand.hbm [shape: f32[16,384], index: 2, kind: input, shape index: {}]
  %s3 = inlined_call_operand.vmem [shape: f32[16,4], index: 3, kind: input, shape index: {}]
  %s4 = inlined_call_operand.vmem [shape: f32[2,384], index: 4, kind: input, shape index: {}]
  %s5 = inlined_call_operand.vmem [shape: f32[1024,384], index: 5, kind: output, shape index: {}]
  %s6 = sld [smem:[#allocation0]]
  $region61: #{voxel_feature_encoding_forward.3} parent=0
    _
  %s8 = ssub.s32 1, %s6
  %s9 = scalar_select 0, %s8, %s6
  $region1: #{voxel_feature_encoding_forward.3} parent=0
    #allocation2 [shape = 'u8[24576]{0}', space=vmem, size = 0x6000, scoped, tag = 'input window, operand 1, single buffered']
    #allocation3 [shape = 's32[2]{0}', space=sflag, size = 0x8, scoped, tag = 'scoped memory for voxel_feature_encoding_forward.3']
    #allocation4 [shape = 'u8[24576]{0}', space=vmem, size = 0x6000, scoped, tag = 'input window, operand 2, single buffered']
    #allocation5 [shape = 's32[1]{0}', space=sflag, size = 0x4, scoped, tag = 'scoped memory for voxel_feature_encoding_forward.3']
    %10 = vsyncpa [#allocation3], 0
    %11 = vsyncpa [#allocation5], 0
    loop: start=0, step=1, limit=6
    $region2: #{voxel_feature_encoding_forward.3} parent=1 // loop_pre_header
      _
    $region3: #{voxel_feature_encoding_forward.3} parent=1 // loop_header
      %s13 = sphi 0, %s17
      %p14 = scmp.ge.s32.totalorder %s13, 6
      %s23 = sphi 0, %s25
      %s26 = sphi 0, %s23
      %s27 = sphi 0, %s26
      %s43 = sphi 0, %s27
      %s47 = sphi 0, %s47
      %s49 = sphi 0, %s47
      %s50 = sphi 0, %s49
      %s64 = sphi 0, %s50
      %s68 = sphi 0, %s68
      %s70 = sphi 0, %s68
      %s71 = sphi 0, %s70
      %s85 = sphi 0, %s71
      %s89 = sphi 0, %s89
      %s91 = sphi 0, %s89
      %s92 = sphi 0, %s91
      %s106 = sphi 0, %s92
      %s110 = sphi 0, %s110
      %s112 = sphi 0, %s110
      %s113 = sphi 0, %s112
      %s127 = sphi 0, %s113
      %s133 = sphi 0, %s135
      %s136 = sphi 0, %s133
      %s137 = sphi 0, %s136
      %s153 = sphi 0, %s137
    $region4: #{voxel_feature_encoding_forward.3} parent=1 // loop_header_branch
      %16 = sbr.rel (%p14) target = $region8
    $region5: #{voxel_feature_encoding_forward.3} parent=1 // loop_body
      %s18 = ssub.s32 %s13, 1
      %s19 = ssub.s32 %s13, 2
      %s20 = sadd.s32 %s13, 1
      %s21 = ssub.s32 %s13, %s20
      %p22 = scmp.eq.s32.totalorder %s21, 0
      %s24 = sadd.s32 %s23, 1
      %s25 = scalar_select %p22, %s23, %s24
      %p28 = pneg %p22
      %p29 = scmp.eq.s32.totalorder %s13, 3
      %p30 = por %p28, %p29
      %p31 = scmp.ne.s32.totalorder %s23, %s26
      %p32 = scmp.eq.s32.totalorder %s13, 0
      %p33 = por %p31, %p32
      %p34 = scmp.ne.s32.totalorder %s23, %s26
      %p35 = scmp.eq.s32.totalorder %s18, 3
      %p36 = por %p34, %p35
      %p37 = scmp.ne.s32.totalorder %s26, %s27
      %p38 = scmp.eq.s32.totalorder %s18, 0
      %p39 = por %p37, %p38
      %p40 = scmp.ne.s32.totalorder %s26, %s27
      %p41 = scmp.eq.s32.totalorder %s19, 3
      %p42 = por %p40, %p41
      %p44 = scmp.ne.s32.totalorder %s27, %s43
      %p45 = scmp.eq.s32.totalorder %s19, 0
      %p46 = por %p44, %p45
      %s48 = sadd.s32 %s47, 1
      %p51 = scmp.eq.s32.totalorder %s13, 3
      %p52 = scmp.ne.s32.totalorder %s47, %s49
      %p53 = scmp.eq.s32.totalorder %s13, 0
      %p54 = por %p52, %p53
      %p55 = scmp.ne.s32.totalorder %s47, %s49
      %p56 = scmp.eq.s32.totalorder %s18, 3
      %p57 = por %p55, %p56
      %p58 = scmp.ne.s32.totalorder %s49, %s50
      %p59 = scmp.eq.s32.totalorder %s18, 0
      %p60 = por %p58, %p59
      %p61 = scmp.ne.s32.totalorder %s49, %s50
      %p62 = scmp.eq.s32.totalorder %s19, 3
      %p63 = por %p61, %p62
      %p65 = scmp.ne.s32.totalorder %s50, %s64
      %p66 = scmp.eq.s32.totalorder %s19, 0
      %p67 = por %p65, %p66
      %s69 = sadd.s32 %s68, 1
      %p72 = scmp.eq.s32.totalorder %s13, 3
      %p73 = scmp.ne.s32.totalorder %s68, %s70
      %p74 = scmp.eq.s32.totalorder %s13, 0
      %p75 = por %p73, %p74
      %p76 = scmp.ne.s32.totalorder %s68, %s70
      %p77 = scmp.eq.s32.totalorder %s18, 3
      %p78 = por %p76, %p77
      %p79 = scmp.ne.s32.totalorder %s70, %s71
      %p80 = scmp.eq.s32.totalorder %s18, 0
      %p81 = por %p79, %p80
      %p82 = scmp.ne.s32.totalorder %s70, %s71
      %p83 = scmp.eq.s32.totalorder %s19, 3
      %p84 = por %p82, %p83
      %p86 = scmp.ne.s32.totalorder %s71, %s85
      %p87 = scmp.eq.s32.totalorder %s19, 0
      %p88 = por %p86, %p87
      %s90 = sadd.s32 %s89, 1
      %p93 = scmp.eq.s32.totalorder %s13, 3
      %p94 = scmp.ne.s32.totalorder %s89, %s91
      %p95 = scmp.eq.s32.totalorder %s13, 0
      %p96 = por %p94, %p95
      %p97 = scmp.ne.s32.totalorder %s89, %s91
      %p98 = scmp.eq.s32.totalorder %s18, 3
      %p99 = por %p97, %p98
      %p100 = scmp.ne.s32.totalorder %s91, %s92
      %p101 = scmp.eq.s32.totalorder %s18, 0
      %p102 = por %p100, %p101
      %p103 = scmp.ne.s32.totalorder %s91, %s92
      %p104 = scmp.eq.s32.totalorder %s19, 3
      %p105 = por %p103, %p104
      %p107 = scmp.ne.s32.totalorder %s92, %s106
      %p108 = scmp.eq.s32.totalorder %s19, 0
      %p109 = por %p107, %p108
      %s111 = sadd.s32 %s110, 1
      %p114 = scmp.eq.s32.totalorder %s13, 3
      %p115 = scmp.ne.s32.totalorder %s110, %s112
      %p116 = scmp.eq.s32.totalorder %s13, 0
      %p117 = por %p115, %p116
      %p118 = scmp.ne.s32.totalorder %s110, %s112
      %p119 = scmp.eq.s32.totalorder %s18, 3
      %p120 = por %p118, %p119
      %p121 = scmp.ne.s32.totalorder %s112, %s113
      %p122 = scmp.eq.s32.totalorder %s18, 0
      %p123 = por %p121, %p122
      %p124 = scmp.ne.s32.totalorder %s112, %s113
      %p125 = scmp.eq.s32.totalorder %s19, 3
      %p126 = por %p124, %p125
      %p128 = scmp.ne.s32.totalorder %s113, %s127
      %p129 = scmp.eq.s32.totalorder %s19, 0
      %p130 = por %p128, %p129
      %s131 = ssub.s32 %s13, %s20
      %p132 = scmp.eq.s32.totalorder %s131, 0
      %s134 = sadd.s32 %s133, 1
      %s135 = scalar_select %p132, %s133, %s134
      %p138 = pneg %p132
      %p139 = scmp.eq.s32.totalorder %s13, 3
      %p140 = por %p138, %p139
      %p141 = scmp.ne.s32.totalorder %s133, %s136
      %p142 = scmp.eq.s32.totalorder %s13, 0
      %p143 = por %p141, %p142
      %p144 = scmp.ne.s32.totalorder %s133, %s136
      %p145 = scmp.eq.s32.totalorder %s18, 3
      %p146 = por %p144, %p145
      %p147 = scmp.ne.s32.totalorder %s136, %s137
      %p148 = scmp.eq.s32.totalorder %s18, 0
      %p149 = por %p147, %p148
      %p150 = scmp.ne.s32.totalorder %s136, %s137
      %p151 = scmp.eq.s32.totalorder %s19, 3
      %p152 = por %p150, %p151
      %p154 = scmp.ne.s32.totalorder %s137, %s153
      %p155 = scmp.eq.s32.totalorder %s19, 0
      %p156 = por %p154, %p155
      %p157 = scmp.le.s32.totalorder 1, %s13
      %p158 = scmp.lt.s32.totalorder %s13, 5
      %p159 = pnand %p157, %p158
      %p160 = pneg %p159
      // Predicated region
      $region9: #{voxel_feature_encoding_forward.3} parent=5 // pred_check
        _
      $region10: #{voxel_feature_encoding_forward.3} parent=5 // pred_check_branch
        %162 = sbr.rel (%p159) target = $region12
      $region11: #{voxel_feature_encoding_forward.3} parent=5 // pred_region
        %s163 = ssub.s32 %s13, 1
        // Predicated region
        $region13: #{voxel_feature_encoding_forward.3} parent=11 // pred_check
          %p164 = pneg %p60
        $region14: #{voxel_feature_encoding_forward.3} parent=11 // pred_check_branch
          %166 = sbr.rel (%p164) target = $region16
        $region15: #{voxel_feature_encoding_forward.3} parent=11 // pred_region
          %168 = vsyncadd [#allocation3], 0
          %s169 = sshll.u32 %s1, 4
          %s170 = int_to_ptr.hbm [resolvable:$true] %s169
          %s171 = sshll.u32 [#allocation2], 4
          %s172 = int_to_ptr.vmem [resolvable:$true] %s171
          %177 = dma.hbm_to_vmem [thread:$0]  %s170, 768, %s172, [#allocation3], 384, 384, 24
        $region16: #{voxel_feature_encoding_forward.3} parent=11 // pred_fallthru
          _
        // Predicated region
        $region17: #{voxel_feature_encoding_forward.3} parent=11 // pred_check
          %p178 = pneg %p81
        $region18: #{voxel_feature_encoding_forward.3} parent=11 // pred_check_branch
          %180 = sbr.rel (%p178) target = $region20
        $region19: #{voxel_feature_encoding_forward.3} parent=11 // pred_region
          %182 = vsyncadd [#allocation5], 0
          %s183 = sshll.u32 %s2, 4
          %s184 = int_to_ptr.hbm [resolvable:$true] %s183
          %s185 = sshll.u32 [#allocation4], 4
          %s186 = int_to_ptr.vmem [resolvable:$true] %s185
          %191 = dma.hbm_to_vmem [thread:$0]  %s184, 768, %s186, [#allocation5], 384, 384, 24
        $region20: #{voxel_feature_encoding_forward.3} parent=11 // pred_fallthru
          _
        // Predicated region
        $region21: #{voxel_feature_encoding_forward.3} parent=11 // pred_check
          %p192 = pneg %p102
        $region22: #{voxel_feature_encoding_forward.3} parent=11 // pred_check_branch
          %194 = sbr.rel (%p192) target = $region24
        $region23: #{voxel_feature_encoding_forward.3} parent=11 // pred_region
          _
        $region24: #{voxel_feature_encoding_forward.3} parent=11 // pred_fallthru
          _
        // Predicated region
        $region25: #{voxel_feature_encoding_forward.3} parent=11 // pred_check
          %p195 = pneg %p123
        $region26: #{voxel_feature_encoding_forward.3} parent=11 // pred_check_branch
          %197 = sbr.rel (%p195) target = $region28
        $region27: #{voxel_feature_encoding_forward.3} parent=11 // pred_region
          _
        $region28: #{voxel_feature_encoding_forward.3} parent=11 // pred_fallthru
          _
      $region12: #{voxel_feature_encoding_forward.3} parent=5 // pred_fallthru
        _
      %p198 = scmp.lt.s32.totalorder %s13, 4
      // Predicated region
      $region29: #{voxel_feature_encoding_forward.3} parent=5 // pred_check
        %p199 = pneg %p198
      $region30: #{voxel_feature_encoding_forward.3} parent=5 // pred_check_branch
        %201 = sbr.rel (%p199) target = $region32
      $region31: #{voxel_feature_encoding_forward.3} parent=5 // pred_region
        // Predicated region
        $region33: #{voxel_feature_encoding_forward.3} parent=31 // pred_check
          %p202 = pneg %p33
        $region34: #{voxel_feature_encoding_forward.3} parent=31 // pred_check_branch
          %204 = sbr.rel (%p202) target = $region36
        $region35: #{voxel_feature_encoding_forward.3} parent=31 // pred_region
          %s205 = smul.u32 32, %s13
          %p206 = scmp.lt.s32.totalorder %s205, 127
          %s207 = scalar_select %p206, %s205, 127
          %s208 = smul.addr %s207, 8
          %s209 = scalar_lea.vmem %s0, %s208
          %s210 = smul.u32 32, %s13
        $region36: #{voxel_feature_encoding_forward.3} parent=31 // pred_fallthru
          _
      $region32: #{voxel_feature_encoding_forward.3} parent=5 // pred_fallthru
        _
      %p211 = scmp.le.s32.totalorder 1, %s13
      %p212 = scmp.lt.s32.totalorder %s13, 5
      %p213 = pnand %p211, %p212
      %p214 = pneg %p213
      // Predicated region
      $region37: #{voxel_feature_encoding_forward.3} parent=5 // pred_check
        _
      $region38: #{voxel_feature_encoding_forward.3} parent=5 // pred_check_branch
        %216 = sbr.rel (%p213) target = $region40
      $region39: #{voxel_feature_encoding_forward.3} parent=5 // pred_region
        %s217 = ssub.s32 %s13, 1
        // Predicated region
        $region41: #{voxel_feature_encoding_forward.3} parent=39 // pred_check
          %p218 = pneg %p60
        $region42: #{voxel_feature_encoding_forward.3} parent=39 // pred_check_branch
          %220 = sbr.rel (%p218) target = $region44
        $region43: #{voxel_feature_encoding_forward.3} parent=39 // pred_region
          %222 = dma.done [#allocation3], 768
        $region44: #{voxel_feature_encoding_forward.3} parent=39 // pred_fallthru
          _
        // Predicated region
        $region45: #{voxel_feature_encoding_forward.3} parent=39 // pred_check
          %p223 = pneg %p81
        $region46: #{voxel_feature_encoding_forward.3} parent=39 // pred_check_branch
          %225 = sbr.rel (%p223) target = $region48
        $region47: #{voxel_feature_encoding_forward.3} parent=39 // pred_region
          %227 = dma.done [#allocation5], 768
        $region48: #{voxel_feature_encoding_forward.3} parent=39 // pred_fallthru
          _
        %s228 = smul.u32 32, %s18
        %p229 = scmp.lt.s32.totalorder %s228, 127
        %s230 = scalar_select %p229, %s228, 127
        %s231 = smul.addr %s230, 8
        %s232 = scalar_lea.vmem %s0, %s231
        %p233 = pneg %p39
        %p234 = pneg %p36
        %p235 = pneg %p60
        %p236 = pneg %p57
        %p237 = pneg %p81
        %p238 = pneg %p78
        %p239 = pneg %p102
        %p240 = pneg %p99
        %p241 = pneg %p123
        %p242 = pneg %p120
        %p243 = pneg %p149
        %p244 = pneg %p146
        %s245 = smul.u32 32, %s18
        %p246 = scmp.lt.s32.totalorder %s245, 127
        %s247 = scalar_select %p246, %s245, 127
        %s248 = smul.addr %s247, 3
        %s249 = smul.addr %s248, 8
        %s250 = scalar_lea.vmem %s5, %s249
        %s251 = smul.u32 32, %s18
        %p252 = scmp.lt.s32.totalorder %s251, 127
        %s253 = scalar_select %p252, %s251, 127
        %s254 = smul.addr %s253, 8
        %s255 = scalar_lea.vmem %s0, %s254
        %s256 = smul.u32 32, %s18
        %s257 = smul.u32 32, %s18
        %p258 = scmp.lt.s32.totalorder %s257, 127
        %s259 = scalar_select %p258, %s257, 127
        %s260 = smul.addr %s259, 3
        %s261 = smul.addr %s260, 8
        %s262 = scalar_lea.vmem %s5, %s261
        %s263 = smul.u32 32, %s18
        %v264 = vld [vmem:[%s255] sm:$0xff]
        %v265 = vld [vmem:[%s255 + $0x8] sm:$0xff]
        %v266 = vld [vmem:[%s255 + $0x10] sm:$0xff]
        %v267 = vld [vmem:[%s255 + $0x18] sm:$0xff]
        %v268 = vld [vmem:[%s255 + $0x20] sm:$0xff]
        %v269 = vld [vmem:[%s255 + $0x28] sm:$0xff]
        %v270 = vld [vmem:[%s255 + $0x30] sm:$0xff]
        %v271 = vld [vmem:[%s255 + $0x38] sm:$0xff]
        %v272 = vld [vmem:[%s255 + $0x40] sm:$0xff]
        %v273 = vld [vmem:[%s255 + $0x48] sm:$0xff]
        %v274 = vld [vmem:[%s255 + $0x50] sm:$0xff]
        %v275 = vld [vmem:[%s255 + $0x58] sm:$0xff]
        %v276 = vld [vmem:[%s255 + $0x60] sm:$0xff]
        %v277 = vld [vmem:[%s255 + $0x68] sm:$0xff]
        %v278 = vld [vmem:[%s255 + $0x70] sm:$0xff]
        %v279 = vld [vmem:[%s255 + $0x78] sm:$0xff]
        %v280 = vld [vmem:[%s255 + $0x80] sm:$0xff]
        %v281 = vld [vmem:[%s255 + $0x88] sm:$0xff]
        %v282 = vld [vmem:[%s255 + $0x90] sm:$0xff]
        %v283 = vld [vmem:[%s255 + $0x98] sm:$0xff]
        %v284 = vld [vmem:[%s255 + $0xa0] sm:$0xff]
        %v285 = vld [vmem:[%s255 + $0xa8] sm:$0xff]
        %v286 = vld [vmem:[%s255 + $0xb0] sm:$0xff]
        %v287 = vld [vmem:[%s255 + $0xb8] sm:$0xff]
        %v288 = vld [vmem:[%s255 + $0xc0] sm:$0xff]
        %v289 = vld [vmem:[%s255 + $0xc8] sm:$0xff]
        %v290 = vld [vmem:[%s255 + $0xd0] sm:$0xff]
        %v291 = vld [vmem:[%s255 + $0xd8] sm:$0xff]
        %v292 = vld [vmem:[%s255 + $0xe0] sm:$0xff]
        %v293 = vld [vmem:[%s255 + $0xe8] sm:$0xff]
        %v294 = vld [vmem:[%s255 + $0xf0] sm:$0xff]
        %v295 = vld [vmem:[%s255 + $0xf8] sm:$0xff]
        %v296 = vld [vmem:[#allocation2] sm:$0xff]
        %v297 = vld [vmem:[#allocation2 + $0x8] sm:$0xff]
        %v298 = vld [vmem:[#allocation2 + $0x10] sm:$0xff]
        %v299 = vld [vmem:[#allocation2 + $0x18] sm:$0xff]
        %v300 = vld [vmem:[#allocation2 + $0x20] sm:$0xff]
        %v301 = vld [vmem:[#allocation2 + $0x28] sm:$0xff]
        %v302 = vld [vmem:[#allocation4] sm:$0xff]
        %v303 = vld [vmem:[#allocation4 + $0x8] sm:$0xff]
        %v304 = vld [vmem:[#allocation4 + $0x10] sm:$0xff]
        %v305 = vld [vmem:[#allocation4 + $0x18] sm:$0xff]
        %v306 = vld [vmem:[#allocation4 + $0x20] sm:$0xff]
        %v307 = vld [vmem:[#allocation4 + $0x28] sm:$0xff]
        %v308 = vld [vmem:[%s3] sm:$0xff]
        %v309 = vld [vmem:[%s3 + $0x8] sm:$0xff]
        %vm310 = vcmask 130048
        %v312 = vsel %vm310, %v264, 0
        %v315 = vsel %vm310, %v265, 0
        %v318 = vsel %vm310, %v266, 0
        %v321 = vsel %vm310, %v267, 0
        %v324 = vsel %vm310, %v268, 0
        %v327 = vsel %vm310, %v269, 0
        %v330 = vsel %vm310, %v270, 0
        %v333 = vsel %vm310, %v271, 0
        %v336 = vsel %vm310, %v272, 0
        %v339 = vsel %vm310, %v273, 0
        %v342 = vsel %vm310, %v274, 0
        %v345 = vsel %vm310, %v275, 0
        %v348 = vsel %vm310, %v276, 0
        %v351 = vsel %vm310, %v277, 0
        %v354 = vsel %vm310, %v278, 0
        %v357 = vsel %vm310, %v279, 0
        %v360 = vsel %vm310, %v280, 0
        %v363 = vsel %vm310, %v281, 0
        %v366 = vsel %vm310, %v282, 0
        %v369 = vsel %vm310, %v283, 0
        %v372 = vsel %vm310, %v284, 0
        %v375 = vsel %vm310, %v285, 0
        %v378 = vsel %vm310, %v286, 0
        %v381 = vsel %vm310, %v287, 0
        %v384 = vsel %vm310, %v288, 0
        %v387 = vsel %vm310, %v289, 0
        %v390 = vsel %vm310, %v290, 0
        %v393 = vsel %vm310, %v291, 0
        %v396 = vsel %vm310, %v292, 0
        %v399 = vsel %vm310, %v293, 0
        %v402 = vsel %vm310, %v294, 0
        %v405 = vsel %vm310, %v295, 0
        %407 = vmatpush.msra.mxu0 0.0
        %408 = vmatpush.msra.mxu0 0.0
        %409 = vmatpush.msra.mxu0 0.0
        %410 = vmatpush.msra.mxu0 0.0
        %411 = vmatpush.msra.mxu0 0.0
        %412 = vmatpush.msra.mxu0 0.0
        %413 = vmatpush.msra.mxu0 0.0
        %414 = vmatpush.msra.mxu0 0.0
        %415 = vmatpush.msra.mxu0 0.0
        %416 = vmatpush.msra.mxu0 0.0
        %417 = vmatpush.msra.mxu0 0.0
        %418 = vmatpush.msra.mxu0 0.0
        %419 = vmatpush.msra.mxu0 0.0
        %420 = vmatpush.msra.mxu0 0.0
        %421 = vmatpush.msra.mxu0 %v309
        %422 = vmatpush.msra.mxu0 %v308
        %423 = vmatmul.f32.gmra.mxu0 %v312
        %v424 = vpop.f32.mrf.mxu0
        %v425 = vadd.f32 0.0, %v424
        %426 = vmatmul.f32.gmra.mxu0 %v315
        %v427 = vpop.f32.mrf.mxu0
        %v428 = vadd.f32 0.0, %v427
        %429 = vmatmul.f32.gmra.mxu0 %v318
        %v430 = vpop.f32.mrf.mxu0
        %v431 = vadd.f32 0.0, %v430
        %432 = vmatmul.f32.gmra.mxu0 %v321
        %v433 = vpop.f32.mrf.mxu0
        %v434 = vadd.f32 0.0, %v433
        %435 = vmatmul.f32.gmra.mxu0 %v324
        %v436 = vpop.f32.mrf.mxu0
        %v437 = vadd.f32 0.0, %v436
        %438 = vmatmul.f32.gmra.mxu0 %v327
        %v439 = vpop.f32.mrf.mxu0
        %v440 = vadd.f32 0.0, %v439
        %441 = vmatmul.f32.gmra.mxu0 %v330
        %v442 = vpop.f32.mrf.mxu0
        %v443 = vadd.f32 0.0, %v442
        %444 = vmatmul.f32.gmra.mxu0 %v333
        %v445 = vpop.f32.mrf.mxu0
        %v446 = vadd.f32 0.0, %v445
        %447 = vmatmul.f32.gmra.mxu0 %v336
        %v448 = vpop.f32.mrf.mxu0
        %v449 = vadd.f32 0.0, %v448
        %450 = vmatmul.f32.gmra.mxu0 %v339
        %v451 = vpop.f32.mrf.mxu0
        %v452 = vadd.f32 0.0, %v451
        %453 = vmatmul.f32.gmra.mxu0 %v342
        %v454 = vpop.f32.mrf.mxu0
        %v455 = vadd.f32 0.0, %v454
        %456 = vmatmul.f32.gmra.mxu0 %v345
        %v457 = vpop.f32.mrf.mxu0
        %v458 = vadd.f32 0.0, %v457
        %459 = vmatmul.f32.gmra.mxu0 %v348
        %v460 = vpop.f32.mrf.mxu0
        %v461 = vadd.f32 0.0, %v460
        %462 = vmatmul.f32.gmra.mxu0 %v351
        %v463 = vpop.f32.mrf.mxu0
        %v464 = vadd.f32 0.0, %v463
        %465 = vmatmul.f32.gmra.mxu0 %v354
        %v466 = vpop.f32.mrf.mxu0
        %v467 = vadd.f32 0.0, %v466
        %468 = vmatmul.f32.gmra.mxu0 %v357
        %v469 = vpop.f32.mrf.mxu0
        %v470 = vadd.f32 0.0, %v469
        %471 = vmatmul.f32.gmra.mxu0 %v360
        %v472 = vpop.f32.mrf.mxu0
        %v473 = vadd.f32 0.0, %v472
        %474 = vmatmul.f32.gmra.mxu0 %v363
        %v475 = vpop.f32.mrf.mxu0
        %v476 = vadd.f32 0.0, %v475
        %477 = vmatmul.f32.gmra.mxu0 %v366
        %v478 = vpop.f32.mrf.mxu0
        %v479 = vadd.f32 0.0, %v478
        %480 = vmatmul.f32.gmra.mxu0 %v369
        %v481 = vpop.f32.mrf.mxu0
        %v482 = vadd.f32 0.0, %v481
        %483 = vmatmul.f32.gmra.mxu0 %v372
        %v484 = vpop.f32.mrf.mxu0
        %v485 = vadd.f32 0.0, %v484
        %486 = vmatmul.f32.gmra.mxu0 %v375
        %v487 = vpop.f32.mrf.mxu0
        %v488 = vadd.f32 0.0, %v487
        %489 = vmatmul.f32.gmra.mxu0 %v378
        %v490 = vpop.f32.mrf.mxu0
        %v491 = vadd.f32 0.0, %v490
        %492 = vmatmul.f32.gmra.mxu0 %v381
        %v493 = vpop.f32.mrf.mxu0
        %v494 = vadd.f32 0.0, %v493
        %495 = vmatmul.f32.gmra.mxu0 %v384
        %v496 = vpop.f32.mrf.mxu0
        %v497 = vadd.f32 0.0, %v496
        %498 = vmatmul.f32.gmra.mxu0 %v387
        %v499 = vpop.f32.mrf.mxu0
        %v500 = vadd.f32 0.0, %v499
        %501 = vmatmul.f32.gmra.mxu0 %v390
        %v502 = vpop.f32.mrf.mxu0
        %v503 = vadd.f32 0.0, %v502
        %504 = vmatmul.f32.gmra.mxu0 %v393
        %v505 = vpop.f32.mrf.mxu0
        %v506 = vadd.f32 0.0, %v505
        %507 = vmatmul.f32.gmra.mxu0 %v396
        %v508 = vpop.f32.mrf.mxu0
        %v509 = vadd.f32 0.0, %v508
        %510 = vmatmul.f32.gmra.mxu0 %v399
        %v511 = vpop.f32.mrf.mxu0
        %v512 = vadd.f32 0.0, %v511
        %513 = vmatmul.f32.gmra.mxu0 %v402
        %v514 = vpop.f32.mrf.mxu0
        %v515 = vadd.f32 0.0, %v514
        %516 = vmatmul.f32.gmra.mxu0 %v405
        %v517 = vpop.f32.mrf.mxu0
        %v518 = vadd.f32 0.0, %v517
        %519 = vdwg.mxu0
        %vm520 = vcmp.ne.f32.partialorder %v425, 0.0
        %vm521 = vcmp.ne.f32.partialorder %v428, 0.0
        %vm522 = vcmp.ne.f32.partialorder %v431, 0.0
        %vm523 = vcmp.ne.f32.partialorder %v434, 0.0
        %vm524 = vcmp.ne.f32.partialorder %v437, 0.0
        %vm525 = vcmp.ne.f32.partialorder %v440, 0.0
        %vm526 = vcmp.ne.f32.partialorder %v443, 0.0
        %vm527 = vcmp.ne.f32.partialorder %v446, 0.0
        %vm528 = vcmp.ne.f32.partialorder %v449, 0.0
        %vm529 = vcmp.ne.f32.partialorder %v452, 0.0
        %vm530 = vcmp.ne.f32.partialorder %v455, 0.0
        %vm531 = vcmp.ne.f32.partialorder %v458, 0.0
        %vm532 = vcmp.ne.f32.partialorder %v461, 0.0
        %vm533 = vcmp.ne.f32.partialorder %v464, 0.0
        %vm534 = vcmp.ne.f32.partialorder %v467, 0.0
        %vm535 = vcmp.ne.f32.partialorder %v470, 0.0
        %vm536 = vcmp.ne.f32.partialorder %v473, 0.0
        %vm537 = vcmp.ne.f32.partialorder %v476, 0.0
        %vm538 = vcmp.ne.f32.partialorder %v479, 0.0
        %vm539 = vcmp.ne.f32.partialorder %v482, 0.0
        %vm540 = vcmp.ne.f32.partialorder %v485, 0.0
        %vm541 = vcmp.ne.f32.partialorder %v488, 0.0
        %vm542 = vcmp.ne.f32.partialorder %v491, 0.0
        %vm543 = vcmp.ne.f32.partialorder %v494, 0.0
        %vm544 = vcmp.ne.f32.partialorder %v497, 0.0
        %vm545 = vcmp.ne.f32.partialorder %v500, 0.0
        %vm546 = vcmp.ne.f32.partialorder %v503, 0.0
        %vm547 = vcmp.ne.f32.partialorder %v506, 0.0
        %vm548 = vcmp.ne.f32.partialorder %v509, 0.0
        %vm549 = vcmp.ne.f32.partialorder %v512, 0.0
        %vm550 = vcmp.ne.f32.partialorder %v515, 0.0
        %vm551 = vcmp.ne.f32.partialorder %v518, 0.0
        %v552 = vsel %vm520, 1, 0
        %v553 = vsel %vm521, 1, 0
        %v554 = vsel %vm522, 1, 0
        %v555 = vsel %vm523, 1, 0
        %v556 = vsel %vm524, 1, 0
        %v557 = vsel %vm525, 1, 0
        %v558 = vsel %vm526, 1, 0
        %v559 = vsel %vm527, 1, 0
        %v560 = vsel %vm528, 1, 0
        %v561 = vsel %vm529, 1, 0
        %v562 = vsel %vm530, 1, 0
        %v563 = vsel %vm531, 1, 0
        %v564 = vsel %vm532, 1, 0
        %v565 = vsel %vm533, 1, 0
        %v566 = vsel %vm534, 1, 0
        %v567 = vsel %vm535, 1, 0
        %v568 = vsel %vm536, 1, 0
        %v569 = vsel %vm537, 1, 0
        %v570 = vsel %vm538, 1, 0
        %v571 = vsel %vm539, 1, 0
        %v572 = vsel %vm540, 1, 0
        %v573 = vsel %vm541, 1, 0
        %v574 = vsel %vm542, 1, 0
        %v575 = vsel %vm543, 1, 0
        %v576 = vsel %vm544, 1, 0
        %v577 = vsel %vm545, 1, 0
        %v578 = vsel %vm546, 1, 0
        %v579 = vsel %vm547, 1, 0
        %v580 = vsel %vm548, 1, 0
        %v581 = vsel %vm549, 1, 0
        %v582 = vsel %vm550, 1, 0
        %v583 = vsel %vm551, 1, 0
        %v584 = vcvt.s32.f32 %v552
        %v585 = vcvt.s32.f32 %v553
        %v586 = vcvt.s32.f32 %v554
        %v587 = vcvt.s32.f32 %v555
        %v588 = vcvt.s32.f32 %v556
        %v589 = vcvt.s32.f32 %v557
        %v590 = vcvt.s32.f32 %v558
        %v591 = vcvt.s32.f32 %v559
        %v592 = vcvt.s32.f32 %v560
        %v593 = vcvt.s32.f32 %v561
        %v594 = vcvt.s32.f32 %v562
        %v595 = vcvt.s32.f32 %v563
        %v596 = vcvt.s32.f32 %v564
        %v597 = vcvt.s32.f32 %v565
        %v598 = vcvt.s32.f32 %v566
        %v599 = vcvt.s32.f32 %v567
        %v600 = vcvt.s32.f32 %v568
        %v601 = vcvt.s32.f32 %v569
        %v602 = vcvt.s32.f32 %v570
        %v603 = vcvt.s32.f32 %v571
        %v604 = vcvt.s32.f32 %v572
        %v605 = vcvt.s32.f32 %v573
        %v606 = vcvt.s32.f32 %v574
        %v607 = vcvt.s32.f32 %v575
        %v608 = vcvt.s32.f32 %v576
        %v609 = vcvt.s32.f32 %v577
        %v610 = vcvt.s32.f32 %v578
        %v611 = vcvt.s32.f32 %v579
        %v612 = vcvt.s32.f32 %v580
        %v613 = vcvt.s32.f32 %v581
        %v614 = vcvt.s32.f32 %v582
        %v615 = vcvt.s32.f32 %v583
        %vm616 = vcmask 31744
        %v617 = vsel %vm616, %v584, 0.0
        %618 = vadd.xlane.f32.xlu0 %v617
        %v619 = vpop.xlane.xlu0 %618
        %v620 = vsel %vm616, %v585, 0.0
        %621 = vadd.xlane.f32.xlu0 %v620
        %v622 = vpop.xlane.xlu0 %621
        %v623 = vsel %vm616, %v586, 0.0
        %624 = vadd.xlane.f32.xlu0 %v623
        %v625 = vpop.xlane.xlu0 %624
        %v626 = vsel %vm616, %v587, 0.0
        %627 = vadd.xlane.f32.xlu0 %v626
        %v628 = vpop.xlane.xlu0 %627
        %v629 = vsel %vm616, %v588, 0.0
        %630 = vadd.xlane.f32.xlu0 %v629
        %v631 = vpop.xlane.xlu0 %630
        %v632 = vsel %vm616, %v589, 0.0
        %633 = vadd.xlane.f32.xlu0 %v632
        %v634 = vpop.xlane.xlu0 %633
        %v635 = vsel %vm616, %v590, 0.0
        %636 = vadd.xlane.f32.xlu0 %v635
        %v637 = vpop.xlane.xlu0 %636
        %v638 = vsel %vm616, %v591, 0.0
        %639 = vadd.xlane.f32.xlu0 %v638
        %v640 = vpop.xlane.xlu0 %639
        %v641 = vsel %vm616, %v592, 0.0
        %642 = vadd.xlane.f32.xlu0 %v641
        %v643 = vpop.xlane.xlu0 %642
        %v644 = vsel %vm616, %v593, 0.0
        %645 = vadd.xlane.f32.xlu0 %v644
        %v646 = vpop.xlane.xlu0 %645
        %v647 = vsel %vm616, %v594, 0.0
        %648 = vadd.xlane.f32.xlu0 %v647
        %v649 = vpop.xlane.xlu0 %648
        %v650 = vsel %vm616, %v595, 0.0
        %651 = vadd.xlane.f32.xlu0 %v650
        %v652 = vpop.xlane.xlu0 %651
        %v653 = vsel %vm616, %v596, 0.0
        %654 = vadd.xlane.f32.xlu0 %v653
        %v655 = vpop.xlane.xlu0 %654
        %v656 = vsel %vm616, %v597, 0.0
        %657 = vadd.xlane.f32.xlu0 %v656
        %v658 = vpop.xlane.xlu0 %657
        %v659 = vsel %vm616, %v598, 0.0
        %660 = vadd.xlane.f32.xlu0 %v659
        %v661 = vpop.xlane.xlu0 %660
        %v662 = vsel %vm616, %v599, 0.0
        %663 = vadd.xlane.f32.xlu0 %v662
        %v664 = vpop.xlane.xlu0 %663
        %v665 = vsel %vm616, %v600, 0.0
        %666 = vadd.xlane.f32.xlu0 %v665
        %v667 = vpop.xlane.xlu0 %666
        %v668 = vsel %vm616, %v601, 0.0
        %669 = vadd.xlane.f32.xlu0 %v668
        %v670 = vpop.xlane.xlu0 %669
        %v671 = vsel %vm616, %v602, 0.0
        %672 = vadd.xlane.f32.xlu0 %v671
        %v673 = vpop.xlane.xlu0 %672
        %v674 = vsel %vm616, %v603, 0.0
        %675 = vadd.xlane.f32.xlu0 %v674
        %v676 = vpop.xlane.xlu0 %675
        %v677 = vsel %vm616, %v604, 0.0
        %678 = vadd.xlane.f32.xlu0 %v677
        %v679 = vpop.xlane.xlu0 %678
        %v680 = vsel %vm616, %v605, 0.0
        %681 = vadd.xlane.f32.xlu0 %v680
        %v682 = vpop.xlane.xlu0 %681
        %v683 = vsel %vm616, %v606, 0.0
        %684 = vadd.xlane.f32.xlu0 %v683
        %v685 = vpop.xlane.xlu0 %684
        %v686 = vsel %vm616, %v607, 0.0
        %687 = vadd.xlane.f32.xlu0 %v686
        %v688 = vpop.xlane.xlu0 %687
        %v689 = vsel %vm616, %v608, 0.0
        %690 = vadd.xlane.f32.xlu0 %v689
        %v691 = vpop.xlane.xlu0 %690
        %v692 = vsel %vm616, %v609, 0.0
        %693 = vadd.xlane.f32.xlu0 %v692
        %v694 = vpop.xlane.xlu0 %693
        %v695 = vsel %vm616, %v610, 0.0
        %696 = vadd.xlane.f32.xlu0 %v695
        %v697 = vpop.xlane.xlu0 %696
        %v698 = vsel %vm616, %v611, 0.0
        %699 = vadd.xlane.f32.xlu0 %v698
        %v700 = vpop.xlane.xlu0 %699
        %v701 = vsel %vm616, %v612, 0.0
        %702 = vadd.xlane.f32.xlu0 %v701
        %v703 = vpop.xlane.xlu0 %702
        %v704 = vsel %vm616, %v613, 0.0
        %705 = vadd.xlane.f32.xlu0 %v704
        %v706 = vpop.xlane.xlu0 %705
        %v707 = vsel %vm616, %v614, 0.0
        %708 = vadd.xlane.f32.xlu0 %v707
        %v709 = vpop.xlane.xlu0 %708
        %v710 = vsel %vm616, %v615, 0.0
        %711 = vadd.xlane.f32.xlu0 %v710
        %v712 = vpop.xlane.xlu0 %711
        %v713 = vmax.f32 %v619, 1.0
        %v714 = vmax.f32 %v622, 1.0
        %v715 = vmax.f32 %v625, 1.0
        %v716 = vmax.f32 %v628, 1.0
        %v717 = vmax.f32 %v631, 1.0
        %v718 = vmax.f32 %v634, 1.0
        %v719 = vmax.f32 %v637, 1.0
        %v720 = vmax.f32 %v640, 1.0
        %v721 = vmax.f32 %v643, 1.0
        %v722 = vmax.f32 %v646, 1.0
        %v723 = vmax.f32 %v649, 1.0
        %v724 = vmax.f32 %v652, 1.0
        %v725 = vmax.f32 %v655, 1.0
        %v726 = vmax.f32 %v658, 1.0
        %v727 = vmax.f32 %v661, 1.0
        %v728 = vmax.f32 %v664, 1.0
        %v729 = vmax.f32 %v667, 1.0
        %v730 = vmax.f32 %v670, 1.0
        %v731 = vmax.f32 %v673, 1.0
        %v732 = vmax.f32 %v676, 1.0
        %v733 = vmax.f32 %v679, 1.0
        %v734 = vmax.f32 %v682, 1.0
        %v735 = vmax.f32 %v685, 1.0
        %v736 = vmax.f32 %v688, 1.0
        %v737 = vmax.f32 %v691, 1.0
        %v738 = vmax.f32 %v694, 1.0
        %v739 = vmax.f32 %v697, 1.0
        %v740 = vmax.f32 %v700, 1.0
        %v741 = vmax.f32 %v703, 1.0
        %v742 = vmax.f32 %v706, 1.0
        %v743 = vmax.f32 %v709, 1.0
        %v744 = vmax.f32 %v712, 1.0
        %v745 = vrcp.pop %v713
        %v746 = vmul.f32 %v713, %v745
        %v747 = vsub.f32 1.0, %v746
        %v748 = vmul.f32 %v745, %v747
        %v749 = vadd.f32 %v745, %v748
        %vm750 = vweird.f32 %v713
        %vm751 = vweird.f32 %v745
        %vm752 = vmor %vm750, %vm751
        %v753 = vsel %vm752, %v745, %v749
        %v754 = vand.u32 2147483647, %v713
        %vm755 = vcmp.eq.f32.partialorder %v754, 8.507059e+37
        %v756 = vand.u32 %v713, 2147483648
        %v757 = vor.u32 1.1754944e-38, %v756
        %v758 = vsel %vm755, %v757, %v753
        %v759 = vmul.f32 1.0, %v758
        %v760 = vrcp.pop %v714
        %v761 = vmul.f32 %v714, %v760
        %v762 = vsub.f32 1.0, %v761
        %v763 = vmul.f32 %v760, %v762
        %v764 = vadd.f32 %v760, %v763
        %vm765 = vweird.f32 %v714
        %vm766 = vweird.f32 %v760
        %vm767 = vmor %vm765, %vm766
        %v768 = vsel %vm767, %v760, %v764
        %v769 = vand.u32 2147483647, %v714
        %vm770 = vcmp.eq.f32.partialorder %v769, 8.507059e+37
        %v771 = vand.u32 %v714, 2147483648
        %v772 = vor.u32 1.1754944e-38, %v771
        %v773 = vsel %vm770, %v772, %v768
        %v774 = vmul.f32 1.0, %v773
        %v775 = vrcp.pop %v715
        %v776 = vmul.f32 %v715, %v775
        %v777 = vsub.f32 1.0, %v776
        %v778 = vmul.f32 %v775, %v777
        %v779 = vadd.f32 %v775, %v778
        %vm780 = vweird.f32 %v715
        %vm781 = vweird.f32 %v775
        %vm782 = vmor %vm780, %vm781
        %v783 = vsel %vm782, %v775, %v779
        %v784 = vand.u32 2147483647, %v715
        %vm785 = vcmp.eq.f32.partialorder %v784, 8.507059e+37
        %v786 = vand.u32 %v715, 2147483648
        %v787 = vor.u32 1.1754944e-38, %v786
        %v788 = vsel %vm785, %v787, %v783
        %v789 = vmul.f32 1.0, %v788
        %v790 = vrcp.pop %v716
        %v791 = vmul.f32 %v716, %v790
        %v792 = vsub.f32 1.0, %v791
        %v793 = vmul.f32 %v790, %v792
        %v794 = vadd.f32 %v790, %v793
        %vm795 = vweird.f32 %v716
        %vm796 = vweird.f32 %v790
        %vm797 = vmor %vm795, %vm796
        %v798 = vsel %vm797, %v790, %v794
        %v799 = vand.u32 2147483647, %v716
        %vm800 = vcmp.eq.f32.partialorder %v799, 8.507059e+37
        %v801 = vand.u32 %v716, 2147483648
        %v802 = vor.u32 1.1754944e-38, %v801
        %v803 = vsel %vm800, %v802, %v798
        %v804 = vmul.f32 1.0, %v803
        %v805 = vrcp.pop %v717
        %v806 = vmul.f32 %v717, %v805
        %v807 = vsub.f32 1.0, %v806
        %v808 = vmul.f32 %v805, %v807
        %v809 = vadd.f32 %v805, %v808
        %vm810 = vweird.f32 %v717
        %vm811 = vweird.f32 %v805
        %vm812 = vmor %vm810, %vm811
        %v813 = vsel %vm812, %v805, %v809
        %v814 = vand.u32 2147483647, %v717
        %vm815 = vcmp.eq.f32.partialorder %v814, 8.507059e+37
        %v816 = vand.u32 %v717, 2147483648
        %v817 = vor.u32 1.1754944e-38, %v816
        %v818 = vsel %vm815, %v817, %v813
        %v819 = vmul.f32 1.0, %v818
        %v820 = vrcp.pop %v718
        %v821 = vmul.f32 %v718, %v820
        %v822 = vsub.f32 1.0, %v821
        %v823 = vmul.f32 %v820, %v822
        %v824 = vadd.f32 %v820, %v823
        %vm825 = vweird.f32 %v718
        %vm826 = vweird.f32 %v820
        %vm827 = vmor %vm825, %vm826
        %v828 = vsel %vm827, %v820, %v824
        %v829 = vand.u32 2147483647, %v718
        %vm830 = vcmp.eq.f32.partialorder %v829, 8.507059e+37
        %v831 = vand.u32 %v718, 2147483648
        %v832 = vor.u32 1.1754944e-38, %v831
        %v833 = vsel %vm830, %v832, %v828
        %v834 = vmul.f32 1.0, %v833
        %v835 = vrcp.pop %v719
        %v836 = vmul.f32 %v719, %v835
        %v837 = vsub.f32 1.0, %v836
        %v838 = vmul.f32 %v835, %v837
        %v839 = vadd.f32 %v835, %v838
        %vm840 = vweird.f32 %v719
        %vm841 = vweird.f32 %v835
        %vm842 = vmor %vm840, %vm841
        %v843 = vsel %vm842, %v835, %v839
        %v844 = vand.u32 2147483647, %v719
        %vm845 = vcmp.eq.f32.partialorder %v844, 8.507059e+37
        %v846 = vand.u32 %v719, 2147483648
        %v847 = vor.u32 1.1754944e-38, %v846
        %v848 = vsel %vm845, %v847, %v843
        %v849 = vmul.f32 1.0, %v848
        %v850 = vrcp.pop %v720
        %v851 = vmul.f32 %v720, %v850
        %v852 = vsub.f32 1.0, %v851
        %v853 = vmul.f32 %v850, %v852
        %v854 = vadd.f32 %v850, %v853
        %vm855 = vweird.f32 %v720
        %vm856 = vweird.f32 %v850
        %vm857 = vmor %vm855, %vm856
        %v858 = vsel %vm857, %v850, %v854
        %v859 = vand.u32 2147483647, %v720
        %vm860 = vcmp.eq.f32.partialorder %v859, 8.507059e+37
        %v861 = vand.u32 %v720, 2147483648
        %v862 = vor.u32 1.1754944e-38, %v861
        %v863 = vsel %vm860, %v862, %v858
        %v864 = vmul.f32 1.0, %v863
        %v865 = vrcp.pop %v721
        %v866 = vmul.f32 %v721, %v865
        %v867 = vsub.f32 1.0, %v866
        %v868 = vmul.f32 %v865, %v867
        %v869 = vadd.f32 %v865, %v868
        %vm870 = vweird.f32 %v721
        %vm871 = vweird.f32 %v865
        %vm872 = vmor %vm870, %vm871
        %v873 = vsel %vm872, %v865, %v869
        %v874 = vand.u32 2147483647, %v721
        %vm875 = vcmp.eq.f32.partialorder %v874, 8.507059e+37
        %v876 = vand.u32 %v721, 2147483648
        %v877 = vor.u32 1.1754944e-38, %v876
        %v878 = vsel %vm875, %v877, %v873
        %v879 = vmul.f32 1.0, %v878
        %v880 = vrcp.pop %v722
        %v881 = vmul.f32 %v722, %v880
        %v882 = vsub.f32 1.0, %v881
        %v883 = vmul.f32 %v880, %v882
        %v884 = vadd.f32 %v880, %v883
        %vm885 = vweird.f32 %v722
        %vm886 = vweird.f32 %v880
        %vm887 = vmor %vm885, %vm886
        %v888 = vsel %vm887, %v880, %v884
        %v889 = vand.u32 2147483647, %v722
        %vm890 = vcmp.eq.f32.partialorder %v889, 8.507059e+37
        %v891 = vand.u32 %v722, 2147483648
        %v892 = vor.u32 1.1754944e-38, %v891
        %v893 = vsel %vm890, %v892, %v888
        %v894 = vmul.f32 1.0, %v893
        %v895 = vrcp.pop %v723
        %v896 = vmul.f32 %v723, %v895
        %v897 = vsub.f32 1.0, %v896
        %v898 = vmul.f32 %v895, %v897
        %v899 = vadd.f32 %v895, %v898
        %vm900 = vweird.f32 %v723
        %vm901 = vweird.f32 %v895
        %vm902 = vmor %vm900, %vm901
        %v903 = vsel %vm902, %v895, %v899
        %v904 = vand.u32 2147483647, %v723
        %vm905 = vcmp.eq.f32.partialorder %v904, 8.507059e+37
        %v906 = vand.u32 %v723, 2147483648
        %v907 = vor.u32 1.1754944e-38, %v906
        %v908 = vsel %vm905, %v907, %v903
        %v909 = vmul.f32 1.0, %v908
        %v910 = vrcp.pop %v724
        %v911 = vmul.f32 %v724, %v910
        %v912 = vsub.f32 1.0, %v911
        %v913 = vmul.f32 %v910, %v912
        %v914 = vadd.f32 %v910, %v913
        %vm915 = vweird.f32 %v724
        %vm916 = vweird.f32 %v910
        %vm917 = vmor %vm915, %vm916
        %v918 = vsel %vm917, %v910, %v914
        %v919 = vand.u32 2147483647, %v724
        %vm920 = vcmp.eq.f32.partialorder %v919, 8.507059e+37
        %v921 = vand.u32 %v724, 2147483648
        %v922 = vor.u32 1.1754944e-38, %v921
        %v923 = vsel %vm920, %v922, %v918
        %v924 = vmul.f32 1.0, %v923
        %v925 = vrcp.pop %v725
        %v926 = vmul.f32 %v725, %v925
        %v927 = vsub.f32 1.0, %v926
        %v928 = vmul.f32 %v925, %v927
        %v929 = vadd.f32 %v925, %v928
        %vm930 = vweird.f32 %v725
        %vm931 = vweird.f32 %v925
        %vm932 = vmor %vm930, %vm931
        %v933 = vsel %vm932, %v925, %v929
        %v934 = vand.u32 2147483647, %v725
        %vm935 = vcmp.eq.f32.partialorder %v934, 8.507059e+37
        %v936 = vand.u32 %v725, 2147483648
        %v937 = vor.u32 1.1754944e-38, %v936
        %v938 = vsel %vm935, %v937, %v933
        %v939 = vmul.f32 1.0, %v938
        %v940 = vrcp.pop %v726
        %v941 = vmul.f32 %v726, %v940
        %v942 = vsub.f32 1.0, %v941
        %v943 = vmul.f32 %v940, %v942
        %v944 = vadd.f32 %v940, %v943
        %vm945 = vweird.f32 %v726
        %vm946 = vweird.f32 %v940
        %vm947 = vmor %vm945, %vm946
        %v948 = vsel %vm947, %v940, %v944
        %v949 = vand.u32 2147483647, %v726
        %vm950 = vcmp.eq.f32.partialorder %v949, 8.507059e+37
        %v951 = vand.u32 %v726, 2147483648
        %v952 = vor.u32 1.1754944e-38, %v951
        %v953 = vsel %vm950, %v952, %v948
        %v954 = vmul.f32 1.0, %v953
        %v955 = vrcp.pop %v727
        %v956 = vmul.f32 %v727, %v955
        %v957 = vsub.f32 1.0, %v956
        %v958 = vmul.f32 %v955, %v957
        %v959 = vadd.f32 %v955, %v958
        %vm960 = vweird.f32 %v727
        %vm961 = vweird.f32 %v955
        %vm962 = vmor %vm960, %vm961
        %v963 = vsel %vm962, %v955, %v959
        %v964 = vand.u32 2147483647, %v727
        %vm965 = vcmp.eq.f32.partialorder %v964, 8.507059e+37
        %v966 = vand.u32 %v727, 2147483648
        %v967 = vor.u32 1.1754944e-38, %v966
        %v968 = vsel %vm965, %v967, %v963
        %v969 = vmul.f32 1.0, %v968
        %v970 = vrcp.pop %v728
        %v971 = vmul.f32 %v728, %v970
        %v972 = vsub.f32 1.0, %v971
        %v973 = vmul.f32 %v970, %v972
        %v974 = vadd.f32 %v970, %v973
        %vm975 = vweird.f32 %v728
        %vm976 = vweird.f32 %v970
        %vm977 = vmor %vm975, %vm976
        %v978 = vsel %vm977, %v970, %v974
        %v979 = vand.u32 2147483647, %v728
        %vm980 = vcmp.eq.f32.partialorder %v979, 8.507059e+37
        %v981 = vand.u32 %v728, 2147483648
        %v982 = vor.u32 1.1754944e-38, %v981
        %v983 = vsel %vm980, %v982, %v978
        %v984 = vmul.f32 1.0, %v983
        %v985 = vrcp.pop %v729
        %v986 = vmul.f32 %v729, %v985
        %v987 = vsub.f32 1.0, %v986
        %v988 = vmul.f32 %v985, %v987
        %v989 = vadd.f32 %v985, %v988
        %vm990 = vweird.f32 %v729
        %vm991 = vweird.f32 %v985
        %vm992 = vmor %vm990, %vm991
        %v993 = vsel %vm992, %v985, %v989
        %v994 = vand.u32 2147483647, %v729
        %vm995 = vcmp.eq.f32.partialorder %v994, 8.507059e+37
        %v996 = vand.u32 %v729, 2147483648
        %v997 = vor.u32 1.1754944e-38, %v996
        %v998 = vsel %vm995, %v997, %v993
        %v999 = vmul.f32 1.0, %v998
        %v1000 = vrcp.pop %v730
        %v1001 = vmul.f32 %v730, %v1000
        %v1002 = vsub.f32 1.0, %v1001
        %v1003 = vmul.f32 %v1000, %v1002
        %v1004 = vadd.f32 %v1000, %v1003
        %vm1005 = vweird.f32 %v730
        %vm1006 = vweird.f32 %v1000
        %vm1007 = vmor %vm1005, %vm1006
        %v1008 = vsel %vm1007, %v1000, %v1004
        %v1009 = vand.u32 2147483647, %v730
        %vm1010 = vcmp.eq.f32.partialorder %v1009, 8.507059e+37
        %v1011 = vand.u32 %v730, 2147483648
        %v1012 = vor.u32 1.1754944e-38, %v1011
        %v1013 = vsel %vm1010, %v1012, %v1008
        %v1014 = vmul.f32 1.0, %v1013
        %v1015 = vrcp.pop %v731
        %v1016 = vmul.f32 %v731, %v1015
        %v1017 = vsub.f32 1.0, %v1016
        %v1018 = vmul.f32 %v1015, %v1017
        %v1019 = vadd.f32 %v1015, %v1018
        %vm1020 = vweird.f32 %v731
        %vm1021 = vweird.f32 %v1015
        %vm1022 = vmor %vm1020, %vm1021
        %v1023 = vsel %vm1022, %v1015, %v1019
        %v1024 = vand.u32 2147483647, %v731
        %vm1025 = vcmp.eq.f32.partialorder %v1024, 8.507059e+37
        %v1026 = vand.u32 %v731, 2147483648
        %v1027 = vor.u32 1.1754944e-38, %v1026
        %v1028 = vsel %vm1025, %v1027, %v1023
        %v1029 = vmul.f32 1.0, %v1028
        %v1030 = vrcp.pop %v732
        %v1031 = vmul.f32 %v732, %v1030
        %v1032 = vsub.f32 1.0, %v1031
        %v1033 = vmul.f32 %v1030, %v1032
        %v1034 = vadd.f32 %v1030, %v1033
        %vm1035 = vweird.f32 %v732
        %vm1036 = vweird.f32 %v1030
        %vm1037 = vmor %vm1035, %vm1036
        %v1038 = vsel %vm1037, %v1030, %v1034
        %v1039 = vand.u32 2147483647, %v732
        %vm1040 = vcmp.eq.f32.partialorder %v1039, 8.507059e+37
        %v1041 = vand.u32 %v732, 2147483648
        %v1042 = vor.u32 1.1754944e-38, %v1041
        %v1043 = vsel %vm1040, %v1042, %v1038
        %v1044 = vmul.f32 1.0, %v1043
        %v1045 = vrcp.pop %v733
        %v1046 = vmul.f32 %v733, %v1045
        %v1047 = vsub.f32 1.0, %v1046
        %v1048 = vmul.f32 %v1045, %v1047
        %v1049 = vadd.f32 %v1045, %v1048
        %vm1050 = vweird.f32 %v733
        %vm1051 = vweird.f32 %v1045
        %vm1052 = vmor %vm1050, %vm1051
        %v1053 = vsel %vm1052, %v1045, %v1049
        %v1054 = vand.u32 2147483647, %v733
        %vm1055 = vcmp.eq.f32.partialorder %v1054, 8.507059e+37
        %v1056 = vand.u32 %v733, 2147483648
        %v1057 = vor.u32 1.1754944e-38, %v1056
        %v1058 = vsel %vm1055, %v1057, %v1053
        %v1059 = vmul.f32 1.0, %v1058
        %v1060 = vrcp.pop %v734
        %v1061 = vmul.f32 %v734, %v1060
        %v1062 = vsub.f32 1.0, %v1061
        %v1063 = vmul.f32 %v1060, %v1062
        %v1064 = vadd.f32 %v1060, %v1063
        %vm1065 = vweird.f32 %v734
        %vm1066 = vweird.f32 %v1060
        %vm1067 = vmor %vm1065, %vm1066
        %v1068 = vsel %vm1067, %v1060, %v1064
        %v1069 = vand.u32 2147483647, %v734
        %vm1070 = vcmp.eq.f32.partialorder %v1069, 8.507059e+37
        %v1071 = vand.u32 %v734, 2147483648
        %v1072 = vor.u32 1.1754944e-38, %v1071
        %v1073 = vsel %vm1070, %v1072, %v1068
        %v1074 = vmul.f32 1.0, %v1073
        %v1075 = vrcp.pop %v735
        %v1076 = vmul.f32 %v735, %v1075
        %v1077 = vsub.f32 1.0, %v1076
        %v1078 = vmul.f32 %v1075, %v1077
        %v1079 = vadd.f32 %v1075, %v1078
        %vm1080 = vweird.f32 %v735
        %vm1081 = vweird.f32 %v1075
        %vm1082 = vmor %vm1080, %vm1081
        %v1083 = vsel %vm1082, %v1075, %v1079
        %v1084 = vand.u32 2147483647, %v735
        %vm1085 = vcmp.eq.f32.partialorder %v1084, 8.507059e+37
        %v1086 = vand.u32 %v735, 2147483648
        %v1087 = vor.u32 1.1754944e-38, %v1086
        %v1088 = vsel %vm1085, %v1087, %v1083
        %v1089 = vmul.f32 1.0, %v1088
        %v1090 = vrcp.pop %v736
        %v1091 = vmul.f32 %v736, %v1090
        %v1092 = vsub.f32 1.0, %v1091
        %v1093 = vmul.f32 %v1090, %v1092
        %v1094 = vadd.f32 %v1090, %v1093
        %vm1095 = vweird.f32 %v736
        %vm1096 = vweird.f32 %v1090
        %vm1097 = vmor %vm1095, %vm1096
        %v1098 = vsel %vm1097, %v1090, %v1094
        %v1099 = vand.u32 2147483647, %v736
        %vm1100 = vcmp.eq.f32.partialorder %v1099, 8.507059e+37
        %v1101 = vand.u32 %v736, 2147483648
        %v1102 = vor.u32 1.1754944e-38, %v1101
        %v1103 = vsel %vm1100, %v1102, %v1098
        %v1104 = vmul.f32 1.0, %v1103
        %v1105 = vrcp.pop %v737
        %v1106 = vmul.f32 %v737, %v1105
        %v1107 = vsub.f32 1.0, %v1106
        %v1108 = vmul.f32 %v1105, %v1107
        %v1109 = vadd.f32 %v1105, %v1108
        %vm1110 = vweird.f32 %v737
        %vm1111 = vweird.f32 %v1105
        %vm1112 = vmor %vm1110, %vm1111
        %v1113 = vsel %vm1112, %v1105, %v1109
        %v1114 = vand.u32 2147483647, %v737
        %vm1115 = vcmp.eq.f32.partialorder %v1114, 8.507059e+37
        %v1116 = vand.u32 %v737, 2147483648
        %v1117 = vor.u32 1.1754944e-38, %v1116
        %v1118 = vsel %vm1115, %v1117, %v1113
        %v1119 = vmul.f32 1.0, %v1118
        %v1120 = vrcp.pop %v738
        %v1121 = vmul.f32 %v738, %v1120
        %v1122 = vsub.f32 1.0, %v1121
        %v1123 = vmul.f32 %v1120, %v1122
        %v1124 = vadd.f32 %v1120, %v1123
        %vm1125 = vweird.f32 %v738
        %vm1126 = vweird.f32 %v1120
        %vm1127 = vmor %vm1125, %vm1126
        %v1128 = vsel %vm1127, %v1120, %v1124
        %v1129 = vand.u32 2147483647, %v738
        %vm1130 = vcmp.eq.f32.partialorder %v1129, 8.507059e+37
        %v1131 = vand.u32 %v738, 2147483648
        %v1132 = vor.u32 1.1754944e-38, %v1131
        %v1133 = vsel %vm1130, %v1132, %v1128
        %v1134 = vmul.f32 1.0, %v1133
        %v1135 = vrcp.pop %v739
        %v1136 = vmul.f32 %v739, %v1135
        %v1137 = vsub.f32 1.0, %v1136
        %v1138 = vmul.f32 %v1135, %v1137
        %v1139 = vadd.f32 %v1135, %v1138
        %vm1140 = vweird.f32 %v739
        %vm1141 = vweird.f32 %v1135
        %vm1142 = vmor %vm1140, %vm1141
        %v1143 = vsel %vm1142, %v1135, %v1139
        %v1144 = vand.u32 2147483647, %v739
        %vm1145 = vcmp.eq.f32.partialorder %v1144, 8.507059e+37
        %v1146 = vand.u32 %v739, 2147483648
        %v1147 = vor.u32 1.1754944e-38, %v1146
        %v1148 = vsel %vm1145, %v1147, %v1143
        %v1149 = vmul.f32 1.0, %v1148
        %v1150 = vrcp.pop %v740
        %v1151 = vmul.f32 %v740, %v1150
        %v1152 = vsub.f32 1.0, %v1151
        %v1153 = vmul.f32 %v1150, %v1152
        %v1154 = vadd.f32 %v1150, %v1153
        %vm1155 = vweird.f32 %v740
        %vm1156 = vweird.f32 %v1150
        %vm1157 = vmor %vm1155, %vm1156
        %v1158 = vsel %vm1157, %v1150, %v1154
        %v1159 = vand.u32 2147483647, %v740
        %vm1160 = vcmp.eq.f32.partialorder %v1159, 8.507059e+37
        %v1161 = vand.u32 %v740, 2147483648
        %v1162 = vor.u32 1.1754944e-38, %v1161
        %v1163 = vsel %vm1160, %v1162, %v1158
        %v1164 = vmul.f32 1.0, %v1163
        %v1165 = vrcp.pop %v741
        %v1166 = vmul.f32 %v741, %v1165
        %v1167 = vsub.f32 1.0, %v1166
        %v1168 = vmul.f32 %v1165, %v1167
        %v1169 = vadd.f32 %v1165, %v1168
        %vm1170 = vweird.f32 %v741
        %vm1171 = vweird.f32 %v1165
        %vm1172 = vmor %vm1170, %vm1171
        %v1173 = vsel %vm1172, %v1165, %v1169
        %v1174 = vand.u32 2147483647, %v741
        %vm1175 = vcmp.eq.f32.partialorder %v1174, 8.507059e+37
        %v1176 = vand.u32 %v741, 2147483648
        %v1177 = vor.u32 1.1754944e-38, %v1176
        %v1178 = vsel %vm1175, %v1177, %v1173
        %v1179 = vmul.f32 1.0, %v1178
        %v1180 = vrcp.pop %v742
        %v1181 = vmul.f32 %v742, %v1180
        %v1182 = vsub.f32 1.0, %v1181
        %v1183 = vmul.f32 %v1180, %v1182
        %v1184 = vadd.f32 %v1180, %v1183
        %vm1185 = vweird.f32 %v742
        %vm1186 = vweird.f32 %v1180
        %vm1187 = vmor %vm1185, %vm1186
        %v1188 = vsel %vm1187, %v1180, %v1184
        %v1189 = vand.u32 2147483647, %v742
        %vm1190 = vcmp.eq.f32.partialorder %v1189, 8.507059e+37
        %v1191 = vand.u32 %v742, 2147483648
        %v1192 = vor.u32 1.1754944e-38, %v1191
        %v1193 = vsel %vm1190, %v1192, %v1188
        %v1194 = vmul.f32 1.0, %v1193
        %v1195 = vrcp.pop %v743
        %v1196 = vmul.f32 %v743, %v1195
        %v1197 = vsub.f32 1.0, %v1196
        %v1198 = vmul.f32 %v1195, %v1197
        %v1199 = vadd.f32 %v1195, %v1198
        %vm1200 = vweird.f32 %v743
        %vm1201 = vweird.f32 %v1195
        %vm1202 = vmor %vm1200, %vm1201
        %v1203 = vsel %vm1202, %v1195, %v1199
        %v1204 = vand.u32 2147483647, %v743
        %vm1205 = vcmp.eq.f32.partialorder %v1204, 8.507059e+37
        %v1206 = vand.u32 %v743, 2147483648
        %v1207 = vor.u32 1.1754944e-38, %v1206
        %v1208 = vsel %vm1205, %v1207, %v1203
        %v1209 = vmul.f32 1.0, %v1208
        %v1210 = vrcp.pop %v744
        %v1211 = vmul.f32 %v744, %v1210
        %v1212 = vsub.f32 1.0, %v1211
        %v1213 = vmul.f32 %v1210, %v1212
        %v1214 = vadd.f32 %v1210, %v1213
        %vm1215 = vweird.f32 %v744
        %vm1216 = vweird.f32 %v1210
        %vm1217 = vmor %vm1215, %vm1216
        %v1218 = vsel %vm1217, %v1210, %v1214
        %v1219 = vand.u32 2147483647, %v744
        %vm1220 = vcmp.eq.f32.partialorder %v1219, 8.507059e+37
        %v1221 = vand.u32 %v744, 2147483648
        %v1222 = vor.u32 1.1754944e-38, %v1221
        %v1223 = vsel %vm1220, %v1222, %v1218
        %v1224 = vmul.f32 1.0, %v1223
        %1225 = vmatpush.msra.mxu0 0.0
        %1226 = vmatpush.msra.mxu0 0.0
        %1227 = vmatpush.msra.mxu0 0.0
        %1228 = vmatpush.msra.mxu0 0.0
        %1229 = vmatpush.msra.mxu0 0.0
        %1230 = vmatpush.msra.mxu0 0.0
        %1231 = vmatpush.msra.mxu0 0.0
        %1232 = vmatpush.msra.mxu0 0.0
        %1233 = vmatpush.msra.mxu0 0.0
        %1234 = vmatpush.msra.mxu0 0.0
        %1235 = vmatpush.msra.mxu0 0.0
        %1236 = vmatpush.msra.mxu0 0.0
        %1237 = vmatpush.msra.mxu0 0.0
        %1238 = vmatpush.msra.mxu0 0.0
        %1239 = vmatpush.msra.mxu0 %v299
        %1240 = vmatpush.msra.mxu0 %v296
        %1241 = vmatmul.f32.gmra.mxu0 %v312
        %v1242 = vpop.f32.mrf.mxu0
        %v1243 = vadd.f32 0.0, %v1242
        %1244 = vmatmul.f32.gmra.mxu0 %v315
        %v1245 = vpop.f32.mrf.mxu0
        %v1246 = vadd.f32 0.0, %v1245
        %1247 = vmatmul.f32.gmra.mxu0 %v318
        %v1248 = vpop.f32.mrf.mxu0
        %v1249 = vadd.f32 0.0, %v1248
        %1250 = vmatmul.f32.gmra.mxu0 %v321
        %v1251 = vpop.f32.mrf.mxu0
        %v1252 = vadd.f32 0.0, %v1251
        %1253 = vmatmul.f32.gmra.mxu0 %v324
        %v1254 = vpop.f32.mrf.mxu0
        %v1255 = vadd.f32 0.0, %v1254
        %1256 = vmatmul.f32.gmra.mxu0 %v327
        %v1257 = vpop.f32.mrf.mxu0
        %v1258 = vadd.f32 0.0, %v1257
        %1259 = vmatmul.f32.gmra.mxu0 %v330
        %v1260 = vpop.f32.mrf.mxu0
        %v1261 = vadd.f32 0.0, %v1260
        %1262 = vmatmul.f32.gmra.mxu0 %v333
        %v1263 = vpop.f32.mrf.mxu0
        %v1264 = vadd.f32 0.0, %v1263
        %1265 = vmatmul.f32.gmra.mxu0 %v336
        %v1266 = vpop.f32.mrf.mxu0
        %v1267 = vadd.f32 0.0, %v1266
        %1268 = vmatmul.f32.gmra.mxu0 %v339
        %v1269 = vpop.f32.mrf.mxu0
        %v1270 = vadd.f32 0.0, %v1269
        %1271 = vmatmul.f32.gmra.mxu0 %v342
        %v1272 = vpop.f32.mrf.mxu0
        %v1273 = vadd.f32 0.0, %v1272
        %1274 = vmatmul.f32.gmra.mxu0 %v345
        %v1275 = vpop.f32.mrf.mxu0
        %v1276 = vadd.f32 0.0, %v1275
        %1277 = vmatmul.f32.gmra.mxu0 %v348
        %v1278 = vpop.f32.mrf.mxu0
        %v1279 = vadd.f32 0.0, %v1278
        %1280 = vmatmul.f32.gmra.mxu0 %v351
        %v1281 = vpop.f32.mrf.mxu0
        %v1282 = vadd.f32 0.0, %v1281
        %1283 = vmatmul.f32.gmra.mxu0 %v354
        %v1284 = vpop.f32.mrf.mxu0
        %v1285 = vadd.f32 0.0, %v1284
        %1286 = vmatmul.f32.gmra.mxu0 %v357
        %v1287 = vpop.f32.mrf.mxu0
        %v1288 = vadd.f32 0.0, %v1287
        %1289 = vmatmul.f32.gmra.mxu0 %v360
        %v1290 = vpop.f32.mrf.mxu0
        %v1291 = vadd.f32 0.0, %v1290
        %1292 = vmatmul.f32.gmra.mxu0 %v363
        %v1293 = vpop.f32.mrf.mxu0
        %v1294 = vadd.f32 0.0, %v1293
        %1295 = vmatmul.f32.gmra.mxu0 %v366
        %v1296 = vpop.f32.mrf.mxu0
        %v1297 = vadd.f32 0.0, %v1296
        %1298 = vmatmul.f32.gmra.mxu0 %v369
        %v1299 = vpop.f32.mrf.mxu0
        %v1300 = vadd.f32 0.0, %v1299
        %1301 = vmatmul.f32.gmra.mxu0 %v372
        %v1302 = vpop.f32.mrf.mxu0
        %v1303 = vadd.f32 0.0, %v1302
        %1304 = vmatmul.f32.gmra.mxu0 %v375
        %v1305 = vpop.f32.mrf.mxu0
        %v1306 = vadd.f32 0.0, %v1305
        %1307 = vmatmul.f32.gmra.mxu0 %v378
        %v1308 = vpop.f32.mrf.mxu0
        %v1309 = vadd.f32 0.0, %v1308
        %1310 = vmatmul.f32.gmra.mxu0 %v381
        %v1311 = vpop.f32.mrf.mxu0
        %v1312 = vadd.f32 0.0, %v1311
        %1313 = vmatmul.f32.gmra.mxu0 %v384
        %v1314 = vpop.f32.mrf.mxu0
        %v1315 = vadd.f32 0.0, %v1314
        %1316 = vmatmul.f32.gmra.mxu0 %v387
        %v1317 = vpop.f32.mrf.mxu0
        %v1318 = vadd.f32 0.0, %v1317
        %1319 = vmatmul.f32.gmra.mxu0 %v390
        %v1320 = vpop.f32.mrf.mxu0
        %v1321 = vadd.f32 0.0, %v1320
        %1322 = vmatmul.f32.gmra.mxu0 %v393
        %v1323 = vpop.f32.mrf.mxu0
        %v1324 = vadd.f32 0.0, %v1323
        %1325 = vmatmul.f32.gmra.mxu0 %v396
        %v1326 = vpop.f32.mrf.mxu0
        %v1327 = vadd.f32 0.0, %v1326
        %1328 = vmatmul.f32.gmra.mxu0 %v399
        %v1329 = vpop.f32.mrf.mxu0
        %v1330 = vadd.f32 0.0, %v1329
        %1331 = vmatmul.f32.gmra.mxu0 %v402
        %v1332 = vpop.f32.mrf.mxu0
        %v1333 = vadd.f32 0.0, %v1332
        %1334 = vmatmul.f32.gmra.mxu0 %v405
        %v1335 = vpop.f32.mrf.mxu0
        %v1336 = vadd.f32 0.0, %v1335
        %1337 = vdwg.mxu0
        %1338 = vmatpush.msra.mxu0 0.0
        %1339 = vmatpush.msra.mxu0 0.0
        %1340 = vmatpush.msra.mxu0 0.0
        %1341 = vmatpush.msra.mxu0 0.0
        %1342 = vmatpush.msra.mxu0 0.0
        %1343 = vmatpush.msra.mxu0 0.0
        %1344 = vmatpush.msra.mxu0 0.0
        %1345 = vmatpush.msra.mxu0 0.0
        %1346 = vmatpush.msra.mxu0 0.0
        %1347 = vmatpush.msra.mxu0 0.0
        %1348 = vmatpush.msra.mxu0 0.0
        %1349 = vmatpush.msra.mxu0 0.0
        %1350 = vmatpush.msra.mxu0 0.0
        %1351 = vmatpush.msra.mxu0 0.0
        %1352 = vmatpush.msra.mxu0 %v300
        %1353 = vmatpush.msra.mxu0 %v297
        %1354 = vmatmul.f32.gmra.mxu0 %v312
        %v1355 = vpop.f32.mrf.mxu0
        %v1356 = vadd.f32 0.0, %v1355
        %1357 = vmatmul.f32.gmra.mxu0 %v315
        %v1358 = vpop.f32.mrf.mxu0
        %v1359 = vadd.f32 0.0, %v1358
        %1360 = vmatmul.f32.gmra.mxu0 %v318
        %v1361 = vpop.f32.mrf.mxu0
        %v1362 = vadd.f32 0.0, %v1361
        %1363 = vmatmul.f32.gmra.mxu0 %v321
        %v1364 = vpop.f32.mrf.mxu0
        %v1365 = vadd.f32 0.0, %v1364
        %1366 = vmatmul.f32.gmra.mxu0 %v324
        %v1367 = vpop.f32.mrf.mxu0
        %v1368 = vadd.f32 0.0, %v1367
        %1369 = vmatmul.f32.gmra.mxu0 %v327
        %v1370 = vpop.f32.mrf.mxu0
        %v1371 = vadd.f32 0.0, %v1370
        %1372 = vmatmul.f32.gmra.mxu0 %v330
        %v1373 = vpop.f32.mrf.mxu0
        %v1374 = vadd.f32 0.0, %v1373
        %1375 = vmatmul.f32.gmra.mxu0 %v333
        %v1376 = vpop.f32.mrf.mxu0
        %v1377 = vadd.f32 0.0, %v1376
        %1378 = vmatmul.f32.gmra.mxu0 %v336
        %v1379 = vpop.f32.mrf.mxu0
        %v1380 = vadd.f32 0.0, %v1379
        %1381 = vmatmul.f32.gmra.mxu0 %v339
        %v1382 = vpop.f32.mrf.mxu0
        %v1383 = vadd.f32 0.0, %v1382
        %1384 = vmatmul.f32.gmra.mxu0 %v342
        %v1385 = vpop.f32.mrf.mxu0
        %v1386 = vadd.f32 0.0, %v1385
        %1387 = vmatmul.f32.gmra.mxu0 %v345
        %v1388 = vpop.f32.mrf.mxu0
        %v1389 = vadd.f32 0.0, %v1388
        %1390 = vmatmul.f32.gmra.mxu0 %v348
        %v1391 = vpop.f32.mrf.mxu0
        %v1392 = vadd.f32 0.0, %v1391
        %1393 = vmatmul.f32.gmra.mxu0 %v351
        %v1394 = vpop.f32.mrf.mxu0
        %v1395 = vadd.f32 0.0, %v1394
        %1396 = vmatmul.f32.gmra.mxu0 %v354
        %v1397 = vpop.f32.mrf.mxu0
        %v1398 = vadd.f32 0.0, %v1397
        %1399 = vmatmul.f32.gmra.mxu0 %v357
        %v1400 = vpop.f32.mrf.mxu0
        %v1401 = vadd.f32 0.0, %v1400
        %1402 = vmatmul.f32.gmra.mxu0 %v360
        %v1403 = vpop.f32.mrf.mxu0
        %v1404 = vadd.f32 0.0, %v1403
        %1405 = vmatmul.f32.gmra.mxu0 %v363
        %v1406 = vpop.f32.mrf.mxu0
        %v1407 = vadd.f32 0.0, %v1406
        %1408 = vmatmul.f32.gmra.mxu0 %v366
        %v1409 = vpop.f32.mrf.mxu0
        %v1410 = vadd.f32 0.0, %v1409
        %1411 = vmatmul.f32.gmra.mxu0 %v369
        %v1412 = vpop.f32.mrf.mxu0
        %v1413 = vadd.f32 0.0, %v1412
        %1414 = vmatmul.f32.gmra.mxu0 %v372
        %v1415 = vpop.f32.mrf.mxu0
        %v1416 = vadd.f32 0.0, %v1415
        %1417 = vmatmul.f32.gmra.mxu0 %v375
        %v1418 = vpop.f32.mrf.mxu0
        %v1419 = vadd.f32 0.0, %v1418
        %1420 = vmatmul.f32.gmra.mxu0 %v378
        %v1421 = vpop.f32.mrf.mxu0
        %v1422 = vadd.f32 0.0, %v1421
        %1423 = vmatmul.f32.gmra.mxu0 %v381
        %v1424 = vpop.f32.mrf.mxu0
        %v1425 = vadd.f32 0.0, %v1424
        %1426 = vmatmul.f32.gmra.mxu0 %v384
        %v1427 = vpop.f32.mrf.mxu0
        %v1428 = vadd.f32 0.0, %v1427
        %1429 = vmatmul.f32.gmra.mxu0 %v387
        %v1430 = vpop.f32.mrf.mxu0
        %v1431 = vadd.f32 0.0, %v1430
        %1432 = vmatmul.f32.gmra.mxu0 %v390
        %v1433 = vpop.f32.mrf.mxu0
        %v1434 = vadd.f32 0.0, %v1433
        %1435 = vmatmul.f32.gmra.mxu0 %v393
        %v1436 = vpop.f32.mrf.mxu0
        %v1437 = vadd.f32 0.0, %v1436
        %1438 = vmatmul.f32.gmra.mxu0 %v396
        %v1439 = vpop.f32.mrf.mxu0
        %v1440 = vadd.f32 0.0, %v1439
        %1441 = vmatmul.f32.gmra.mxu0 %v399
        %v1442 = vpop.f32.mrf.mxu0
        %v1443 = vadd.f32 0.0, %v1442
        %1444 = vmatmul.f32.gmra.mxu0 %v402
        %v1445 = vpop.f32.mrf.mxu0
        %v1446 = vadd.f32 0.0, %v1445
        %1447 = vmatmul.f32.gmra.mxu0 %v405
        %v1448 = vpop.f32.mrf.mxu0
        %v1449 = vadd.f32 0.0, %v1448
        %1450 = vdwg.mxu0
        %1451 = vmatpush.msra.mxu0 0.0
        %1452 = vmatpush.msra.mxu0 0.0
        %1453 = vmatpush.msra.mxu0 0.0
        %1454 = vmatpush.msra.mxu0 0.0
        %1455 = vmatpush.msra.mxu0 0.0
        %1456 = vmatpush.msra.mxu0 0.0
        %1457 = vmatpush.msra.mxu0 0.0
        %1458 = vmatpush.msra.mxu0 0.0
        %1459 = vmatpush.msra.mxu0 0.0
        %1460 = vmatpush.msra.mxu0 0.0
        %1461 = vmatpush.msra.mxu0 0.0
        %1462 = vmatpush.msra.mxu0 0.0
        %1463 = vmatpush.msra.mxu0 0.0
        %1464 = vmatpush.msra.mxu0 0.0
        %1465 = vmatpush.msra.mxu0 %v301
        %1466 = vmatpush.msra.mxu0 %v298
        %1467 = vmatmul.f32.gmra.mxu0 %v312
        %v1468 = vpop.f32.mrf.mxu0
        %v1469 = vadd.f32 0.0, %v1468
        %1470 = vmatmul.f32.gmra.mxu0 %v315
        %v1471 = vpop.f32.mrf.mxu0
        %v1472 = vadd.f32 0.0, %v1471
        %1473 = vmatmul.f32.gmra.mxu0 %v318
        %v1474 = vpop.f32.mrf.mxu0
        %v1475 = vadd.f32 0.0, %v1474
        %1476 = vmatmul.f32.gmra.mxu0 %v321
        %v1477 = vpop.f32.mrf.mxu0
        %v1478 = vadd.f32 0.0, %v1477
        %1479 = vmatmul.f32.gmra.mxu0 %v324
        %v1480 = vpop.f32.mrf.mxu0
        %v1481 = vadd.f32 0.0, %v1480
        %1482 = vmatmul.f32.gmra.mxu0 %v327
        %v1483 = vpop.f32.mrf.mxu0
        %v1484 = vadd.f32 0.0, %v1483
        %1485 = vmatmul.f32.gmra.mxu0 %v330
        %v1486 = vpop.f32.mrf.mxu0
        %v1487 = vadd.f32 0.0, %v1486
        %1488 = vmatmul.f32.gmra.mxu0 %v333
        %v1489 = vpop.f32.mrf.mxu0
        %v1490 = vadd.f32 0.0, %v1489
        %1491 = vmatmul.f32.gmra.mxu0 %v336
        %v1492 = vpop.f32.mrf.mxu0
        %v1493 = vadd.f32 0.0, %v1492
        %1494 = vmatmul.f32.gmra.mxu0 %v339
        %v1495 = vpop.f32.mrf.mxu0
        %v1496 = vadd.f32 0.0, %v1495
        %1497 = vmatmul.f32.gmra.mxu0 %v342
        %v1498 = vpop.f32.mrf.mxu0
        %v1499 = vadd.f32 0.0, %v1498
        %1500 = vmatmul.f32.gmra.mxu0 %v345
        %v1501 = vpop.f32.mrf.mxu0
        %v1502 = vadd.f32 0.0, %v1501
        %1503 = vmatmul.f32.gmra.mxu0 %v348
        %v1504 = vpop.f32.mrf.mxu0
        %v1505 = vadd.f32 0.0, %v1504
        %1506 = vmatmul.f32.gmra.mxu0 %v351
        %v1507 = vpop.f32.mrf.mxu0
        %v1508 = vadd.f32 0.0, %v1507
        %1509 = vmatmul.f32.gmra.mxu0 %v354
        %v1510 = vpop.f32.mrf.mxu0
        %v1511 = vadd.f32 0.0, %v1510
        %1512 = vmatmul.f32.gmra.mxu0 %v357
        %v1513 = vpop.f32.mrf.mxu0
        %v1514 = vadd.f32 0.0, %v1513
        %1515 = vmatmul.f32.gmra.mxu0 %v360
        %v1516 = vpop.f32.mrf.mxu0
        %v1517 = vadd.f32 0.0, %v1516
        %1518 = vmatmul.f32.gmra.mxu0 %v363
        %v1519 = vpop.f32.mrf.mxu0
        %v1520 = vadd.f32 0.0, %v1519
        %1521 = vmatmul.f32.gmra.mxu0 %v366
        %v1522 = vpop.f32.mrf.mxu0
        %v1523 = vadd.f32 0.0, %v1522
        %1524 = vmatmul.f32.gmra.mxu0 %v369
        %v1525 = vpop.f32.mrf.mxu0
        %v1526 = vadd.f32 0.0, %v1525
        %1527 = vmatmul.f32.gmra.mxu0 %v372
        %v1528 = vpop.f32.mrf.mxu0
        %v1529 = vadd.f32 0.0, %v1528
        %1530 = vmatmul.f32.gmra.mxu0 %v375
        %v1531 = vpop.f32.mrf.mxu0
        %v1532 = vadd.f32 0.0, %v1531
        %1533 = vmatmul.f32.gmra.mxu0 %v378
        %v1534 = vpop.f32.mrf.mxu0
        %v1535 = vadd.f32 0.0, %v1534
        %1536 = vmatmul.f32.gmra.mxu0 %v381
        %v1537 = vpop.f32.mrf.mxu0
        %v1538 = vadd.f32 0.0, %v1537
        %1539 = vmatmul.f32.gmra.mxu0 %v384
        %v1540 = vpop.f32.mrf.mxu0
        %v1541 = vadd.f32 0.0, %v1540
        %1542 = vmatmul.f32.gmra.mxu0 %v387
        %v1543 = vpop.f32.mrf.mxu0
        %v1544 = vadd.f32 0.0, %v1543
        %1545 = vmatmul.f32.gmra.mxu0 %v390
        %v1546 = vpop.f32.mrf.mxu0
        %v1547 = vadd.f32 0.0, %v1546
        %1548 = vmatmul.f32.gmra.mxu0 %v393
        %v1549 = vpop.f32.mrf.mxu0
        %v1550 = vadd.f32 0.0, %v1549
        %1551 = vmatmul.f32.gmra.mxu0 %v396
        %v1552 = vpop.f32.mrf.mxu0
        %v1553 = vadd.f32 0.0, %v1552
        %1554 = vmatmul.f32.gmra.mxu0 %v399
        %v1555 = vpop.f32.mrf.mxu0
        %v1556 = vadd.f32 0.0, %v1555
        %1557 = vmatmul.f32.gmra.mxu0 %v402
        %v1558 = vpop.f32.mrf.mxu0
        %v1559 = vadd.f32 0.0, %v1558
        %1560 = vmatmul.f32.gmra.mxu0 %v405
        %v1561 = vpop.f32.mrf.mxu0
        %v1562 = vadd.f32 0.0, %v1561
        %1563 = vdwg.mxu0
        %1564 = vmatpush.msra.mxu0 0.0
        %1565 = vmatpush.msra.mxu0 0.0
        %1566 = vmatpush.msra.mxu0 0.0
        %1567 = vmatpush.msra.mxu0 0.0
        %1568 = vmatpush.msra.mxu0 0.0
        %1569 = vmatpush.msra.mxu0 0.0
        %1570 = vmatpush.msra.mxu0 0.0
        %1571 = vmatpush.msra.mxu0 0.0
        %1572 = vmatpush.msra.mxu0 0.0
        %1573 = vmatpush.msra.mxu0 0.0
        %1574 = vmatpush.msra.mxu0 0.0
        %1575 = vmatpush.msra.mxu0 0.0
        %1576 = vmatpush.msra.mxu0 0.0
        %1577 = vmatpush.msra.mxu0 0.0
        %1578 = vmatpush.msra.mxu0 %v305
        %1579 = vmatpush.msra.mxu0 %v302
        %1580 = vmatmul.f32.gmra.mxu0 %v312
        %v1581 = vpop.f32.mrf.mxu0
        %v1582 = vadd.f32 0.0, %v1581
        %1583 = vmatmul.f32.gmra.mxu0 %v315
        %v1584 = vpop.f32.mrf.mxu0
        %v1585 = vadd.f32 0.0, %v1584
        %1586 = vmatmul.f32.gmra.mxu0 %v318
        %v1587 = vpop.f32.mrf.mxu0
        %v1588 = vadd.f32 0.0, %v1587
        %1589 = vmatmul.f32.gmra.mxu0 %v321
        %v1590 = vpop.f32.mrf.mxu0
        %v1591 = vadd.f32 0.0, %v1590
        %1592 = vmatmul.f32.gmra.mxu0 %v324
        %v1593 = vpop.f32.mrf.mxu0
        %v1594 = vadd.f32 0.0, %v1593
        %1595 = vmatmul.f32.gmra.mxu0 %v327
        %v1596 = vpop.f32.mrf.mxu0
        %v1597 = vadd.f32 0.0, %v1596
        %1598 = vmatmul.f32.gmra.mxu0 %v330
        %v1599 = vpop.f32.mrf.mxu0
        %v1600 = vadd.f32 0.0, %v1599
        %1601 = vmatmul.f32.gmra.mxu0 %v333
        %v1602 = vpop.f32.mrf.mxu0
        %v1603 = vadd.f32 0.0, %v1602
        %1604 = vmatmul.f32.gmra.mxu0 %v336
        %v1605 = vpop.f32.mrf.mxu0
        %v1606 = vadd.f32 0.0, %v1605
        %1607 = vmatmul.f32.gmra.mxu0 %v339
        %v1608 = vpop.f32.mrf.mxu0
        %v1609 = vadd.f32 0.0, %v1608
        %1610 = vmatmul.f32.gmra.mxu0 %v342
        %v1611 = vpop.f32.mrf.mxu0
        %v1612 = vadd.f32 0.0, %v1611
        %1613 = vmatmul.f32.gmra.mxu0 %v345
        %v1614 = vpop.f32.mrf.mxu0
        %v1615 = vadd.f32 0.0, %v1614
        %1616 = vmatmul.f32.gmra.mxu0 %v348
        %v1617 = vpop.f32.mrf.mxu0
        %v1618 = vadd.f32 0.0, %v1617
        %1619 = vmatmul.f32.gmra.mxu0 %v351
        %v1620 = vpop.f32.mrf.mxu0
        %v1621 = vadd.f32 0.0, %v1620
        %1622 = vmatmul.f32.gmra.mxu0 %v354
        %v1623 = vpop.f32.mrf.mxu0
        %v1624 = vadd.f32 0.0, %v1623
        %1625 = vmatmul.f32.gmra.mxu0 %v357
        %v1626 = vpop.f32.mrf.mxu0
        %v1627 = vadd.f32 0.0, %v1626
        %1628 = vmatmul.f32.gmra.mxu0 %v360
        %v1629 = vpop.f32.mrf.mxu0
        %v1630 = vadd.f32 0.0, %v1629
        %1631 = vmatmul.f32.gmra.mxu0 %v363
        %v1632 = vpop.f32.mrf.mxu0
        %v1633 = vadd.f32 0.0, %v1632
        %1634 = vmatmul.f32.gmra.mxu0 %v366
        %v1635 = vpop.f32.mrf.mxu0
        %v1636 = vadd.f32 0.0, %v1635
        %1637 = vmatmul.f32.gmra.mxu0 %v369
        %v1638 = vpop.f32.mrf.mxu0
        %v1639 = vadd.f32 0.0, %v1638
        %1640 = vmatmul.f32.gmra.mxu0 %v372
        %v1641 = vpop.f32.mrf.mxu0
        %v1642 = vadd.f32 0.0, %v1641
        %1643 = vmatmul.f32.gmra.mxu0 %v375
        %v1644 = vpop.f32.mrf.mxu0
        %v1645 = vadd.f32 0.0, %v1644
        %1646 = vmatmul.f32.gmra.mxu0 %v378
        %v1647 = vpop.f32.mrf.mxu0
        %v1648 = vadd.f32 0.0, %v1647
        %1649 = vmatmul.f32.gmra.mxu0 %v381
        %v1650 = vpop.f32.mrf.mxu0
        %v1651 = vadd.f32 0.0, %v1650
        %1652 = vmatmul.f32.gmra.mxu0 %v384
        %v1653 = vpop.f32.mrf.mxu0
        %v1654 = vadd.f32 0.0, %v1653
        %1655 = vmatmul.f32.gmra.mxu0 %v387
        %v1656 = vpop.f32.mrf.mxu0
        %v1657 = vadd.f32 0.0, %v1656
        %1658 = vmatmul.f32.gmra.mxu0 %v390
        %v1659 = vpop.f32.mrf.mxu0
        %v1660 = vadd.f32 0.0, %v1659
        %1661 = vmatmul.f32.gmra.mxu0 %v393
        %v1662 = vpop.f32.mrf.mxu0
        %v1663 = vadd.f32 0.0, %v1662
        %1664 = vmatmul.f32.gmra.mxu0 %v396
        %v1665 = vpop.f32.mrf.mxu0
        %v1666 = vadd.f32 0.0, %v1665
        %1667 = vmatmul.f32.gmra.mxu0 %v399
        %v1668 = vpop.f32.mrf.mxu0
        %v1669 = vadd.f32 0.0, %v1668
        %1670 = vmatmul.f32.gmra.mxu0 %v402
        %v1671 = vpop.f32.mrf.mxu0
        %v1672 = vadd.f32 0.0, %v1671
        %1673 = vmatmul.f32.gmra.mxu0 %v405
        %v1674 = vpop.f32.mrf.mxu0
        %v1675 = vadd.f32 0.0, %v1674
        %1676 = vdwg.mxu0
        %1677 = vmatpush.msra.mxu0 0.0
        %1678 = vmatpush.msra.mxu0 0.0
        %1679 = vmatpush.msra.mxu0 0.0
        %1680 = vmatpush.msra.mxu0 0.0
        %1681 = vmatpush.msra.mxu0 0.0
        %1682 = vmatpush.msra.mxu0 0.0
        %1683 = vmatpush.msra.mxu0 0.0
        %1684 = vmatpush.msra.mxu0 0.0
        %1685 = vmatpush.msra.mxu0 0.0
        %1686 = vmatpush.msra.mxu0 0.0
        %1687 = vmatpush.msra.mxu0 0.0
        %1688 = vmatpush.msra.mxu0 0.0
        %1689 = vmatpush.msra.mxu0 0.0
        %1690 = vmatpush.msra.mxu0 0.0
        %1691 = vmatpush.msra.mxu0 %v306
        %1692 = vmatpush.msra.mxu0 %v303
        %1693 = vmatmul.f32.gmra.mxu0 %v312
        %v1694 = vpop.f32.mrf.mxu0
        %v1695 = vadd.f32 0.0, %v1694
        %1696 = vmatmul.f32.gmra.mxu0 %v315
        %v1697 = vpop.f32.mrf.mxu0
        %v1698 = vadd.f32 0.0, %v1697
        %1699 = vmatmul.f32.gmra.mxu0 %v318
        %v1700 = vpop.f32.mrf.mxu0
        %v1701 = vadd.f32 0.0, %v1700
        %1702 = vmatmul.f32.gmra.mxu0 %v321
        %v1703 = vpop.f32.mrf.mxu0
        %v1704 = vadd.f32 0.0, %v1703
        %1705 = vmatmul.f32.gmra.mxu0 %v324
        %v1706 = vpop.f32.mrf.mxu0
        %v1707 = vadd.f32 0.0, %v1706
        %1708 = vmatmul.f32.gmra.mxu0 %v327
        %v1709 = vpop.f32.mrf.mxu0
        %v1710 = vadd.f32 0.0, %v1709
        %1711 = vmatmul.f32.gmra.mxu0 %v330
        %v1712 = vpop.f32.mrf.mxu0
        %v1713 = vadd.f32 0.0, %v1712
        %1714 = vmatmul.f32.gmra.mxu0 %v333
        %v1715 = vpop.f32.mrf.mxu0
        %v1716 = vadd.f32 0.0, %v1715
        %1717 = vmatmul.f32.gmra.mxu0 %v336
        %v1718 = vpop.f32.mrf.mxu0
        %v1719 = vadd.f32 0.0, %v1718
        %1720 = vmatmul.f32.gmra.mxu0 %v339
        %v1721 = vpop.f32.mrf.mxu0
        %v1722 = vadd.f32 0.0, %v1721
        %1723 = vmatmul.f32.gmra.mxu0 %v342
        %v1724 = vpop.f32.mrf.mxu0
        %v1725 = vadd.f32 0.0, %v1724
        %1726 = vmatmul.f32.gmra.mxu0 %v345
        %v1727 = vpop.f32.mrf.mxu0
        %v1728 = vadd.f32 0.0, %v1727
        %1729 = vmatmul.f32.gmra.mxu0 %v348
        %v1730 = vpop.f32.mrf.mxu0
        %v1731 = vadd.f32 0.0, %v1730
        %1732 = vmatmul.f32.gmra.mxu0 %v351
        %v1733 = vpop.f32.mrf.mxu0
        %v1734 = vadd.f32 0.0, %v1733
        %1735 = vmatmul.f32.gmra.mxu0 %v354
        %v1736 = vpop.f32.mrf.mxu0
        %v1737 = vadd.f32 0.0, %v1736
        %1738 = vmatmul.f32.gmra.mxu0 %v357
        %v1739 = vpop.f32.mrf.mxu0
        %v1740 = vadd.f32 0.0, %v1739
        %1741 = vmatmul.f32.gmra.mxu0 %v360
        %v1742 = vpop.f32.mrf.mxu0
        %v1743 = vadd.f32 0.0, %v1742
        %1744 = vmatmul.f32.gmra.mxu0 %v363
        %v1745 = vpop.f32.mrf.mxu0
        %v1746 = vadd.f32 0.0, %v1745
        %1747 = vmatmul.f32.gmra.mxu0 %v366
        %v1748 = vpop.f32.mrf.mxu0
        %v1749 = vadd.f32 0.0, %v1748
        %1750 = vmatmul.f32.gmra.mxu0 %v369
        %v1751 = vpop.f32.mrf.mxu0
        %v1752 = vadd.f32 0.0, %v1751
        %1753 = vmatmul.f32.gmra.mxu0 %v372
        %v1754 = vpop.f32.mrf.mxu0
        %v1755 = vadd.f32 0.0, %v1754
        %1756 = vmatmul.f32.gmra.mxu0 %v375
        %v1757 = vpop.f32.mrf.mxu0
        %v1758 = vadd.f32 0.0, %v1757
        %1759 = vmatmul.f32.gmra.mxu0 %v378
        %v1760 = vpop.f32.mrf.mxu0
        %v1761 = vadd.f32 0.0, %v1760
        %1762 = vmatmul.f32.gmra.mxu0 %v381
        %v1763 = vpop.f32.mrf.mxu0
        %v1764 = vadd.f32 0.0, %v1763
        %1765 = vmatmul.f32.gmra.mxu0 %v384
        %v1766 = vpop.f32.mrf.mxu0
        %v1767 = vadd.f32 0.0, %v1766
        %1768 = vmatmul.f32.gmra.mxu0 %v387
        %v1769 = vpop.f32.mrf.mxu0
        %v1770 = vadd.f32 0.0, %v1769
        %1771 = vmatmul.f32.gmra.mxu0 %v390
        %v1772 = vpop.f32.mrf.mxu0
        %v1773 = vadd.f32 0.0, %v1772
        %1774 = vmatmul.f32.gmra.mxu0 %v393
        %v1775 = vpop.f32.mrf.mxu0
        %v1776 = vadd.f32 0.0, %v1775
        %1777 = vmatmul.f32.gmra.mxu0 %v396
        %v1778 = vpop.f32.mrf.mxu0
        %v1779 = vadd.f32 0.0, %v1778
        %1780 = vmatmul.f32.gmra.mxu0 %v399
        %v1781 = vpop.f32.mrf.mxu0
        %v1782 = vadd.f32 0.0, %v1781
        %1783 = vmatmul.f32.gmra.mxu0 %v402
        %v1784 = vpop.f32.mrf.mxu0
        %v1785 = vadd.f32 0.0, %v1784
        %1786 = vmatmul.f32.gmra.mxu0 %v405
        %v1787 = vpop.f32.mrf.mxu0
        %v1788 = vadd.f32 0.0, %v1787
        %1789 = vdwg.mxu0
        %1790 = vmatpush.msra.mxu0 0.0
        %1791 = vmatpush.msra.mxu0 0.0
        %1792 = vmatpush.msra.mxu0 0.0
        %1793 = vmatpush.msra.mxu0 0.0
        %1794 = vmatpush.msra.mxu0 0.0
        %1795 = vmatpush.msra.mxu0 0.0
        %1796 = vmatpush.msra.mxu0 0.0
        %1797 = vmatpush.msra.mxu0 0.0
        %1798 = vmatpush.msra.mxu0 0.0
        %1799 = vmatpush.msra.mxu0 0.0
        %1800 = vmatpush.msra.mxu0 0.0
        %1801 = vmatpush.msra.mxu0 0.0
        %1802 = vmatpush.msra.mxu0 0.0
        %1803 = vmatpush.msra.mxu0 0.0
        %1804 = vmatpush.msra.mxu0 %v307
        %1805 = vmatpush.msra.mxu0 %v304
        %1806 = vmatmul.f32.gmra.mxu0 %v312
        %v1807 = vpop.f32.mrf.mxu0
        %v1808 = vadd.f32 0.0, %v1807
        %1809 = vmatmul.f32.gmra.mxu0 %v315
        %v1810 = vpop.f32.mrf.mxu0
        %v1811 = vadd.f32 0.0, %v1810
        %1812 = vmatmul.f32.gmra.mxu0 %v318
        %v1813 = vpop.f32.mrf.mxu0
        %v1814 = vadd.f32 0.0, %v1813
        %1815 = vmatmul.f32.gmra.mxu0 %v321
        %v1816 = vpop.f32.mrf.mxu0
        %v1817 = vadd.f32 0.0, %v1816
        %1818 = vmatmul.f32.gmra.mxu0 %v324
        %v1819 = vpop.f32.mrf.mxu0
        %v1820 = vadd.f32 0.0, %v1819
        %1821 = vmatmul.f32.gmra.mxu0 %v327
        %v1822 = vpop.f32.mrf.mxu0
        %v1823 = vadd.f32 0.0, %v1822
        %1824 = vmatmul.f32.gmra.mxu0 %v330
        %v1825 = vpop.f32.mrf.mxu0
        %v1826 = vadd.f32 0.0, %v1825
        %1827 = vmatmul.f32.gmra.mxu0 %v333
        %v1828 = vpop.f32.mrf.mxu0
        %v1829 = vadd.f32 0.0, %v1828
        %1830 = vmatmul.f32.gmra.mxu0 %v336
        %v1831 = vpop.f32.mrf.mxu0
        %v1832 = vadd.f32 0.0, %v1831
        %1833 = vmatmul.f32.gmra.mxu0 %v339
        %v1834 = vpop.f32.mrf.mxu0
        %v1835 = vadd.f32 0.0, %v1834
        %1836 = vmatmul.f32.gmra.mxu0 %v342
        %v1837 = vpop.f32.mrf.mxu0
        %v1838 = vadd.f32 0.0, %v1837
        %1839 = vmatmul.f32.gmra.mxu0 %v345
        %v1840 = vpop.f32.mrf.mxu0
        %v1841 = vadd.f32 0.0, %v1840
        %1842 = vmatmul.f32.gmra.mxu0 %v348
        %v1843 = vpop.f32.mrf.mxu0
        %v1844 = vadd.f32 0.0, %v1843
        %1845 = vmatmul.f32.gmra.mxu0 %v351
        %v1846 = vpop.f32.mrf.mxu0
        %v1847 = vadd.f32 0.0, %v1846
        %1848 = vmatmul.f32.gmra.mxu0 %v354
        %v1849 = vpop.f32.mrf.mxu0
        %v1850 = vadd.f32 0.0, %v1849
        %1851 = vmatmul.f32.gmra.mxu0 %v357
        %v1852 = vpop.f32.mrf.mxu0
        %v1853 = vadd.f32 0.0, %v1852
        %1854 = vmatmul.f32.gmra.mxu0 %v360
        %v1855 = vpop.f32.mrf.mxu0
        %v1856 = vadd.f32 0.0, %v1855
        %1857 = vmatmul.f32.gmra.mxu0 %v363
        %v1858 = vpop.f32.mrf.mxu0
        %v1859 = vadd.f32 0.0, %v1858
        %1860 = vmatmul.f32.gmra.mxu0 %v366
        %v1861 = vpop.f32.mrf.mxu0
        %v1862 = vadd.f32 0.0, %v1861
        %1863 = vmatmul.f32.gmra.mxu0 %v369
        %v1864 = vpop.f32.mrf.mxu0
        %v1865 = vadd.f32 0.0, %v1864
        %1866 = vmatmul.f32.gmra.mxu0 %v372
        %v1867 = vpop.f32.mrf.mxu0
        %v1868 = vadd.f32 0.0, %v1867
        %1869 = vmatmul.f32.gmra.mxu0 %v375
        %v1870 = vpop.f32.mrf.mxu0
        %v1871 = vadd.f32 0.0, %v1870
        %1872 = vmatmul.f32.gmra.mxu0 %v378
        %v1873 = vpop.f32.mrf.mxu0
        %v1874 = vadd.f32 0.0, %v1873
        %1875 = vmatmul.f32.gmra.mxu0 %v381
        %v1876 = vpop.f32.mrf.mxu0
        %v1877 = vadd.f32 0.0, %v1876
        %1878 = vmatmul.f32.gmra.mxu0 %v384
        %v1879 = vpop.f32.mrf.mxu0
        %v1880 = vadd.f32 0.0, %v1879
        %1881 = vmatmul.f32.gmra.mxu0 %v387
        %v1882 = vpop.f32.mrf.mxu0
        %v1883 = vadd.f32 0.0, %v1882
        %1884 = vmatmul.f32.gmra.mxu0 %v390
        %v1885 = vpop.f32.mrf.mxu0
        %v1886 = vadd.f32 0.0, %v1885
        %1887 = vmatmul.f32.gmra.mxu0 %v393
        %v1888 = vpop.f32.mrf.mxu0
        %v1889 = vadd.f32 0.0, %v1888
        %1890 = vmatmul.f32.gmra.mxu0 %v396
        %v1891 = vpop.f32.mrf.mxu0
        %v1892 = vadd.f32 0.0, %v1891
        %1893 = vmatmul.f32.gmra.mxu0 %v399
        %v1894 = vpop.f32.mrf.mxu0
        %v1895 = vadd.f32 0.0, %v1894
        %1896 = vmatmul.f32.gmra.mxu0 %v402
        %v1897 = vpop.f32.mrf.mxu0
        %v1898 = vadd.f32 0.0, %v1897
        %1899 = vmatmul.f32.gmra.mxu0 %v405
        %v1900 = vpop.f32.mrf.mxu0
        %v1901 = vadd.f32 0.0, %v1900
        %1902 = vdwg.mxu0
        %v1903 = vmul.f32 %v759, %v1582
        %v1904 = vmul.f32 %v759, %v1695
        %v1905 = vmul.f32 %v759, %v1808
        %v1906 = vmul.f32 %v774, %v1585
        %v1907 = vmul.f32 %v774, %v1698
        %v1908 = vmul.f32 %v774, %v1811
        %v1909 = vmul.f32 %v789, %v1588
        %v1910 = vmul.f32 %v789, %v1701
        %v1911 = vmul.f32 %v789, %v1814
        %v1912 = vmul.f32 %v804, %v1591
        %v1913 = vmul.f32 %v804, %v1704
        %v1914 = vmul.f32 %v804, %v1817
        %v1915 = vmul.f32 %v819, %v1594
        %v1916 = vmul.f32 %v819, %v1707
        %v1917 = vmul.f32 %v819, %v1820
        %v1918 = vmul.f32 %v834, %v1597
        %v1919 = vmul.f32 %v834, %v1710
        %v1920 = vmul.f32 %v834, %v1823
        %v1921 = vmul.f32 %v849, %v1600
        %v1922 = vmul.f32 %v849, %v1713
        %v1923 = vmul.f32 %v849, %v1826
        %v1924 = vmul.f32 %v864, %v1603
        %v1925 = vmul.f32 %v864, %v1716
        %v1926 = vmul.f32 %v864, %v1829
        %v1927 = vmul.f32 %v879, %v1606
        %v1928 = vmul.f32 %v879, %v1719
        %v1929 = vmul.f32 %v879, %v1832
        %v1930 = vmul.f32 %v894, %v1609
        %v1931 = vmul.f32 %v894, %v1722
        %v1932 = vmul.f32 %v894, %v1835
        %v1933 = vmul.f32 %v909, %v1612
        %v1934 = vmul.f32 %v909, %v1725
        %v1935 = vmul.f32 %v909, %v1838
        %v1936 = vmul.f32 %v924, %v1615
        %v1937 = vmul.f32 %v924, %v1728
        %v1938 = vmul.f32 %v924, %v1841
        %v1939 = vmul.f32 %v939, %v1618
        %v1940 = vmul.f32 %v939, %v1731
        %v1941 = vmul.f32 %v939, %v1844
        %v1942 = vmul.f32 %v954, %v1621
        %v1943 = vmul.f32 %v954, %v1734
        %v1944 = vmul.f32 %v954, %v1847
        %v1945 = vmul.f32 %v969, %v1624
        %v1946 = vmul.f32 %v969, %v1737
        %v1947 = vmul.f32 %v969, %v1850
        %v1948 = vmul.f32 %v984, %v1627
        %v1949 = vmul.f32 %v984, %v1740
        %v1950 = vmul.f32 %v984, %v1853
        %v1951 = vmul.f32 %v999, %v1630
        %v1952 = vmul.f32 %v999, %v1743
        %v1953 = vmul.f32 %v999, %v1856
        %v1954 = vmul.f32 %v1014, %v1633
        %v1955 = vmul.f32 %v1014, %v1746
        %v1956 = vmul.f32 %v1014, %v1859
        %v1957 = vmul.f32 %v1029, %v1636
        %v1958 = vmul.f32 %v1029, %v1749
        %v1959 = vmul.f32 %v1029, %v1862
        %v1960 = vmul.f32 %v1044, %v1639
        %v1961 = vmul.f32 %v1044, %v1752
        %v1962 = vmul.f32 %v1044, %v1865
        %v1963 = vmul.f32 %v1059, %v1642
        %v1964 = vmul.f32 %v1059, %v1755
        %v1965 = vmul.f32 %v1059, %v1868
        %v1966 = vmul.f32 %v1074, %v1645
        %v1967 = vmul.f32 %v1074, %v1758
        %v1968 = vmul.f32 %v1074, %v1871
        %v1969 = vmul.f32 %v1089, %v1648
        %v1970 = vmul.f32 %v1089, %v1761
        %v1971 = vmul.f32 %v1089, %v1874
        %v1972 = vmul.f32 %v1104, %v1651
        %v1973 = vmul.f32 %v1104, %v1764
        %v1974 = vmul.f32 %v1104, %v1877
        %v1975 = vmul.f32 %v1119, %v1654
        %v1976 = vmul.f32 %v1119, %v1767
        %v1977 = vmul.f32 %v1119, %v1880
        %v1978 = vmul.f32 %v1134, %v1657
        %v1979 = vmul.f32 %v1134, %v1770
        %v1980 = vmul.f32 %v1134, %v1883
        %v1981 = vmul.f32 %v1149, %v1660
        %v1982 = vmul.f32 %v1149, %v1773
        %v1983 = vmul.f32 %v1149, %v1886
        %v1984 = vmul.f32 %v1164, %v1663
        %v1985 = vmul.f32 %v1164, %v1776
        %v1986 = vmul.f32 %v1164, %v1889
        %v1987 = vmul.f32 %v1179, %v1666
        %v1988 = vmul.f32 %v1179, %v1779
        %v1989 = vmul.f32 %v1179, %v1892
        %v1990 = vmul.f32 %v1194, %v1669
        %v1991 = vmul.f32 %v1194, %v1782
        %v1992 = vmul.f32 %v1194, %v1895
        %v1993 = vmul.f32 %v1209, %v1672
        %v1994 = vmul.f32 %v1209, %v1785
        %v1995 = vmul.f32 %v1209, %v1898
        %v1996 = vmul.f32 %v1224, %v1675
        %v1997 = vmul.f32 %v1224, %v1788
        %v1998 = vmul.f32 %v1224, %v1901
        %v1999 = vsub.f32 %v1243, %v1903
        %v2000 = vsub.f32 %v1356, %v1904
        %v2001 = vsub.f32 %v1469, %v1905
        %v2002 = vsub.f32 %v1246, %v1906
        %v2003 = vsub.f32 %v1359, %v1907
        %v2004 = vsub.f32 %v1472, %v1908
        %v2005 = vsub.f32 %v1249, %v1909
        %v2006 = vsub.f32 %v1362, %v1910
        %v2007 = vsub.f32 %v1475, %v1911
        %v2008 = vsub.f32 %v1252, %v1912
        %v2009 = vsub.f32 %v1365, %v1913
        %v2010 = vsub.f32 %v1478, %v1914
        %v2011 = vsub.f32 %v1255, %v1915
        %v2012 = vsub.f32 %v1368, %v1916
        %v2013 = vsub.f32 %v1481, %v1917
        %v2014 = vsub.f32 %v1258, %v1918
        %v2015 = vsub.f32 %v1371, %v1919
        %v2016 = vsub.f32 %v1484, %v1920
        %v2017 = vsub.f32 %v1261, %v1921
        %v2018 = vsub.f32 %v1374, %v1922
        %v2019 = vsub.f32 %v1487, %v1923
        %v2020 = vsub.f32 %v1264, %v1924
        %v2021 = vsub.f32 %v1377, %v1925
        %v2022 = vsub.f32 %v1490, %v1926
        %v2023 = vsub.f32 %v1267, %v1927
        %v2024 = vsub.f32 %v1380, %v1928
        %v2025 = vsub.f32 %v1493, %v1929
        %v2026 = vsub.f32 %v1270, %v1930
        %v2027 = vsub.f32 %v1383, %v1931
        %v2028 = vsub.f32 %v1496, %v1932
        %v2029 = vsub.f32 %v1273, %v1933
        %v2030 = vsub.f32 %v1386, %v1934
        %v2031 = vsub.f32 %v1499, %v1935
        %v2032 = vsub.f32 %v1276, %v1936
        %v2033 = vsub.f32 %v1389, %v1937
        %v2034 = vsub.f32 %v1502, %v1938
        %v2035 = vsub.f32 %v1279, %v1939
        %v2036 = vsub.f32 %v1392, %v1940
        %v2037 = vsub.f32 %v1505, %v1941
        %v2038 = vsub.f32 %v1282, %v1942
        %v2039 = vsub.f32 %v1395, %v1943
        %v2040 = vsub.f32 %v1508, %v1944
        %v2041 = vsub.f32 %v1285, %v1945
        %v2042 = vsub.f32 %v1398, %v1946
        %v2043 = vsub.f32 %v1511, %v1947
        %v2044 = vsub.f32 %v1288, %v1948
        %v2045 = vsub.f32 %v1401, %v1949
        %v2046 = vsub.f32 %v1514, %v1950
        %v2047 = vsub.f32 %v1291, %v1951
        %v2048 = vsub.f32 %v1404, %v1952
        %v2049 = vsub.f32 %v1517, %v1953
        %v2050 = vsub.f32 %v1294, %v1954
        %v2051 = vsub.f32 %v1407, %v1955
        %v2052 = vsub.f32 %v1520, %v1956
        %v2053 = vsub.f32 %v1297, %v1957
        %v2054 = vsub.f32 %v1410, %v1958
        %v2055 = vsub.f32 %v1523, %v1959
        %v2056 = vsub.f32 %v1300, %v1960
        %v2057 = vsub.f32 %v1413, %v1961
        %v2058 = vsub.f32 %v1526, %v1962
        %v2059 = vsub.f32 %v1303, %v1963
        %v2060 = vsub.f32 %v1416, %v1964
        %v2061 = vsub.f32 %v1529, %v1965
        %v2062 = vsub.f32 %v1306, %v1966
        %v2063 = vsub.f32 %v1419, %v1967
        %v2064 = vsub.f32 %v1532, %v1968
        %v2065 = vsub.f32 %v1309, %v1969
        %v2066 = vsub.f32 %v1422, %v1970
        %v2067 = vsub.f32 %v1535, %v1971
        %v2068 = vsub.f32 %v1312, %v1972
        %v2069 = vsub.f32 %v1425, %v1973
        %v2070 = vsub.f32 %v1538, %v1974
        %v2071 = vsub.f32 %v1315, %v1975
        %v2072 = vsub.f32 %v1428, %v1976
        %v2073 = vsub.f32 %v1541, %v1977
        %v2074 = vsub.f32 %v1318, %v1978
        %v2075 = vsub.f32 %v1431, %v1979
        %v2076 = vsub.f32 %v1544, %v1980
        %v2077 = vsub.f32 %v1321, %v1981
        %v2078 = vsub.f32 %v1434, %v1982
        %v2079 = vsub.f32 %v1547, %v1983
        %v2080 = vsub.f32 %v1324, %v1984
        %v2081 = vsub.f32 %v1437, %v1985
        %v2082 = vsub.f32 %v1550, %v1986
        %v2083 = vsub.f32 %v1327, %v1987
        %v2084 = vsub.f32 %v1440, %v1988
        %v2085 = vsub.f32 %v1553, %v1989
        %v2086 = vsub.f32 %v1330, %v1990
        %v2087 = vsub.f32 %v1443, %v1991
        %v2088 = vsub.f32 %v1556, %v1992
        %v2089 = vsub.f32 %v1333, %v1993
        %v2090 = vsub.f32 %v1446, %v1994
        %v2091 = vsub.f32 %v1559, %v1995
        %v2092 = vsub.f32 %v1336, %v1996
        %v2093 = vsub.f32 %v1449, %v1997
        %v2094 = vsub.f32 %v1562, %v1998
        %v2095 = vld [vmem:[%s4] ss:$2 sm:$0x7]
        %v2097 = vperm.slane %v2095, 0
        %v2098 = vperm.slane %v2095, 1
        %v2099 = vperm.slane %v2095, 2
        %v2103 = vmul.f32 %v1999, %v2097
        %v2104 = vmul.f32 %v2000, %v2098
        %v2105 = vmul.f32 %v2001, %v2099
        %v2106 = vmul.f32 %v2002, %v2097
        %v2107 = vmul.f32 %v2003, %v2098
        %v2108 = vmul.f32 %v2004, %v2099
        %v2109 = vmul.f32 %v2005, %v2097
        %v2110 = vmul.f32 %v2006, %v2098
        %v2111 = vmul.f32 %v2007, %v2099
        %v2112 = vmul.f32 %v2008, %v2097
        %v2113 = vmul.f32 %v2009, %v2098
        %v2114 = vmul.f32 %v2010, %v2099
        %v2115 = vmul.f32 %v2011, %v2097
        %v2116 = vmul.f32 %v2012, %v2098
        %v2117 = vmul.f32 %v2013, %v2099
        %v2118 = vmul.f32 %v2014, %v2097
        %v2119 = vmul.f32 %v2015, %v2098
        %v2120 = vmul.f32 %v2016, %v2099
        %v2121 = vmul.f32 %v2017, %v2097
        %v2122 = vmul.f32 %v2018, %v2098
        %v2123 = vmul.f32 %v2019, %v2099
        %v2124 = vmul.f32 %v2020, %v2097
        %v2125 = vmul.f32 %v2021, %v2098
        %v2126 = vmul.f32 %v2022, %v2099
        %v2127 = vmul.f32 %v2023, %v2097
        %v2128 = vmul.f32 %v2024, %v2098
        %v2129 = vmul.f32 %v2025, %v2099
        %v2130 = vmul.f32 %v2026, %v2097
        %v2131 = vmul.f32 %v2027, %v2098
        %v2132 = vmul.f32 %v2028, %v2099
        %v2133 = vmul.f32 %v2029, %v2097
        %v2134 = vmul.f32 %v2030, %v2098
        %v2135 = vmul.f32 %v2031, %v2099
        %v2136 = vmul.f32 %v2032, %v2097
        %v2137 = vmul.f32 %v2033, %v2098
        %v2138 = vmul.f32 %v2034, %v2099
        %v2139 = vmul.f32 %v2035, %v2097
        %v2140 = vmul.f32 %v2036, %v2098
        %v2141 = vmul.f32 %v2037, %v2099
        %v2142 = vmul.f32 %v2038, %v2097
        %v2143 = vmul.f32 %v2039, %v2098
        %v2144 = vmul.f32 %v2040, %v2099
        %v2145 = vmul.f32 %v2041, %v2097
        %v2146 = vmul.f32 %v2042, %v2098
        %v2147 = vmul.f32 %v2043, %v2099
        %v2148 = vmul.f32 %v2044, %v2097
        %v2149 = vmul.f32 %v2045, %v2098
        %v2150 = vmul.f32 %v2046, %v2099
        %v2151 = vmul.f32 %v2047, %v2097
        %v2152 = vmul.f32 %v2048, %v2098
        %v2153 = vmul.f32 %v2049, %v2099
        %v2154 = vmul.f32 %v2050, %v2097
        %v2155 = vmul.f32 %v2051, %v2098
        %v2156 = vmul.f32 %v2052, %v2099
        %v2157 = vmul.f32 %v2053, %v2097
        %v2158 = vmul.f32 %v2054, %v2098
        %v2159 = vmul.f32 %v2055, %v2099
        %v2160 = vmul.f32 %v2056, %v2097
        %v2161 = vmul.f32 %v2057, %v2098
        %v2162 = vmul.f32 %v2058, %v2099
        %v2163 = vmul.f32 %v2059, %v2097
        %v2164 = vmul.f32 %v2060, %v2098
        %v2165 = vmul.f32 %v2061, %v2099
        %v2166 = vmul.f32 %v2062, %v2097
        %v2167 = vmul.f32 %v2063, %v2098
        %v2168 = vmul.f32 %v2064, %v2099
        %v2169 = vmul.f32 %v2065, %v2097
        %v2170 = vmul.f32 %v2066, %v2098
        %v2171 = vmul.f32 %v2067, %v2099
        %v2172 = vmul.f32 %v2068, %v2097
        %v2173 = vmul.f32 %v2069, %v2098
        %v2174 = vmul.f32 %v2070, %v2099
        %v2175 = vmul.f32 %v2071, %v2097
        %v2176 = vmul.f32 %v2072, %v2098
        %v2177 = vmul.f32 %v2073, %v2099
        %v2178 = vmul.f32 %v2074, %v2097
        %v2179 = vmul.f32 %v2075, %v2098
        %v2180 = vmul.f32 %v2076, %v2099
        %v2181 = vmul.f32 %v2077, %v2097
        %v2182 = vmul.f32 %v2078, %v2098
        %v2183 = vmul.f32 %v2079, %v2099
        %v2184 = vmul.f32 %v2080, %v2097
        %v2185 = vmul.f32 %v2081, %v2098
        %v2186 = vmul.f32 %v2082, %v2099
        %v2187 = vmul.f32 %v2083, %v2097
        %v2188 = vmul.f32 %v2084, %v2098
        %v2189 = vmul.f32 %v2085, %v2099
        %v2190 = vmul.f32 %v2086, %v2097
        %v2191 = vmul.f32 %v2087, %v2098
        %v2192 = vmul.f32 %v2088, %v2099
        %v2193 = vmul.f32 %v2089, %v2097
        %v2194 = vmul.f32 %v2090, %v2098
        %v2195 = vmul.f32 %v2091, %v2099
        %v2196 = vmul.f32 %v2092, %v2097
        %v2197 = vmul.f32 %v2093, %v2098
        %v2198 = vmul.f32 %v2094, %v2099
        %s2199 = scalar_lea.vmem %s4, 1
        %v2200 = vld [vmem:[%s2199] ss:$2 sm:$0x7]
        %v2202 = vperm.slane %v2200, 0
        %v2203 = vperm.slane %v2200, 1
        %v2204 = vperm.slane %v2200, 2
        %v2208 = vadd.f32 %v2103, %v2202
        %v2209 = vadd.f32 %v2104, %v2203
        %v2210 = vadd.f32 %v2105, %v2204
        %v2211 = vadd.f32 %v2106, %v2202
        %v2212 = vadd.f32 %v2107, %v2203
        %v2213 = vadd.f32 %v2108, %v2204
        %v2214 = vadd.f32 %v2109, %v2202
        %v2215 = vadd.f32 %v2110, %v2203
        %v2216 = vadd.f32 %v2111, %v2204
        %v2217 = vadd.f32 %v2112, %v2202
        %v2218 = vadd.f32 %v2113, %v2203
        %v2219 = vadd.f32 %v2114, %v2204
        %v2220 = vadd.f32 %v2115, %v2202
        %v2221 = vadd.f32 %v2116, %v2203
        %v2222 = vadd.f32 %v2117, %v2204
        %v2223 = vadd.f32 %v2118, %v2202
        %v2224 = vadd.f32 %v2119, %v2203
        %v2225 = vadd.f32 %v2120, %v2204
        %v2226 = vadd.f32 %v2121, %v2202
        %v2227 = vadd.f32 %v2122, %v2203
        %v2228 = vadd.f32 %v2123, %v2204
        %v2229 = vadd.f32 %v2124, %v2202
        %v2230 = vadd.f32 %v2125, %v2203
        %v2231 = vadd.f32 %v2126, %v2204
        %v2232 = vadd.f32 %v2127, %v2202
        %v2233 = vadd.f32 %v2128, %v2203
        %v2234 = vadd.f32 %v2129, %v2204
        %v2235 = vadd.f32 %v2130, %v2202
        %v2236 = vadd.f32 %v2131, %v2203
        %v2237 = vadd.f32 %v2132, %v2204
        %v2238 = vadd.f32 %v2133, %v2202
        %v2239 = vadd.f32 %v2134, %v2203
        %v2240 = vadd.f32 %v2135, %v2204
        %v2241 = vadd.f32 %v2136, %v2202
        %v2242 = vadd.f32 %v2137, %v2203
        %v2243 = vadd.f32 %v2138, %v2204
        %v2244 = vadd.f32 %v2139, %v2202
        %v2245 = vadd.f32 %v2140, %v2203
        %v2246 = vadd.f32 %v2141, %v2204
        %v2247 = vadd.f32 %v2142, %v2202
        %v2248 = vadd.f32 %v2143, %v2203
        %v2249 = vadd.f32 %v2144, %v2204
        %v2250 = vadd.f32 %v2145, %v2202
        %v2251 = vadd.f32 %v2146, %v2203
        %v2252 = vadd.f32 %v2147, %v2204
        %v2253 = vadd.f32 %v2148, %v2202
        %v2254 = vadd.f32 %v2149, %v2203
        %v2255 = vadd.f32 %v2150, %v2204
        %v2256 = vadd.f32 %v2151, %v2202
        %v2257 = vadd.f32 %v2152, %v2203
        %v2258 = vadd.f32 %v2153, %v2204
        %v2259 = vadd.f32 %v2154, %v2202
        %v2260 = vadd.f32 %v2155, %v2203
        %v2261 = vadd.f32 %v2156, %v2204
        %v2262 = vadd.f32 %v2157, %v2202
        %v2263 = vadd.f32 %v2158, %v2203
        %v2264 = vadd.f32 %v2159, %v2204
        %v2265 = vadd.f32 %v2160, %v2202
        %v2266 = vadd.f32 %v2161, %v2203
        %v2267 = vadd.f32 %v2162, %v2204
        %v2268 = vadd.f32 %v2163, %v2202
        %v2269 = vadd.f32 %v2164, %v2203
        %v2270 = vadd.f32 %v2165, %v2204
        %v2271 = vadd.f32 %v2166, %v2202
        %v2272 = vadd.f32 %v2167, %v2203
        %v2273 = vadd.f32 %v2168, %v2204
        %v2274 = vadd.f32 %v2169, %v2202
        %v2275 = vadd.f32 %v2170, %v2203
        %v2276 = vadd.f32 %v2171, %v2204
        %v2277 = vadd.f32 %v2172, %v2202
        %v2278 = vadd.f32 %v2173, %v2203
        %v2279 = vadd.f32 %v2174, %v2204
        %v2280 = vadd.f32 %v2175, %v2202
        %v2281 = vadd.f32 %v2176, %v2203
        %v2282 = vadd.f32 %v2177, %v2204
        %v2283 = vadd.f32 %v2178, %v2202
        %v2284 = vadd.f32 %v2179, %v2203
        %v2285 = vadd.f32 %v2180, %v2204
        %v2286 = vadd.f32 %v2181, %v2202
        %v2287 = vadd.f32 %v2182, %v2203
        %v2288 = vadd.f32 %v2183, %v2204
        %v2289 = vadd.f32 %v2184, %v2202
        %v2290 = vadd.f32 %v2185, %v2203
        %v2291 = vadd.f32 %v2186, %v2204
        %v2292 = vadd.f32 %v2187, %v2202
        %v2293 = vadd.f32 %v2188, %v2203
        %v2294 = vadd.f32 %v2189, %v2204
        %v2295 = vadd.f32 %v2190, %v2202
        %v2296 = vadd.f32 %v2191, %v2203
        %v2297 = vadd.f32 %v2192, %v2204
        %v2298 = vadd.f32 %v2193, %v2202
        %v2299 = vadd.f32 %v2194, %v2203
        %v2300 = vadd.f32 %v2195, %v2204
        %v2301 = vadd.f32 %v2196, %v2202
        %v2302 = vadd.f32 %v2197, %v2203
        %v2303 = vadd.f32 %v2198, %v2204
        %v2304 = vmax.f32 %v2208, 0.0
        %v2305 = vmax.f32 %v2209, 0.0
        %v2306 = vmax.f32 %v2210, 0.0
        %v2307 = vmax.f32 %v2211, 0.0
        %v2308 = vmax.f32 %v2212, 0.0
        %v2309 = vmax.f32 %v2213, 0.0
        %v2310 = vmax.f32 %v2214, 0.0
        %v2311 = vmax.f32 %v2215, 0.0
        %v2312 = vmax.f32 %v2216, 0.0
        %v2313 = vmax.f32 %v2217, 0.0
        %v2314 = vmax.f32 %v2218, 0.0
        %v2315 = vmax.f32 %v2219, 0.0
        %v2316 = vmax.f32 %v2220, 0.0
        %v2317 = vmax.f32 %v2221, 0.0
        %v2318 = vmax.f32 %v2222, 0.0
        %v2319 = vmax.f32 %v2223, 0.0
        %v2320 = vmax.f32 %v2224, 0.0
        %v2321 = vmax.f32 %v2225, 0.0
        %v2322 = vmax.f32 %v2226, 0.0
        %v2323 = vmax.f32 %v2227, 0.0
        %v2324 = vmax.f32 %v2228, 0.0
        %v2325 = vmax.f32 %v2229, 0.0
        %v2326 = vmax.f32 %v2230, 0.0
        %v2327 = vmax.f32 %v2231, 0.0
        %v2328 = vmax.f32 %v2232, 0.0
        %v2329 = vmax.f32 %v2233, 0.0
        %v2330 = vmax.f32 %v2234, 0.0
        %v2331 = vmax.f32 %v2235, 0.0
        %v2332 = vmax.f32 %v2236, 0.0
        %v2333 = vmax.f32 %v2237, 0.0
        %v2334 = vmax.f32 %v2238, 0.0
        %v2335 = vmax.f32 %v2239, 0.0
        %v2336 = vmax.f32 %v2240, 0.0
        %v2337 = vmax.f32 %v2241, 0.0
        %v2338 = vmax.f32 %v2242, 0.0
        %v2339 = vmax.f32 %v2243, 0.0
        %v2340 = vmax.f32 %v2244, 0.0
        %v2341 = vmax.f32 %v2245, 0.0
        %v2342 = vmax.f32 %v2246, 0.0
        %v2343 = vmax.f32 %v2247, 0.0
        %v2344 = vmax.f32 %v2248, 0.0
        %v2345 = vmax.f32 %v2249, 0.0
        %v2346 = vmax.f32 %v2250, 0.0
        %v2347 = vmax.f32 %v2251, 0.0
        %v2348 = vmax.f32 %v2252, 0.0
        %v2349 = vmax.f32 %v2253, 0.0
        %v2350 = vmax.f32 %v2254, 0.0
        %v2351 = vmax.f32 %v2255, 0.0
        %v2352 = vmax.f32 %v2256, 0.0
        %v2353 = vmax.f32 %v2257, 0.0
        %v2354 = vmax.f32 %v2258, 0.0
        %v2355 = vmax.f32 %v2259, 0.0
        %v2356 = vmax.f32 %v2260, 0.0
        %v2357 = vmax.f32 %v2261, 0.0
        %v2358 = vmax.f32 %v2262, 0.0
        %v2359 = vmax.f32 %v2263, 0.0
        %v2360 = vmax.f32 %v2264, 0.0
        %v2361 = vmax.f32 %v2265, 0.0
        %v2362 = vmax.f32 %v2266, 0.0
        %v2363 = vmax.f32 %v2267, 0.0
        %v2364 = vmax.f32 %v2268, 0.0
        %v2365 = vmax.f32 %v2269, 0.0
        %v2366 = vmax.f32 %v2270, 0.0
        %v2367 = vmax.f32 %v2271, 0.0
        %v2368 = vmax.f32 %v2272, 0.0
        %v2369 = vmax.f32 %v2273, 0.0
        %v2370 = vmax.f32 %v2274, 0.0
        %v2371 = vmax.f32 %v2275, 0.0
        %v2372 = vmax.f32 %v2276, 0.0
        %v2373 = vmax.f32 %v2277, 0.0
        %v2374 = vmax.f32 %v2278, 0.0
        %v2375 = vmax.f32 %v2279, 0.0
        %v2376 = vmax.f32 %v2280, 0.0
        %v2377 = vmax.f32 %v2281, 0.0
        %v2378 = vmax.f32 %v2282, 0.0
        %v2379 = vmax.f32 %v2283, 0.0
        %v2380 = vmax.f32 %v2284, 0.0
        %v2381 = vmax.f32 %v2285, 0.0
        %v2382 = vmax.f32 %v2286, 0.0
        %v2383 = vmax.f32 %v2287, 0.0
        %v2384 = vmax.f32 %v2288, 0.0
        %v2385 = vmax.f32 %v2289, 0.0
        %v2386 = vmax.f32 %v2290, 0.0
        %v2387 = vmax.f32 %v2291, 0.0
        %v2388 = vmax.f32 %v2292, 0.0
        %v2389 = vmax.f32 %v2293, 0.0
        %v2390 = vmax.f32 %v2294, 0.0
        %v2391 = vmax.f32 %v2295, 0.0
        %v2392 = vmax.f32 %v2296, 0.0
        %v2393 = vmax.f32 %v2297, 0.0
        %v2394 = vmax.f32 %v2298, 0.0
        %v2395 = vmax.f32 %v2299, 0.0
        %v2396 = vmax.f32 %v2300, 0.0
        %v2397 = vmax.f32 %v2301, 0.0
        %v2398 = vmax.f32 %v2302, 0.0
        %v2399 = vmax.f32 %v2303, 0.0
        %2400 = vst [vmem:[%s262] sm:$0xff] %v2304
        %2401 = vst [vmem:[%s262 + $0x8] sm:$0xff] %v2305
        %2402 = vst [vmem:[%s262 + $0x10] sm:$0xff] %v2306
        %2403 = vst [vmem:[%s262 + $0x18] sm:$0xff] %v2307
        %2404 = vst [vmem:[%s262 + $0x20] sm:$0xff] %v2308
        %2405 = vst [vmem:[%s262 + $0x28] sm:$0xff] %v2309
        %2406 = vst [vmem:[%s262 + $0x30] sm:$0xff] %v2310
        %2407 = vst [vmem:[%s262 + $0x38] sm:$0xff] %v2311
        %2408 = vst [vmem:[%s262 + $0x40] sm:$0xff] %v2312
        %2409 = vst [vmem:[%s262 + $0x48] sm:$0xff] %v2313
        %2410 = vst [vmem:[%s262 + $0x50] sm:$0xff] %v2314
        %2411 = vst [vmem:[%s262 + $0x58] sm:$0xff] %v2315
        %2412 = vst [vmem:[%s262 + $0x60] sm:$0xff] %v2316
        %2413 = vst [vmem:[%s262 + $0x68] sm:$0xff] %v2317
        %2414 = vst [vmem:[%s262 + $0x70] sm:$0xff] %v2318
        %2415 = vst [vmem:[%s262 + $0x78] sm:$0xff] %v2319
        %2416 = vst [vmem:[%s262 + $0x80] sm:$0xff] %v2320
        %2417 = vst [vmem:[%s262 + $0x88] sm:$0xff] %v2321
        %2418 = vst [vmem:[%s262 + $0x90] sm:$0xff] %v2322
        %2419 = vst [vmem:[%s262 + $0x98] sm:$0xff] %v2323
        %2420 = vst [vmem:[%s262 + $0xa0] sm:$0xff] %v2324
        %2421 = vst [vmem:[%s262 + $0xa8] sm:$0xff] %v2325
        %2422 = vst [vmem:[%s262 + $0xb0] sm:$0xff] %v2326
        %2423 = vst [vmem:[%s262 + $0xb8] sm:$0xff] %v2327
        %2424 = vst [vmem:[%s262 + $0xc0] sm:$0xff] %v2328
        %2425 = vst [vmem:[%s262 + $0xc8] sm:$0xff] %v2329
        %2426 = vst [vmem:[%s262 + $0xd0] sm:$0xff] %v2330
        %2427 = vst [vmem:[%s262 + $0xd8] sm:$0xff] %v2331
        %2428 = vst [vmem:[%s262 + $0xe0] sm:$0xff] %v2332
        %2429 = vst [vmem:[%s262 + $0xe8] sm:$0xff] %v2333
        %2430 = vst [vmem:[%s262 + $0xf0] sm:$0xff] %v2334
        %2431 = vst [vmem:[%s262 + $0xf8] sm:$0xff] %v2335
        %2432 = vst [vmem:[%s262 + $0x100] sm:$0xff] %v2336
        %2433 = vst [vmem:[%s262 + $0x108] sm:$0xff] %v2337
        %2434 = vst [vmem:[%s262 + $0x110] sm:$0xff] %v2338
        %2435 = vst [vmem:[%s262 + $0x118] sm:$0xff] %v2339
        %2436 = vst [vmem:[%s262 + $0x120] sm:$0xff] %v2340
        %2437 = vst [vmem:[%s262 + $0x128] sm:$0xff] %v2341
        %2438 = vst [vmem:[%s262 + $0x130] sm:$0xff] %v2342
        %2439 = vst [vmem:[%s262 + $0x138] sm:$0xff] %v2343
        %2440 = vst [vmem:[%s262 + $0x140] sm:$0xff] %v2344
        %2441 = vst [vmem:[%s262 + $0x148] sm:$0xff] %v2345
        %2442 = vst [vmem:[%s262 + $0x150] sm:$0xff] %v2346
        %2443 = vst [vmem:[%s262 + $0x158] sm:$0xff] %v2347
        %2444 = vst [vmem:[%s262 + $0x160] sm:$0xff] %v2348
        %2445 = vst [vmem:[%s262 + $0x168] sm:$0xff] %v2349
        %2446 = vst [vmem:[%s262 + $0x170] sm:$0xff] %v2350
        %2447 = vst [vmem:[%s262 + $0x178] sm:$0xff] %v2351
        %2448 = vst [vmem:[%s262 + $0x180] sm:$0xff] %v2352
        %2449 = vst [vmem:[%s262 + $0x188] sm:$0xff] %v2353
        %2450 = vst [vmem:[%s262 + $0x190] sm:$0xff] %v2354
        %2451 = vst [vmem:[%s262 + $0x198] sm:$0xff] %v2355
        %2452 = vst [vmem:[%s262 + $0x1a0] sm:$0xff] %v2356
        %2453 = vst [vmem:[%s262 + $0x1a8] sm:$0xff] %v2357
        %2454 = vst [vmem:[%s262 + $0x1b0] sm:$0xff] %v2358
        %2455 = vst [vmem:[%s262 + $0x1b8] sm:$0xff] %v2359
        %2456 = vst [vmem:[%s262 + $0x1c0] sm:$0xff] %v2360
        %2457 = vst [vmem:[%s262 + $0x1c8] sm:$0xff] %v2361
        %2458 = vst [vmem:[%s262 + $0x1d0] sm:$0xff] %v2362
        %2459 = vst [vmem:[%s262 + $0x1d8] sm:$0xff] %v2363
        %2460 = vst [vmem:[%s262 + $0x1e0] sm:$0xff] %v2364
        %2461 = vst [vmem:[%s262 + $0x1e8] sm:$0xff] %v2365
        %2462 = vst [vmem:[%s262 + $0x1f0] sm:$0xff] %v2366
        %2463 = vst [vmem:[%s262 + $0x1f8] sm:$0xff] %v2367
        %2464 = vst [vmem:[%s262 + $0x200] sm:$0xff] %v2368
        %2465 = vst [vmem:[%s262 + $0x208] sm:$0xff] %v2369
        %2466 = vst [vmem:[%s262 + $0x210] sm:$0xff] %v2370
        %2467 = vst [vmem:[%s262 + $0x218] sm:$0xff] %v2371
        %2468 = vst [vmem:[%s262 + $0x220] sm:$0xff] %v2372
        %2469 = vst [vmem:[%s262 + $0x228] sm:$0xff] %v2373
        %2470 = vst [vmem:[%s262 + $0x230] sm:$0xff] %v2374
        %2471 = vst [vmem:[%s262 + $0x238] sm:$0xff] %v2375
        %2472 = vst [vmem:[%s262 + $0x240] sm:$0xff] %v2376
        %2473 = vst [vmem:[%s262 + $0x248] sm:$0xff] %v2377
        %2474 = vst [vmem:[%s262 + $0x250] sm:$0xff] %v2378
        %2475 = vst [vmem:[%s262 + $0x258] sm:$0xff] %v2379
        %2476 = vst [vmem:[%s262 + $0x260] sm:$0xff] %v2380
        %2477 = vst [vmem:[%s262 + $0x268] sm:$0xff] %v2381
        %2478 = vst [vmem:[%s262 + $0x270] sm:$0xff] %v2382
        %2479 = vst [vmem:[%s262 + $0x278] sm:$0xff] %v2383
        %2480 = vst [vmem:[%s262 + $0x280] sm:$0xff] %v2384
        %2481 = vst [vmem:[%s262 + $0x288] sm:$0xff] %v2385
        %2482 = vst [vmem:[%s262 + $0x290] sm:$0xff] %v2386
        %2483 = vst [vmem:[%s262 + $0x298] sm:$0xff] %v2387
        %2484 = vst [vmem:[%s262 + $0x2a0] sm:$0xff] %v2388
        %2485 = vst [vmem:[%s262 + $0x2a8] sm:$0xff] %v2389
        %2486 = vst [vmem:[%s262 + $0x2b0] sm:$0xff] %v2390
        %2487 = vst [vmem:[%s262 + $0x2b8] sm:$0xff] %v2391
        %2488 = vst [vmem:[%s262 + $0x2c0] sm:$0xff] %v2392
        %2489 = vst [vmem:[%s262 + $0x2c8] sm:$0xff] %v2393
        %2490 = vst [vmem:[%s262 + $0x2d0] sm:$0xff] %v2394
        %2491 = vst [vmem:[%s262 + $0x2d8] sm:$0xff] %v2395
        %2492 = vst [vmem:[%s262 + $0x2e0] sm:$0xff] %v2396
        %2493 = vst [vmem:[%s262 + $0x2e8] sm:$0xff] %v2397
        %2494 = vst [vmem:[%s262 + $0x2f0] sm:$0xff] %v2398
        %2495 = vst [vmem:[%s262 + $0x2f8] sm:$0xff] %v2399
        %s2496 = smul.u32 32, %s18
        %p2497 = scmp.lt.s32.totalorder %s2496, 127
        %s2498 = scalar_select %p2497, %s2496, 127
        %s2499 = smul.addr %s2498, 3
        %s2500 = smul.addr %s2499, 8
        %s2501 = scalar_lea.vmem %s5, %s2500
        // Predicated region
        $region49: #{voxel_feature_encoding_forward.3} parent=39 // pred_check
          %p2502 = pneg %p146
        $region50: #{voxel_feature_encoding_forward.3} parent=39 // pred_check_branch
          %2504 = sbr.rel (%p2502) target = $region52
        $region51: #{voxel_feature_encoding_forward.3} parent=39 // pred_region
          %s2505 = smul.u32 32, %s18
        $region52: #{voxel_feature_encoding_forward.3} parent=39 // pred_fallthru
          _
      $region40: #{voxel_feature_encoding_forward.3} parent=5 // pred_fallthru
        _
      %p2506 = scmp.le.s32.totalorder 2, %s13
      // Predicated region
      $region53: #{voxel_feature_encoding_forward.3} parent=5 // pred_check
        %p2507 = pneg %p2506
      $region54: #{voxel_feature_encoding_forward.3} parent=5 // pred_check_branch
        %2509 = sbr.rel (%p2507) target = $region56
      $region55: #{voxel_feature_encoding_forward.3} parent=5 // pred_region
        %s2510 = ssub.s32 %s13, 2
        // Predicated region
        $region57: #{voxel_feature_encoding_forward.3} parent=55 // pred_check
          %p2511 = pneg %p152
        $region58: #{voxel_feature_encoding_forward.3} parent=55 // pred_check_branch
          %2513 = sbr.rel (%p2511) target = $region60
        $region59: #{voxel_feature_encoding_forward.3} parent=55 // pred_region
          %s2514 = smul.u32 32, %s19
          %p2515 = scmp.lt.s32.totalorder %s2514, 127
          %s2516 = scalar_select %p2515, %s2514, 127
          %s2517 = smul.addr %s2516, 3
          %s2518 = smul.addr %s2517, 8
          %s2519 = scalar_lea.vmem %s5, %s2518
        $region60: #{voxel_feature_encoding_forward.3} parent=55 // pred_fallthru
          _
      $region56: #{voxel_feature_encoding_forward.3} parent=5 // pred_fallthru
        _
    $region6: #{voxel_feature_encoding_forward.3} parent=1 // loop_footer
      %s17 = sadd.s32 1, %s13
    $region7: #{voxel_feature_encoding_forward.3} parent=1 // loop_footer_branch
      %12 = sbr.rel target = $region3
    $region8: #{voxel_feature_encoding_forward.3} parent=1 // loop_exit
      _
    %2520 = vsyncpa [#allocation3], 1
    %s2521 = scalar_lea.sflag [#allocation3], 1
    %2522 = vsyncpa %s2521, 1
    %2523 = vsyncpa [#allocation5], 1

</llo_original>
